<compile_context>
chip_gen: v6e
topology: v6e:2x2x1
jax: 0.10.0
libtpu: 0.0.40
codegen_flags: <defaults>
</compile_context>

<pallas_src>
from functools import partial

import numpy as np

import jax
import jax.numpy as jnp
from jax.experimental import pallas as pl
from jax.experimental.pallas import tpu as pltpu


_CP = 128  # lane-dense channel padding


def _round_up(x, m):
    return (x + m - 1) // m * m


# ----------------------------------------------------------------------------
# Static shape bookkeeping (Python ints, usable at trace time)
# ----------------------------------------------------------------------------

def _layer_dims(img_dim):
    """Per-layer sizes of the flat, zero-padded, lane-dense activation layout."""
    layers = []
    h = img_dim
    for _ in range(3):
        hp = h + 2                                 # spatial zero-pad (pad=1)
        ho = h + 1                                 # conv out (k=2, s=1, p=1)
        q = (ho - 2) // 2 + 1                      # max-pool out (k=2, s=2)
        lt = _round_up(2 * (q - 1) * (hp + 1) + 1, 8)   # per-sample wmax rows
        # window-max reads must stay inside this sample's written conv rows
        assert lt + hp + 1 <= hp * hp
        layers.append(dict(h=h, hp=hp, ho=ho, q=q, lt=lt))
        h = q
    return layers


def _tile_dims(bt, img_dim):
    layers = _layer_dims(img_dim)
    for l in layers:
        l["m"] = bt * l["hp"] ** 2                 # valid flat rows per tile
    return dict(
        layers=layers, bt=bt, npad=_round_up(bt, 8),
        ra1=_round_up(layers[0]["m"] + layers[0]["hp"] + 1, 8),
        ra2=_round_up(layers[1]["m"] + layers[1]["hp"] + 1, 8),
        ra3=_round_up(layers[2]["m"] + layers[2]["hp"] + 1, 8),
        ymax=_round_up(max(l["m"] for l in layers), 8),
    )


# ----------------------------------------------------------------------------
# Parameter preparation (done once): bf16 MXU weights, per-sample selection
# matrices, VPU conv1 taps, fc weights with NCHW flatten folded in.
# ----------------------------------------------------------------------------

def prepare_cnn32(params, img_dim):
    l1, l2, l3 = _layer_dims(img_dim)

    def conv_taps_bf16(w):
        cout, cin, kh, kw = w.shape
        assert (kh, kw) == (2, 2) and cin <= _CP and cout <= _CP
        taps = jnp.transpose(w, (2, 3, 1, 0)).reshape(kh * kw, cin, cout)
        full = jnp.zeros((kh * kw, _CP, _CP), jnp.float32)
        return full.at[:, :cin, :cout].set(taps.astype(jnp.float32)).astype(
            jnp.bfloat16)

    def pad_bias(b):
        return jnp.zeros((1, _CP), jnp.float32).at[0, :b.shape[0]].set(
            b.astype(jnp.float32))

    def pool_select(lin, lnext):
        """Per-sample 0/1 map: window-max rows -> next layer's padded rows."""
        p = np.zeros((lnext["hp"] ** 2, lin["lt"]), np.float32)
        for ph in range(lin["q"]):
            for pw in range(lin["q"]):
                r = (ph + 1) * lnext["hp"] + (pw + 1)
                c = 2 * ph * lin["hp"] + 2 * pw
                p[r, c] = 1.0
        return jnp.asarray(p).astype(jnp.bfloat16)

    # conv1 (cin == 1): VPU taps -- one (1,128) row of out-channel weights/tap.
    c1w = params["conv1_w"]
    cout1, cin1 = c1w.shape[0], c1w.shape[1]
    assert cin1 == 1, "fast VPU conv1 path assumes in_channels == 1"
    w1v = jnp.zeros((8, _CP), jnp.float32)
    w1v = w1v.at[:4, :cout1].set(
        jnp.transpose(c1w[:, 0, :, :], (1, 2, 0)).reshape(4, cout1).astype(
            jnp.float32))

    # fc1: fold the PyTorch NCHW flatten in and concatenate the q3*q3 spatial
    # weight slabs along K -> a single (q3*q3*128, 128) bf16 weight.
    q3 = l3["q"]
    c3 = params["conv3_w"].shape[0]
    fc1_out = params["fc1_w"].shape[0]
    fw = params["fc1_w"].reshape(fc1_out, c3, q3 * q3)          # [j, ch, s]
    w1s = jnp.zeros((q3 * q3, _CP, _CP), jnp.float32)
    w1s = w1s.at[:, :c3, :fc1_out].set(
        jnp.transpose(fw, (2, 1, 0)).astype(jnp.float32))       # [s, ch, j]
    w1cat = w1s.reshape(q3 * q3 * _CP, _CP).astype(jnp.bfloat16)

    n_cls = params["fc2_w"].shape[0]
    w2p = jnp.zeros((_CP, _CP), jnp.float32).at[:fc1_out, :n_cls].set(
        params["fc2_w"].T.astype(jnp.float32)).astype(jnp.bfloat16)

    return dict(
        w1v=w1v, b1=pad_bias(params["conv1_b"]),
        wt2=conv_taps_bf16(params["conv2_w"]), b2=pad_bias(params["conv2_b"]),
        wt3=conv_taps_bf16(params["conv3_w"]), b3=pad_bias(params["conv3_b"]),
        p1=pool_select(l1, l2), p2=pool_select(l2, l3),
        w1cat=w1cat, bfc1=pad_bias(params["fc1_b"]),
        w2p=w2p, bfc2=pad_bias(params["fc2_b"]),
    )


# ----------------------------------------------------------------------------
# The fused Pallas kernel (one batch tile per grid step)
# ----------------------------------------------------------------------------

def _cnn32_kernel(a0_ref, w1v_ref, b1_ref, wt2_ref, b2_ref, wt3_ref, b3_ref,
                  p1_ref, p2_ref, w1cat_ref, bfc1_ref, w2p_ref, bfc2_ref,
                  out_ref, y_ref, a2_ref, a3_ref, z_ref, *, dims):
    f32, bf16 = jnp.float32, jnp.bfloat16
    l1, l2, l3 = dims["layers"]
    bt = dims["bt"]
    hp1, hp2, hp3 = l1["hp"], l2["hp"], l3["hp"]
    m1, m2, m3 = l1["m"], l2["m"], l3["m"]

    # ---- conv1 + ReLU on the VPU (cin = 1: four broadcast multiply-adds) ----
    def tap1(t):
        return w1v_ref[pl.ds(t, 1), :]                       # (1, 128) f32
    acc1 = (a0_ref[pl.ds(0, m1), :] * tap1(0)
            + a0_ref[pl.ds(1, m1), :] * tap1(1)
            + a0_ref[pl.ds(hp1, m1), :] * tap1(2)
            + a0_ref[pl.ds(hp1 + 1, m1), :] * tap1(3))
    y_ref[pl.ds(0, m1), :] = jnp.maximum(acc1 + b1_ref[...], 0.0).astype(bf16)

    def wmax(base, lt, hp):
        # 2x2 pool-window max at conv resolution, per-sample row range.
        return jnp.maximum(
            jnp.maximum(y_ref[pl.ds(base, lt), :],
                        y_ref[pl.ds(base + 1, lt), :]),
            jnp.maximum(y_ref[pl.ds(base + hp, lt), :],
                        y_ref[pl.ds(base + hp + 1, lt), :]))

    def conv(a_ref, wt_ref, b_ref, m, hp):
        # 2x2 conv (pad=1, stride=1) = 4 shifted bf16 MXU dots, f32 accumulate;
        # bias + ReLU fused into the single bf16 store.
        a = jnp.dot(a_ref[pl.ds(0, m), :], wt_ref[0], preferred_element_type=f32)
        a += jnp.dot(a_ref[pl.ds(1, m), :], wt_ref[1], preferred_element_type=f32)
        a += jnp.dot(a_ref[pl.ds(hp, m), :], wt_ref[2], preferred_element_type=f32)
        a += jnp.dot(a_ref[pl.ds(hp + 1, m), :], wt_ref[3], preferred_element_type=f32)
        y_ref[pl.ds(0, m), :] = jnp.maximum(a + b_ref[...], 0.0).astype(bf16)

    # ---- pool1: per-sample selection matmul + re-zero-pad into a2 ----------
    a2_ref[pl.ds(m2, dims["ra2"] - m2), :] = jnp.zeros(
        (dims["ra2"] - m2, _CP), bf16)
    for b in range(bt):
        a2_ref[pl.ds(b * hp2 * hp2, hp2 * hp2), :] = jnp.dot(
            p1_ref[...], wmax(b * hp1 * hp1, l1["lt"], hp1),
            preferred_element_type=f32).astype(bf16)

    # ---- conv2 + ReLU ----
    conv(a2_ref, wt2_ref, b2_ref, m2, hp2)

    # ---- pool2 ----
    a3_ref[pl.ds(m3, dims["ra3"] - m3), :] = jnp.zeros(
        (dims["ra3"] - m3, _CP), bf16)
    for b in range(bt):
        a3_ref[pl.ds(b * hp3 * hp3, hp3 * hp3), :] = jnp.dot(
            p2_ref[...], wmax(b * hp2 * hp2, l2["lt"], hp2),
            preferred_element_type=f32).astype(bf16)

    # ---- conv3 + ReLU ----
    conv(a3_ref, wt3_ref, b3_ref, m3, hp3)

    # ---- pool3 + NCHW flatten: direct row maxes into a lane-dense (npad,512)
    #      slab (lane group s = spatial position holds the 64 channels).
    q3 = l3["q"]
    z_ref[...] = jnp.zeros_like(z_ref)
    for b in range(bt):
        for ph in range(q3):
            for pw in range(q3):
                c0 = b * hp3 * hp3 + 2 * ph * hp3 + 2 * pw
                v = jnp.maximum(
                    jnp.maximum(y_ref[pl.ds(c0, 1), :],
                                y_ref[pl.ds(c0 + 1, 1), :]),
                    jnp.maximum(y_ref[pl.ds(c0 + hp3, 1), :],
                                y_ref[pl.ds(c0 + hp3 + 1, 1), :]))
                s = ph * q3 + pw
                z_ref[pl.ds(b, 1), pl.ds(s * _CP, _CP)] = v

    # ---- fc1 (+ReLU) as one (npad,512)@(512,128) bf16 dot, then fc2 --------
    h = jnp.maximum(
        jnp.dot(z_ref[...], w1cat_ref[...], preferred_element_type=f32)
        + bfc1_ref[...], 0.0)
    out_ref[...] = (jnp.dot(h.astype(bf16), w2p_ref[...],
                            preferred_element_type=f32) + bfc2_ref[...])


# ----------------------------------------------------------------------------
# Forward wrapper
# ----------------------------------------------------------------------------

def cnn32_forward_pallas(prep, x_nchw, *, no_classes=8, batch_tile=8):
    """Input: NCHW float32 (PyTorch convention). Output: (N, no_classes)."""
    n, cin, hh, ww = x_nchw.shape
    assert hh == ww and cin == 1
    bt = min(batch_tile, n)
    nb = -(-n // bt)
    n_tot = nb * bt
    dims = _tile_dims(bt, hh)
    l1, l2, l3 = dims["layers"]
    hp1 = l1["hp"]
    npad = dims["npad"]

    # Compact input: per-tile flat zero-padded rows, 1 lane (lane splat happens
    # inside the kernel).  HBM bytes = nb * ra1 * 4.
    xpad = jnp.zeros((n_tot, hp1, hp1), jnp.float32)
    xpad = xpad.at[:n, 1:1 + hh, 1:1 + ww].set(x_nchw[:, 0].astype(jnp.float32))
    a0 = xpad.reshape(nb, bt * hp1 * hp1)
    a0 = jnp.pad(a0, ((0, 0), (0, dims["ra1"] - bt * hp1 * hp1)))
    a0 = a0.reshape(nb * dims["ra1"], 1)

    weights = (prep["w1v"], prep["b1"], prep["wt2"], prep["b2"], prep["wt3"],
               prep["b3"], prep["p1"], prep["p2"], prep["w1cat"], prep["bfc1"],
               prep["w2p"], prep["bfc2"])

    def const_spec(arr):
        nd = arr.ndim
        return pl.BlockSpec(arr.shape, lambda i, _nd=nd: (0,) * _nd)

    in_specs = [pl.BlockSpec((dims["ra1"], 1), lambda i: (i, 0))]
    in_specs += [const_spec(a) for a in weights]
    out_specs = pl.BlockSpec((npad, _CP), lambda i: (i, 0))

    q3 = l3["q"]
    flops_tile = (
        8 * l1["m"] * _CP                                   # conv1 (VPU)
        + 2 * 4 * (l2["m"] + l3["m"]) * _CP * _CP           # conv2 / conv3
        + 2 * bt * (l2["hp"] ** 2 * l1["lt"]
                    + l3["hp"] ** 2 * l2["lt"]) * _CP       # pool selections
        + 2 * npad * (q3 * q3 * _CP + _CP) * _CP            # fc1 + fc2
    )
    bytes_accessed = (int(a0.size) * 4 + 4 * npad * _CP * nb
                      + sum(int(a.size) * a.dtype.itemsize for a in weights))

    out = pl.pallas_call(
        partial(_cnn32_kernel, dims=dims),
        out_shape=jax.ShapeDtypeStruct((nb * npad, _CP), jnp.float32),
        grid_spec=pltpu.PrefetchScalarGridSpec(
            num_scalar_prefetch=0,
            grid=(nb,),
            in_specs=in_specs,
            out_specs=out_specs,
            scratch_shapes=[
                pltpu.VMEM((dims["ymax"], _CP), jnp.bfloat16),   # conv output
                pltpu.VMEM((dims["ra2"], _CP), jnp.bfloat16),    # layer-2 input
                pltpu.VMEM((dims["ra3"], _CP), jnp.bfloat16),    # layer-3 input
                pltpu.VMEM((npad, q3 * q3 * _CP), jnp.bfloat16), # flattened fc in
            ]),
        compiler_params=pltpu.CompilerParams(
            dimension_semantics=("parallel",)),
        cost_estimate=pl.CostEstimate(flops=int(nb * flops_tile),
                                      transcendentals=0,
                                      bytes_accessed=int(bytes_accessed)),
    )(a0, *weights)

    out = out.reshape(nb, npad, _CP)[:, :bt, :].reshape(n_tot, _CP)
    return out[:n, :no_classes]


# ----------------------------------------------------------------------------
# cnn32 parameters (deterministic synthetic, PyTorch layout) + JAX reference
# ----------------------------------------------------------------------------

def _floor_out(dim, pad, k, s):
    return (dim + 2 * pad - k) // s + 1


def init_cnn32_params(key, in_channels=1, no_classes=8, img_dim=16,
                      c1=32, c2=32, c3=64, fc1_out=50, k=2, pad=1):
    out1 = _floor_out(img_dim, pad, k, 1)
    out2 = _floor_out(out1, 0, 2, 2)
    out3 = _floor_out(out2, pad, k, 1)
    out4 = _floor_out(out3, 0, 2, 2)
    out5 = _floor_out(out4, pad, k, 1)
    out6 = _floor_out(out5, 0, 2, 2)
    flat = c3 * out6 * out6

    keys = jax.random.split(key, 10)

    def u(kk, shape, fan_in):
        bound = 1.0 / jnp.sqrt(fan_in)
        return jax.random.uniform(kk, shape, jnp.float32, -bound, bound)

    return {
        "conv1_w": u(keys[0], (c1, in_channels, k, k), in_channels * k * k),
        "conv1_b": u(keys[1], (c1,), in_channels * k * k),
        "conv2_w": u(keys[2], (c2, c1, k, k), c1 * k * k),
        "conv2_b": u(keys[3], (c2,), c1 * k * k),
        "conv3_w": u(keys[4], (c3, c2, k, k), c2 * k * k),
        "conv3_b": u(keys[5], (c3,), c2 * k * k),
        "fc1_w": u(keys[6], (fc1_out, flat), flat),
        "fc1_b": u(keys[7], (fc1_out,), flat),
        "fc2_w": u(keys[8], (no_classes, fc1_out), fc1_out),
        "fc2_b": u(keys[9], (no_classes,), fc1_out),
    }


def cnn32_reference(params, x_nchw):
    def conv_relu(x, w, b):
        y = jax.lax.conv_general_dilated(
            x, w, window_strides=(1, 1), padding=((1, 1), (1, 1)),
            dimension_numbers=("NCHW", "OIHW", "NCHW"))
        return jax.nn.relu(y + b[None, :, None, None])

    def pool(x):
        return jax.lax.reduce_window(
            x, -jnp.inf, jax.lax.max, (1, 1, 2, 2), (1, 1, 2, 2), "VALID")

    x = conv_relu(x_nchw, params["conv1_w"], params["conv1_b"]); x = pool(x)
    x = conv_relu(x, params["conv2_w"], params["conv2_b"]); x = pool(x)
    x = conv_relu(x, params["conv3_w"], params["conv3_b"]); x = pool(x)
    x = x.reshape(x.shape[0], -1)
    x = jax.nn.relu(x @ params["fc1_w"].T + params["fc1_b"])
    return x @ params["fc2_w"].T + params["fc2_b"]


# ----------------------------------------------------------------------------
# Main
# ----------------------------------------------------------------------------

if __name__ == "__main__":
    key = jax.random.PRNGKey(0)
    k_param, k_data = jax.random.split(key)

    # Small shapes consistent with the module: batch=2, in_channels=1, img=16.
    N, C, IMG, NO_CLASSES = 2, 1, 16, 8
    params = init_cnn32_params(k_param, in_channels=C, no_classes=NO_CLASSES,
                               img_dim=IMG)
    x = jax.random.normal(k_data, (N, C, IMG, IMG), dtype=jnp.float32)

    # Prepare kernel-layout (bf16) parameters once.
    prep = prepare_cnn32(params, img_dim=IMG)

    # batch_tile=1 -> grid=(2,) so the "parallel" batch grid is exercised
    # (shards across TensorCores on v7x; sequential pipelined steps elsewhere).
    fwd = jax.jit(partial(cnn32_forward_pallas, no_classes=NO_CLASSES,
                          batch_tile=1))
    out = jax.block_until_ready(fwd(prep, x))

    ref = jax.block_until_ready(cnn32_reference(params, x))
    assert out.shape == (N, NO_CLASSES), out.shape
    max_err = float(jnp.max(jnp.abs(out - ref)))
    # bf16 MXU operands (per the perf review) -> relaxed tolerance vs f32 ref.
    assert jnp.allclose(out, ref, atol=5e-2, rtol=5e-2), max_err

    print("KERNEL_OK")
</pallas_src>

<mosaic_0001>
module attributes {stable_mosaic.version = 11 : i64} {
  func.func @_cnn32_kernel(%arg0: i32, %arg1: memref<344x1xf32, #tpu.memory_space<vmem>>, %arg2: memref<8x128xf32, #tpu.memory_space<vmem>>, %arg3: memref<1x128xf32, #tpu.memory_space<vmem>>, %arg4: memref<4x128x128xbf16, #tpu.memory_space<vmem>>, %arg5: memref<1x128xf32, #tpu.memory_space<vmem>>, %arg6: memref<4x128x128xbf16, #tpu.memory_space<vmem>>, %arg7: memref<1x128xf32, #tpu.memory_space<vmem>>, %arg8: memref<100x272xbf16, #tpu.memory_space<vmem>>, %arg9: memref<36x72xbf16, #tpu.memory_space<vmem>>, %arg10: memref<512x128xbf16, #tpu.memory_space<vmem>>, %arg11: memref<1x128xf32, #tpu.memory_space<vmem>>, %arg12: memref<128x128xbf16, #tpu.memory_space<vmem>>, %arg13: memref<1x128xf32, #tpu.memory_space<vmem>>, %arg14: memref<8x128xf32, #tpu.memory_space<vmem>>, %arg15: memref<328x128xbf16, #tpu.memory_space<vmem>>, %arg16: memref<112x128xbf16, #tpu.memory_space<vmem>>, %arg17: memref<48x128xbf16, #tpu.memory_space<vmem>>, %arg18: memref<8x512xbf16, #tpu.memory_space<vmem>>) attributes {dimension_semantics = [#tpu.dimension_semantics<parallel>], iteration_bounds = array<i64: 2>, scalar_prefetch = 0 : i64, scratch_operands = 4 : i64, tpu.core_type = #tpu.core_type<tc>, window_params = [{transform_indices = @transform_0, window_bounds = array<i64: 344, 1>}, {pipeline_mode = #tpu.pipeline_mode<synchronous>, transform_indices = @transform_1, window_bounds = array<i64: 8, 128>}, {pipeline_mode = #tpu.pipeline_mode<synchronous>, transform_indices = @transform_2, window_bounds = array<i64: 1, 128>}, {pipeline_mode = #tpu.pipeline_mode<synchronous>, transform_indices = @transform_3, window_bounds = array<i64: 4, 128, 128>}, {pipeline_mode = #tpu.pipeline_mode<synchronous>, transform_indices = @transform_4, window_bounds = array<i64: 1, 128>}, {pipeline_mode = #tpu.pipeline_mode<synchronous>, transform_indices = @transform_5, window_bounds = array<i64: 4, 128, 128>}, {pipeline_mode = #tpu.pipeline_mode<synchronous>, transform_indices = @transform_6, window_bounds = array<i64: 1, 128>}, {pipeline_mode = #tpu.pipeline_mode<synchronous>, transform_indices = @transform_7, window_bounds = array<i64: 100, 272>}, {pipeline_mode = #tpu.pipeline_mode<synchronous>, transform_indices = @transform_8, window_bounds = array<i64: 36, 72>}, {pipeline_mode = #tpu.pipeline_mode<synchronous>, transform_indices = @transform_9, window_bounds = array<i64: 512, 128>}, {pipeline_mode = #tpu.pipeline_mode<synchronous>, transform_indices = @transform_10, window_bounds = array<i64: 1, 128>}, {pipeline_mode = #tpu.pipeline_mode<synchronous>, transform_indices = @transform_11, window_bounds = array<i64: 128, 128>}, {pipeline_mode = #tpu.pipeline_mode<synchronous>, transform_indices = @transform_12, window_bounds = array<i64: 1, 128>}, {transform_indices = @transform_13, window_bounds = array<i64: 8, 128>}]} {
    %c0 = arith.constant 0 : index
    %c0_0 = arith.constant 0 : index
    %0 = vector.load %arg1[%c0, %c0_0] : memref<344x1xf32, #tpu.memory_space<vmem>>, vector<324x1xf32>
    %c0_1 = arith.constant 0 : index
    %c0_2 = arith.constant 0 : index
    %1 = vector.load %arg2[%c0_1, %c0_2] : memref<8x128xf32, #tpu.memory_space<vmem>>, vector<1x128xf32>
    %2 = vector.broadcast %0 : vector<324x1xf32> to vector<324x128xf32>
    %3 = vector.broadcast %1 : vector<1x128xf32> to vector<324x128xf32>
    %4 = arith.mulf %2, %3 : vector<324x128xf32>
    %c1 = arith.constant 1 : index
    %c0_3 = arith.constant 0 : index
    %5 = vector.load %arg1[%c1, %c0_3] : memref<344x1xf32, #tpu.memory_space<vmem>>, vector<324x1xf32>
    %c1_4 = arith.constant 1 : index
    %c0_5 = arith.constant 0 : index
    %6 = vector.load %arg2[%c1_4, %c0_5] : memref<8x128xf32, #tpu.memory_space<vmem>>, vector<1x128xf32>
    %7 = vector.broadcast %5 : vector<324x1xf32> to vector<324x128xf32>
    %8 = vector.broadcast %6 : vector<1x128xf32> to vector<324x128xf32>
    %9 = arith.mulf %7, %8 : vector<324x128xf32>
    %10 = arith.addf %4, %9 : vector<324x128xf32>
    %c18 = arith.constant 18 : index
    %c0_6 = arith.constant 0 : index
    %11 = vector.load %arg1[%c18, %c0_6] : memref<344x1xf32, #tpu.memory_space<vmem>>, vector<324x1xf32>
    %c2 = arith.constant 2 : index
    %c0_7 = arith.constant 0 : index
    %12 = vector.load %arg2[%c2, %c0_7] : memref<8x128xf32, #tpu.memory_space<vmem>>, vector<1x128xf32>
    %13 = vector.broadcast %11 : vector<324x1xf32> to vector<324x128xf32>
    %14 = vector.broadcast %12 : vector<1x128xf32> to vector<324x128xf32>
    %15 = arith.mulf %13, %14 : vector<324x128xf32>
    %16 = arith.addf %10, %15 : vector<324x128xf32>
    %c19 = arith.constant 19 : index
    %c0_8 = arith.constant 0 : index
    %17 = vector.load %arg1[%c19, %c0_8] : memref<344x1xf32, #tpu.memory_space<vmem>>, vector<324x1xf32>
    %c3 = arith.constant 3 : index
    %c0_9 = arith.constant 0 : index
    %18 = vector.load %arg2[%c3, %c0_9] : memref<8x128xf32, #tpu.memory_space<vmem>>, vector<1x128xf32>
    %19 = vector.broadcast %17 : vector<324x1xf32> to vector<324x128xf32>
    %20 = vector.broadcast %18 : vector<1x128xf32> to vector<324x128xf32>
    %21 = arith.mulf %19, %20 : vector<324x128xf32>
    %22 = arith.addf %16, %21 : vector<324x128xf32>
    %c0_10 = arith.constant 0 : index
    %c0_11 = arith.constant 0 : index
    %23 = vector.load %arg3[%c0_10, %c0_11] : memref<1x128xf32, #tpu.memory_space<vmem>>, vector<1x128xf32>
    %24 = vector.broadcast %23 : vector<1x128xf32> to vector<324x128xf32>
    %25 = arith.addf %22, %24 : vector<324x128xf32>
    %cst = arith.constant 0.000000e+00 : f32
    %26 = vector.broadcast %cst : f32 to vector<324x128xf32>
    %27 = arith.maximumf %25, %26 : vector<324x128xf32>
    %28 = arith.truncf %27 : vector<324x128xf32> to vector<324x128xbf16>
    %c0_12 = arith.constant 0 : index
    %c0_13 = arith.constant 0 : index
    %29 = vector.load %arg15[%c0_12, %c0_13] : memref<328x128xbf16, #tpu.memory_space<vmem>>, vector<324x128xbf16>
    tpu.vector_store %arg15[%c0_12, %c0_13], %28 {strides = array<i32>} : memref<328x128xbf16, #tpu.memory_space<vmem>>, vector<324x128xbf16>,
    %cst_14 = arith.constant 0.000000e+00 : bf16
    %30 = vector.broadcast %cst_14 : bf16 to vector<12x128xbf16>
    %c100 = arith.constant 100 : index
    %c0_15 = arith.constant 0 : index
    %31 = vector.load %arg16[%c100, %c0_15] : memref<112x128xbf16, #tpu.memory_space<vmem>>, vector<12x128xbf16>
    tpu.vector_store %arg16[%c100, %c0_15], %30 {strides = array<i32>} : memref<112x128xbf16, #tpu.memory_space<vmem>>, vector<12x128xbf16>,
    %c0_16 = arith.constant 0 : index
    %c0_17 = arith.constant 0 : index
    %32 = vector.load %arg8[%c0_16, %c0_17] : memref<100x272xbf16, #tpu.memory_space<vmem>>, vector<100x272xbf16>
    %c0_18 = arith.constant 0 : index
    %c0_19 = arith.constant 0 : index
    %33 = vector.load %arg15[%c0_18, %c0_19] : memref<328x128xbf16, #tpu.memory_space<vmem>>, vector<272x128xbf16>
    %c1_20 = arith.constant 1 : index
    %c0_21 = arith.constant 0 : index
    %34 = vector.load %arg15[%c1_20, %c0_21] : memref<328x128xbf16, #tpu.memory_space<vmem>>, vector<272x128xbf16>
    %35 = arith.maximumf %33, %34 : vector<272x128xbf16>
    %c18_22 = arith.constant 18 : index
    %c0_23 = arith.constant 0 : index
    %36 = vector.load %arg15[%c18_22, %c0_23] : memref<328x128xbf16, #tpu.memory_space<vmem>>, vector<272x128xbf16>
    %c19_24 = arith.constant 19 : index
    %c0_25 = arith.constant 0 : index
    %37 = vector.load %arg15[%c19_24, %c0_25] : memref<328x128xbf16, #tpu.memory_space<vmem>>, vector<272x128xbf16>
    %38 = arith.maximumf %36, %37 : vector<272x128xbf16>
    %39 = arith.maximumf %35, %38 : vector<272x128xbf16>
    %cst_26 = arith.constant dense<0.000000e+00> : vector<100x128xf32>
    %40 = tpu.matmul %32, %39, %cst_26 {dimension_numbers = #tpu.dot_dimension_numbers<[1], [0], [0], [1], [0, 0, 1, 1], [], []>} : vector<100x272xbf16>, vector<272x128xbf16>, vector<100x128xf32> -> vector<100x128xf32>
    %41 = arith.truncf %40 : vector<100x128xf32> to vector<100x128xbf16>
    %c0_27 = arith.constant 0 : index
    %c0_28 = arith.constant 0 : index
    %42 = vector.load %arg16[%c0_27, %c0_28] : memref<112x128xbf16, #tpu.memory_space<vmem>>, vector<100x128xbf16>
    tpu.vector_store %arg16[%c0_27, %c0_28], %41 {strides = array<i32>} : memref<112x128xbf16, #tpu.memory_space<vmem>>, vector<100x128xbf16>,
    %c0_29 = arith.constant 0 : index
    %c0_30 = arith.constant 0 : index
    %43 = vector.load %arg16[%c0_29, %c0_30] : memref<112x128xbf16, #tpu.memory_space<vmem>>, vector<100x128xbf16>
    %c0_31 = arith.constant 0 : index
    %c0_32 = arith.constant 0 : index
    %c0_33 = arith.constant 0 : index
    %44 = vector.load %arg4[%c0_31, %c0_32, %c0_33] : memref<4x128x128xbf16, #tpu.memory_space<vmem>>, vector<1x128x128xbf16>
    %45 = vector.shape_cast %44 : vector<1x128x128xbf16> to vector<128x128xbf16>
    %cst_34 = arith.constant dense<0.000000e+00> : vector<100x128xf32>
    %46 = tpu.matmul %43, %45, %cst_34 {dimension_numbers = #tpu.dot_dimension_numbers<[1], [0], [0], [1], [0, 0, 1, 1], [], []>} : vector<100x128xbf16>, vector<128x128xbf16>, vector<100x128xf32> -> vector<100x128xf32>
    %c1_35 = arith.constant 1 : index
    %c0_36 = arith.constant 0 : index
    %47 = vector.load %arg16[%c1_35, %c0_36] : memref<112x128xbf16, #tpu.memory_space<vmem>>, vector<100x128xbf16>
    %c1_37 = arith.constant 1 : index
    %c0_38 = arith.constant 0 : index
    %c0_39 = arith.constant 0 : index
    %48 = vector.load %arg4[%c1_37, %c0_38, %c0_39] : memref<4x128x128xbf16, #tpu.memory_space<vmem>>, vector<1x128x128xbf16>
    %49 = vector.shape_cast %48 : vector<1x128x128xbf16> to vector<128x128xbf16>
    %cst_40 = arith.constant dense<0.000000e+00> : vector<100x128xf32>
    %50 = tpu.matmul %47, %49, %cst_40 {dimension_numbers = #tpu.dot_dimension_numbers<[1], [0], [0], [1], [0, 0, 1, 1], [], []>} : vector<100x128xbf16>, vector<128x128xbf16>, vector<100x128xf32> -> vector<100x128xf32>
    %51 = arith.addf %46, %50 : vector<100x128xf32>
    %c10 = arith.constant 10 : index
    %c0_41 = arith.constant 0 : index
    %52 = vector.load %arg16[%c10, %c0_41] : memref<112x128xbf16, #tpu.memory_space<vmem>>, vector<100x128xbf16>
    %c2_42 = arith.constant 2 : index
    %c0_43 = arith.constant 0 : index
    %c0_44 = arith.constant 0 : index
    %53 = vector.load %arg4[%c2_42, %c0_43, %c0_44] : memref<4x128x128xbf16, #tpu.memory_space<vmem>>, vector<1x128x128xbf16>
    %54 = vector.shape_cast %53 : vector<1x128x128xbf16> to vector<128x128xbf16>
    %cst_45 = arith.constant dense<0.000000e+00> : vector<100x128xf32>
    %55 = tpu.matmul %52, %54, %cst_45 {dimension_numbers = #tpu.dot_dimension_numbers<[1], [0], [0], [1], [0, 0, 1, 1], [], []>} : vector<100x128xbf16>, vector<128x128xbf16>, vector<100x128xf32> -> vector<100x128xf32>
    %56 = arith.addf %51, %55 : vector<100x128xf32>
    %c11 = arith.constant 11 : index
    %c0_46 = arith.constant 0 : index
    %57 = vector.load %arg16[%c11, %c0_46] : memref<112x128xbf16, #tpu.memory_space<vmem>>, vector<100x128xbf16>
    %c3_47 = arith.constant 3 : index
    %c0_48 = arith.constant 0 : index
    %c0_49 = arith.constant 0 : index
    %58 = vector.load %arg4[%c3_47, %c0_48, %c0_49] : memref<4x128x128xbf16, #tpu.memory_space<vmem>>, vector<1x128x128xbf16>
    %59 = vector.shape_cast %58 : vector<1x128x128xbf16> to vector<128x128xbf16>
    %cst_50 = arith.constant dense<0.000000e+00> : vector<100x128xf32>
    %60 = tpu.matmul %57, %59, %cst_50 {dimension_numbers = #tpu.dot_dimension_numbers<[1], [0], [0], [1], [0, 0, 1, 1], [], []>} : vector<100x128xbf16>, vector<128x128xbf16>, vector<100x128xf32> -> vector<100x128xf32>
    %61 = arith.addf %56, %60 : vector<100x128xf32>
    %c0_51 = arith.constant 0 : index
    %c0_52 = arith.constant 0 : index
    %62 = vector.load %arg5[%c0_51, %c0_52] : memref<1x128xf32, #tpu.memory_space<vmem>>, vector<1x128xf32>
    %63 = vector.broadcast %62 : vector<1x128xf32> to vector<100x128xf32>
    %64 = arith.addf %61, %63 : vector<100x128xf32>
    %cst_53 = arith.constant 0.000000e+00 : f32
    %65 = vector.broadcast %cst_53 : f32 to vector<100x128xf32>
    %66 = arith.maximumf %64, %65 : vector<100x128xf32>
    %67 = arith.truncf %66 : vector<100x128xf32> to vector<100x128xbf16>
    %c0_54 = arith.constant 0 : index
    %c0_55 = arith.constant 0 : index
    %68 = vector.load %arg15[%c0_54, %c0_55] : memref<328x128xbf16, #tpu.memory_space<vmem>>, vector<100x128xbf16>
    tpu.vector_store %arg15[%c0_54, %c0_55], %67 {strides = array<i32>} : memref<328x128xbf16, #tpu.memory_space<vmem>>, vector<100x128xbf16>,
    %cst_56 = arith.constant 0.000000e+00 : bf16
    %69 = vector.broadcast %cst_56 : bf16 to vector<12x128xbf16>
    %c36 = arith.constant 36 : index
    %c0_57 = arith.constant 0 : index
    %70 = vector.load %arg17[%c36, %c0_57] : memref<48x128xbf16, #tpu.memory_space<vmem>>, vector<12x128xbf16>
    tpu.vector_store %arg17[%c36, %c0_57], %69 {strides = array<i32>} : memref<48x128xbf16, #tpu.memory_space<vmem>>, vector<12x128xbf16>,
    %c0_58 = arith.constant 0 : index
    %c0_59 = arith.constant 0 : index
    %71 = vector.load %arg9[%c0_58, %c0_59] : memref<36x72xbf16, #tpu.memory_space<vmem>>, vector<36x72xbf16>
    %c0_60 = arith.constant 0 : index
    %c0_61 = arith.constant 0 : index
    %72 = vector.load %arg15[%c0_60, %c0_61] : memref<328x128xbf16, #tpu.memory_space<vmem>>, vector<72x128xbf16>
    %c1_62 = arith.constant 1 : index
    %c0_63 = arith.constant 0 : index
    %73 = vector.load %arg15[%c1_62, %c0_63] : memref<328x128xbf16, #tpu.memory_space<vmem>>, vector<72x128xbf16>
    %74 = arith.maximumf %72, %73 : vector<72x128xbf16>
    %c10_64 = arith.constant 10 : index
    %c0_65 = arith.constant 0 : index
    %75 = vector.load %arg15[%c10_64, %c0_65] : memref<328x128xbf16, #tpu.memory_space<vmem>>, vector<72x128xbf16>
    %c11_66 = arith.constant 11 : index
    %c0_67 = arith.constant 0 : index
    %76 = vector.load %arg15[%c11_66, %c0_67] : memref<328x128xbf16, #tpu.memory_space<vmem>>, vector<72x128xbf16>
    %77 = arith.maximumf %75, %76 : vector<72x128xbf16>
    %78 = arith.maximumf %74, %77 : vector<72x128xbf16>
    %cst_68 = arith.constant dense<0.000000e+00> : vector<36x128xf32>
    %79 = tpu.matmul %71, %78, %cst_68 {dimension_numbers = #tpu.dot_dimension_numbers<[1], [0], [0], [1], [0, 0, 1, 1], [], []>} : vector<36x72xbf16>, vector<72x128xbf16>, vector<36x128xf32> -> vector<36x128xf32>
    %80 = arith.truncf %79 : vector<36x128xf32> to vector<36x128xbf16>
    %c0_69 = arith.constant 0 : index
    %c0_70 = arith.constant 0 : index
    %81 = vector.load %arg17[%c0_69, %c0_70] : memref<48x128xbf16, #tpu.memory_space<vmem>>, vector<36x128xbf16>
    tpu.vector_store %arg17[%c0_69, %c0_70], %80 {strides = array<i32>} : memref<48x128xbf16, #tpu.memory_space<vmem>>, vector<36x128xbf16>,
    %c0_71 = arith.constant 0 : index
    %c0_72 = arith.constant 0 : index
    %82 = vector.load %arg17[%c0_71, %c0_72] : memref<48x128xbf16, #tpu.memory_space<vmem>>, vector<36x128xbf16>
    %c0_73 = arith.constant 0 : index
    %c0_74 = arith.constant 0 : index
    %c0_75 = arith.constant 0 : index
    %83 = vector.load %arg6[%c0_73, %c0_74, %c0_75] : memref<4x128x128xbf16, #tpu.memory_space<vmem>>, vector<1x128x128xbf16>
    %84 = vector.shape_cast %83 : vector<1x128x128xbf16> to vector<128x128xbf16>
    %cst_76 = arith.constant dense<0.000000e+00> : vector<36x128xf32>
    %85 = tpu.matmul %82, %84, %cst_76 {dimension_numbers = #tpu.dot_dimension_numbers<[1], [0], [0], [1], [0, 0, 1, 1], [], []>} : vector<36x128xbf16>, vector<128x128xbf16>, vector<36x128xf32> -> vector<36x128xf32>
    %c1_77 = arith.constant 1 : index
    %c0_78 = arith.constant 0 : index
    %86 = vector.load %arg17[%c1_77, %c0_78] : memref<48x128xbf16, #tpu.memory_space<vmem>>, vector<36x128xbf16>
    %c1_79 = arith.constant 1 : index
    %c0_80 = arith.constant 0 : index
    %c0_81 = arith.constant 0 : index
    %87 = vector.load %arg6[%c1_79, %c0_80, %c0_81] : memref<4x128x128xbf16, #tpu.memory_space<vmem>>, vector<1x128x128xbf16>
    %88 = vector.shape_cast %87 : vector<1x128x128xbf16> to vector<128x128xbf16>
    %cst_82 = arith.constant dense<0.000000e+00> : vector<36x128xf32>
    %89 = tpu.matmul %86, %88, %cst_82 {dimension_numbers = #tpu.dot_dimension_numbers<[1], [0], [0], [1], [0, 0, 1, 1], [], []>} : vector<36x128xbf16>, vector<128x128xbf16>, vector<36x128xf32> -> vector<36x128xf32>
    %90 = arith.addf %85, %89 : vector<36x128xf32>
    %c6 = arith.constant 6 : index
    %c0_83 = arith.constant 0 : index
    %91 = vector.load %arg17[%c6, %c0_83] : memref<48x128xbf16, #tpu.memory_space<vmem>>, vector<36x128xbf16>
    %c2_84 = arith.constant 2 : index
    %c0_85 = arith.constant 0 : index
    %c0_86 = arith.constant 0 : index
    %92 = vector.load %arg6[%c2_84, %c0_85, %c0_86] : memref<4x128x128xbf16, #tpu.memory_space<vmem>>, vector<1x128x128xbf16>
    %93 = vector.shape_cast %92 : vector<1x128x128xbf16> to vector<128x128xbf16>
    %cst_87 = arith.constant dense<0.000000e+00> : vector<36x128xf32>
    %94 = tpu.matmul %91, %93, %cst_87 {dimension_numbers = #tpu.dot_dimension_numbers<[1], [0], [0], [1], [0, 0, 1, 1], [], []>} : vector<36x128xbf16>, vector<128x128xbf16>, vector<36x128xf32> -> vector<36x128xf32>
    %95 = arith.addf %90, %94 : vector<36x128xf32>
    %c7 = arith.constant 7 : index
    %c0_88 = arith.constant 0 : index
    %96 = vector.load %arg17[%c7, %c0_88] : memref<48x128xbf16, #tpu.memory_space<vmem>>, vector<36x128xbf16>
    %c3_89 = arith.constant 3 : index
    %c0_90 = arith.constant 0 : index
    %c0_91 = arith.constant 0 : index
    %97 = vector.load %arg6[%c3_89, %c0_90, %c0_91] : memref<4x128x128xbf16, #tpu.memory_space<vmem>>, vector<1x128x128xbf16>
    %98 = vector.shape_cast %97 : vector<1x128x128xbf16> to vector<128x128xbf16>
    %cst_92 = arith.constant dense<0.000000e+00> : vector<36x128xf32>
    %99 = tpu.matmul %96, %98, %cst_92 {dimension_numbers = #tpu.dot_dimension_numbers<[1], [0], [0], [1], [0, 0, 1, 1], [], []>} : vector<36x128xbf16>, vector<128x128xbf16>, vector<36x128xf32> -> vector<36x128xf32>
    %100 = arith.addf %95, %99 : vector<36x128xf32>
    %c0_93 = arith.constant 0 : index
    %c0_94 = arith.constant 0 : index
    %101 = vector.load %arg7[%c0_93, %c0_94] : memref<1x128xf32, #tpu.memory_space<vmem>>, vector<1x128xf32>
    %102 = vector.broadcast %101 : vector<1x128xf32> to vector<36x128xf32>
    %103 = arith.addf %100, %102 : vector<36x128xf32>
    %cst_95 = arith.constant 0.000000e+00 : f32
    %104 = vector.broadcast %cst_95 : f32 to vector<36x128xf32>
    %105 = arith.maximumf %103, %104 : vector<36x128xf32>
    %106 = arith.truncf %105 : vector<36x128xf32> to vector<36x128xbf16>
    %c0_96 = arith.constant 0 : index
    %c0_97 = arith.constant 0 : index
    %107 = vector.load %arg15[%c0_96, %c0_97] : memref<328x128xbf16, #tpu.memory_space<vmem>>, vector<36x128xbf16>
    tpu.vector_store %arg15[%c0_96, %c0_97], %106 {strides = array<i32>} : memref<328x128xbf16, #tpu.memory_space<vmem>>, vector<36x128xbf16>,
    %cst_98 = arith.constant 0.000000e+00 : bf16
    %108 = vector.broadcast %cst_98 : bf16 to vector<8x512xbf16>
    %c0_99 = arith.constant 0 : index
    %c0_100 = arith.constant 0 : index
    %109 = vector.load %arg18[%c0_99, %c0_100] : memref<8x512xbf16, #tpu.memory_space<vmem>>, vector<8x512xbf16>
    tpu.vector_store %arg18[%c0_99, %c0_100], %108 {strides = array<i32>} : memref<8x512xbf16, #tpu.memory_space<vmem>>, vector<8x512xbf16>,
    %c0_101 = arith.constant 0 : index
    %c0_102 = arith.constant 0 : index
    %110 = vector.load %arg15[%c0_101, %c0_102] : memref<328x128xbf16, #tpu.memory_space<vmem>>, vector<1x128xbf16>
    %c1_103 = arith.constant 1 : index
    %c0_104 = arith.constant 0 : index
    %111 = vector.load %arg15[%c1_103, %c0_104] : memref<328x128xbf16, #tpu.memory_space<vmem>>, vector<1x128xbf16>
    %112 = arith.maximumf %110, %111 : vector<1x128xbf16>
    %c6_105 = arith.constant 6 : index
    %c0_106 = arith.constant 0 : index
    %113 = vector.load %arg15[%c6_105, %c0_106] : memref<328x128xbf16, #tpu.memory_space<vmem>>, vector<1x128xbf16>
    %c7_107 = arith.constant 7 : index
    %c0_108 = arith.constant 0 : index
    %114 = vector.load %arg15[%c7_107, %c0_108] : memref<328x128xbf16, #tpu.memory_space<vmem>>, vector<1x128xbf16>
    %115 = arith.maximumf %113, %114 : vector<1x128xbf16>
    %116 = arith.maximumf %112, %115 : vector<1x128xbf16>
    %c0_109 = arith.constant 0 : index
    %c0_110 = arith.constant 0 : index
    %117 = vector.load %arg18[%c0_109, %c0_110] : memref<8x512xbf16, #tpu.memory_space<vmem>>, vector<1x128xbf16>
    tpu.vector_store %arg18[%c0_109, %c0_110], %116 {strides = array<i32>} : memref<8x512xbf16, #tpu.memory_space<vmem>>, vector<1x128xbf16>,
    %c2_111 = arith.constant 2 : index
    %c0_112 = arith.constant 0 : index
    %118 = vector.load %arg15[%c2_111, %c0_112] : memref<328x128xbf16, #tpu.memory_space<vmem>>, vector<1x128xbf16>
    %c3_113 = arith.constant 3 : index
    %c0_114 = arith.constant 0 : index
    %119 = vector.load %arg15[%c3_113, %c0_114] : memref<328x128xbf16, #tpu.memory_space<vmem>>, vector<1x128xbf16>
    %120 = arith.maximumf %118, %119 : vector<1x128xbf16>
    %c8 = arith.constant 8 : index
    %c0_115 = arith.constant 0 : index
    %121 = vector.load %arg15[%c8, %c0_115] : memref<328x128xbf16, #tpu.memory_space<vmem>>, vector<1x128xbf16>
    %c9 = arith.constant 9 : index
    %c0_116 = arith.constant 0 : index
    %122 = vector.load %arg15[%c9, %c0_116] : memref<328x128xbf16, #tpu.memory_space<vmem>>, vector<1x128xbf16>
    %123 = arith.maximumf %121, %122 : vector<1x128xbf16>
    %124 = arith.maximumf %120, %123 : vector<1x128xbf16>
    %c0_117 = arith.constant 0 : index
    %c128 = arith.constant 128 : index
    %125 = vector.load %arg18[%c0_117, %c128] : memref<8x512xbf16, #tpu.memory_space<vmem>>, vector<1x128xbf16>
    tpu.vector_store %arg18[%c0_117, %c128], %124 {strides = array<i32>} : memref<8x512xbf16, #tpu.memory_space<vmem>>, vector<1x128xbf16>,
    %c12 = arith.constant 12 : index
    %c0_118 = arith.constant 0 : index
    %126 = vector.load %arg15[%c12, %c0_118] : memref<328x128xbf16, #tpu.memory_space<vmem>>, vector<1x128xbf16>
    %c13 = arith.constant 13 : index
    %c0_119 = arith.constant 0 : index
    %127 = vector.load %arg15[%c13, %c0_119] : memref<328x128xbf16, #tpu.memory_space<vmem>>, vector<1x128xbf16>
    %128 = arith.maximumf %126, %127 : vector<1x128xbf16>
    %c18_120 = arith.constant 18 : index
    %c0_121 = arith.constant 0 : index
    %129 = vector.load %arg15[%c18_120, %c0_121] : memref<328x128xbf16, #tpu.memory_space<vmem>>, vector<1x128xbf16>
    %c19_122 = arith.constant 19 : index
    %c0_123 = arith.constant 0 : index
    %130 = vector.load %arg15[%c19_122, %c0_123] : memref<328x128xbf16, #tpu.memory_space<vmem>>, vector<1x128xbf16>
    %131 = arith.maximumf %129, %130 : vector<1x128xbf16>
    %132 = arith.maximumf %128, %131 : vector<1x128xbf16>
    %c0_124 = arith.constant 0 : index
    %c256 = arith.constant 256 : index
    %133 = vector.load %arg18[%c0_124, %c256] : memref<8x512xbf16, #tpu.memory_space<vmem>>, vector<1x128xbf16>
    tpu.vector_store %arg18[%c0_124, %c256], %132 {strides = array<i32>} : memref<8x512xbf16, #tpu.memory_space<vmem>>, vector<1x128xbf16>,
    %c14 = arith.constant 14 : index
    %c0_125 = arith.constant 0 : index
    %134 = vector.load %arg15[%c14, %c0_125] : memref<328x128xbf16, #tpu.memory_space<vmem>>, vector<1x128xbf16>
    %c15 = arith.constant 15 : index
    %c0_126 = arith.constant 0 : index
    %135 = vector.load %arg15[%c15, %c0_126] : memref<328x128xbf16, #tpu.memory_space<vmem>>, vector<1x128xbf16>
    %136 = arith.maximumf %134, %135 : vector<1x128xbf16>
    %c20 = arith.constant 20 : index
    %c0_127 = arith.constant 0 : index
    %137 = vector.load %arg15[%c20, %c0_127] : memref<328x128xbf16, #tpu.memory_space<vmem>>, vector<1x128xbf16>
    %c21 = arith.constant 21 : index
    %c0_128 = arith.constant 0 : index
    %138 = vector.load %arg15[%c21, %c0_128] : memref<328x128xbf16, #tpu.memory_space<vmem>>, vector<1x128xbf16>
    %139 = arith.maximumf %137, %138 : vector<1x128xbf16>
    %140 = arith.maximumf %136, %139 : vector<1x128xbf16>
    %c0_129 = arith.constant 0 : index
    %c384 = arith.constant 384 : index
    %141 = vector.load %arg18[%c0_129, %c384] : memref<8x512xbf16, #tpu.memory_space<vmem>>, vector<1x128xbf16>
    tpu.vector_store %arg18[%c0_129, %c384], %140 {strides = array<i32>} : memref<8x512xbf16, #tpu.memory_space<vmem>>, vector<1x128xbf16>,
    %c0_130 = arith.constant 0 : index
    %c0_131 = arith.constant 0 : index
    %142 = vector.load %arg18[%c0_130, %c0_131] : memref<8x512xbf16, #tpu.memory_space<vmem>>, vector<8x512xbf16>
    %c0_132 = arith.constant 0 : index
    %c0_133 = arith.constant 0 : index
    %143 = vector.load %arg10[%c0_132, %c0_133] : memref<512x128xbf16, #tpu.memory_space<vmem>>, vector<512x128xbf16>
    %cst_134 = arith.constant dense<0.000000e+00> : vector<8x128xf32>
    %144 = tpu.matmul %142, %143, %cst_134 {dimension_numbers = #tpu.dot_dimension_numbers<[1], [0], [0], [1], [0, 0, 1, 1], [], []>} : vector<8x512xbf16>, vector<512x128xbf16>, vector<8x128xf32> -> vector<8x128xf32>
    %c0_135 = arith.constant 0 : index
    %c0_136 = arith.constant 0 : index
    %145 = vector.load %arg11[%c0_135, %c0_136] : memref<1x128xf32, #tpu.memory_space<vmem>>, vector<1x128xf32>
    %146 = vector.broadcast %145 : vector<1x128xf32> to vector<8x128xf32>
    %147 = arith.addf %144, %146 : vector<8x128xf32>
    %cst_137 = arith.constant 0.000000e+00 : f32
    %148 = vector.broadcast %cst_137 : f32 to vector<8x128xf32>
    %149 = arith.maximumf %147, %148 : vector<8x128xf32>
    %150 = arith.truncf %149 : vector<8x128xf32> to vector<8x128xbf16>
    %c0_138 = arith.constant 0 : index
    %c0_139 = arith.constant 0 : index
    %151 = vector.load %arg12[%c0_138, %c0_139] : memref<128x128xbf16, #tpu.memory_space<vmem>>, vector<128x128xbf16>
    %cst_140 = arith.constant dense<0.000000e+00> : vector<8x128xf32>
    %152 = tpu.matmul %150, %151, %cst_140 {dimension_numbers = #tpu.dot_dimension_numbers<[1], [0], [0], [1], [0, 0, 1, 1], [], []>} : vector<8x128xbf16>, vector<128x128xbf16>, vector<8x128xf32> -> vector<8x128xf32>
    %c0_141 = arith.constant 0 : index
    %c0_142 = arith.constant 0 : index
    %153 = vector.load %arg13[%c0_141, %c0_142] : memref<1x128xf32, #tpu.memory_space<vmem>>, vector<1x128xf32>
    %154 = vector.broadcast %153 : vector<1x128xf32> to vector<8x128xf32>
    %155 = arith.addf %152, %154 : vector<8x128xf32>
    %c0_143 = arith.constant 0 : index
    %c0_144 = arith.constant 0 : index
    %156 = vector.load %arg14[%c0_143, %c0_144] : memref<8x128xf32, #tpu.memory_space<vmem>>, vector<8x128xf32>
    tpu.vector_store %arg14[%c0_143, %c0_144], %155 {strides = array<i32>} : memref<8x128xf32, #tpu.memory_space<vmem>>, vector<8x128xf32>,
    return
  }
  func.func @transform_0(%arg0: i32) -> (i32, i32) {
    %c0_i32 = arith.constant 0 : i32
    %c0_i32_0 = arith.constant 0 : i32
    return %arg0, %c0_i32 : i32, i32
  }
  func.func @transform_1(%arg0: i32) -> (i32, i32) {
    %c0_i32 = arith.constant 0 : i32
    %c0_i32_0 = arith.constant 0 : i32
    %c0_i32_1 = arith.constant 0 : i32
    return %c0_i32, %c0_i32_0 : i32, i32
  }
  func.func @transform_2(%arg0: i32) -> (i32, i32) {
    %c0_i32 = arith.constant 0 : i32
    %c0_i32_0 = arith.constant 0 : i32
    %c0_i32_1 = arith.constant 0 : i32
    return %c0_i32, %c0_i32_0 : i32, i32
  }
  func.func @transform_3(%arg0: i32) -> (i32, i32, i32) {
    %c0_i32 = arith.constant 0 : i32
    %c0_i32_0 = arith.constant 0 : i32
    %c0_i32_1 = arith.constant 0 : i32
    %c0_i32_2 = arith.constant 0 : i32
    return %c0_i32, %c0_i32_0, %c0_i32_1 : i32, i32, i32
  }
  func.func @transform_4(%arg0: i32) -> (i32, i32) {
    %c0_i32 = arith.constant 0 : i32
    %c0_i32_0 = arith.constant 0 : i32
    %c0_i32_1 = arith.constant 0 : i32
    return %c0_i32, %c0_i32_0 : i32, i32
  }
  func.func @transform_5(%arg0: i32) -> (i32, i32, i32) {
    %c0_i32 = arith.constant 0 : i32
    %c0_i32_0 = arith.constant 0 : i32
    %c0_i32_1 = arith.constant 0 : i32
    %c0_i32_2 = arith.constant 0 : i32
    return %c0_i32, %c0_i32_0, %c0_i32_1 : i32, i32, i32
  }
  func.func @transform_6(%arg0: i32) -> (i32, i32) {
    %c0_i32 = arith.constant 0 : i32
    %c0_i32_0 = arith.constant 0 : i32
    %c0_i32_1 = arith.constant 0 : i32
    return %c0_i32, %c0_i32_0 : i32, i32
  }
  func.func @transform_7(%arg0: i32) -> (i32, i32) {
    %c0_i32 = arith.constant 0 : i32
    %c0_i32_0 = arith.constant 0 : i32
    %c0_i32_1 = arith.constant 0 : i32
    return %c0_i32, %c0_i32_0 : i32, i32
  }
  func.func @transform_8(%arg0: i32) -> (i32, i32) {
    %c0_i32 = arith.constant 0 : i32
    %c0_i32_0 = arith.constant 0 : i32
    %c0_i32_1 = arith.constant 0 : i32
    return %c0_i32, %c0_i32_0 : i32, i32
  }
  func.func @transform_9(%arg0: i32) -> (i32, i32) {
    %c0_i32 = arith.constant 0 : i32
    %c0_i32_0 = arith.constant 0 : i32
    %c0_i32_1 = arith.constant 0 : i32
    return %c0_i32, %c0_i32_0 : i32, i32
  }
  func.func @transform_10(%arg0: i32) -> (i32, i32) {
    %c0_i32 = arith.constant 0 : i32
    %c0_i32_0 = arith.constant 0 : i32
    %c0_i32_1 = arith.constant 0 : i32
    return %c0_i32, %c0_i32_0 : i32, i32
  }
  func.func @transform_11(%arg0: i32) -> (i32, i32) {
    %c0_i32 = arith.constant 0 : i32
    %c0_i32_0 = arith.constant 0 : i32
    %c0_i32_1 = arith.constant 0 : i32
    return %c0_i32, %c0_i32_0 : i32, i32
  }
  func.func @transform_12(%arg0: i32) -> (i32, i32) {
    %c0_i32 = arith.constant 0 : i32
    %c0_i32_0 = arith.constant 0 : i32
    %c0_i32_1 = arith.constant 0 : i32
    return %c0_i32, %c0_i32_0 : i32, i32
  }
  func.func @transform_13(%arg0: i32) -> (i32, i32) {
    %c0_i32 = arith.constant 0 : i32
    %c0_i32_0 = arith.constant 0 : i32
    return %arg0, %c0_i32 : i32, i32
  }
}

</mosaic_0001>

<llo_original>
// kernel: cnn32_forward_pallas.1
$region0: #{cnn32_forward_pallas.1}
  #allocation0 [shape = 'u32[]', space=smem, size = 0x4, offset = 0x4, fixed_abs, tag = 'smem constant byte address 0x4 - core index']
  #allocation1 [shape = 'u32[144,128]{1,0:T(1,128)}', space=vmem, size = 0x12000, scoped, tag = 'internal scratch']
  #allocation2 [shape = 'bf16[328,128]{1,0:T(8,128)(2,1)}', space=vmem, size = 0x14800, scoped, tag = 'scratch operand']
  #allocation3 [shape = 'bf16[112,128]{1,0:T(8,128)(2,1)}', space=vmem, size = 0x7000, scoped, tag = 'scratch operand']
  #allocation4 [shape = 'bf16[48,128]{1,0:T(8,128)(2,1)}', space=vmem, size = 0x3000, scoped, tag = 'scratch operand']
  #allocation5 [shape = 'bf16[8,512]{1,0:T(8,128)(2,1)}', space=vmem, size = 0x2000, scoped, tag = 'scratch operand']
  %s0 = inlined_call_operand.vmem [shape: f32[688,1], index: 0, kind: input, shape index: {}]
  %s1 = inlined_call_operand.vmem [shape: f32[8,128], index: 1, kind: input, shape index: {}]
  %s2 = inlined_call_operand.vmem [shape: f32[1,128], index: 2, kind: input, shape index: {}]
  %s3 = inlined_call_operand.vmem [shape: bf16[4,128,128], index: 3, kind: input, shape index: {}]
  %s4 = inlined_call_operand.vmem [shape: f32[1,128], index: 4, kind: input, shape index: {}]
  %s5 = inlined_call_operand.vmem [shape: bf16[4,128,128], index: 5, kind: input, shape index: {}]
  %s6 = inlined_call_operand.vmem [shape: f32[1,128], index: 6, kind: input, shape index: {}]
  %s7 = inlined_call_operand.vmem [shape: bf16[100,272], index: 7, kind: input, shape index: {}]
  %s8 = inlined_call_operand.vmem [shape: bf16[36,72], index: 8, kind: input, shape index: {}]
  %s9 = inlined_call_operand.vmem [shape: bf16[512,128], index: 9, kind: input, shape index: {}]
  %s10 = inlined_call_operand.vmem [shape: f32[1,128], index: 10, kind: input, shape index: {}]
  %s11 = inlined_call_operand.vmem [shape: bf16[128,128], index: 11, kind: input, shape index: {}]
  %s12 = inlined_call_operand.vmem [shape: f32[1,128], index: 12, kind: input, shape index: {}]
  %s13 = inlined_call_operand.vmem [shape: f32[16,128], index: 13, kind: output, shape index: {}]
  %s14 = sld [smem:[#allocation0]]
  $region85: #{cnn32_forward_pallas.1} parent=0
    _
  %s16 = ssub.s32 1, %s14
  %s17 = scalar_select 0, %s16, %s14
  loop: start=0, step=1, limit=4
  $region2: #{cnn32_forward_pallas.1} parent=0 // loop_pre_header
    _
  $region3: #{cnn32_forward_pallas.1} parent=0 // loop_header
    %s19 = sphi 0, %s23
    %p20 = scmp.ge.s32.totalorder %s19, 4
    %s29 = sphi 0, %s31
    %s32 = sphi 0, %s29
    %s33 = sphi 0, %s32
    %s49 = sphi 0, %s33
    %s53 = sphi 0, %s53
    %s55 = sphi 0, %s53
    %s56 = sphi 0, %s55
    %s70 = sphi 0, %s56
    %s74 = sphi 0, %s74
    %s76 = sphi 0, %s74
    %s77 = sphi 0, %s76
    %s91 = sphi 0, %s77
    %s95 = sphi 0, %s95
    %s97 = sphi 0, %s95
    %s98 = sphi 0, %s97
    %s112 = sphi 0, %s98
    %s116 = sphi 0, %s116
    %s118 = sphi 0, %s116
    %s119 = sphi 0, %s118
    %s133 = sphi 0, %s119
    %s137 = sphi 0, %s137
    %s139 = sphi 0, %s137
    %s140 = sphi 0, %s139
    %s154 = sphi 0, %s140
    %s158 = sphi 0, %s158
    %s160 = sphi 0, %s158
    %s161 = sphi 0, %s160
    %s175 = sphi 0, %s161
    %s179 = sphi 0, %s179
    %s181 = sphi 0, %s179
    %s182 = sphi 0, %s181
    %s196 = sphi 0, %s182
    %s200 = sphi 0, %s200
    %s202 = sphi 0, %s200
    %s203 = sphi 0, %s202
    %s217 = sphi 0, %s203
    %s221 = sphi 0, %s221
    %s223 = sphi 0, %s221
    %s224 = sphi 0, %s223
    %s238 = sphi 0, %s224
    %s242 = sphi 0, %s242
    %s244 = sphi 0, %s242
    %s245 = sphi 0, %s244
    %s259 = sphi 0, %s245
    %s263 = sphi 0, %s263
    %s265 = sphi 0, %s263
    %s266 = sphi 0, %s265
    %s280 = sphi 0, %s266
    %s284 = sphi 0, %s284
    %s286 = sphi 0, %s284
    %s287 = sphi 0, %s286
    %s301 = sphi 0, %s287
    %s307 = sphi 0, %s309
    %s310 = sphi 0, %s307
    %s311 = sphi 0, %s310
    %s327 = sphi 0, %s311
  $region4: #{cnn32_forward_pallas.1} parent=0 // loop_header_branch
    %22 = sbr.rel (%p20) target = $region8
  $region5: #{cnn32_forward_pallas.1} parent=0 // loop_body
    %s24 = ssub.s32 %s19, 1
    %s25 = ssub.s32 %s19, 2
    %s26 = sadd.s32 %s19, 1
    %s27 = ssub.s32 %s19, %s26
    %p28 = scmp.eq.s32.totalorder %s27, 0
    %s30 = sadd.s32 %s29, 1
    %s31 = scalar_select %p28, %s29, %s30
    %p34 = pneg %p28
    %p35 = scmp.eq.s32.totalorder %s19, 1
    %p36 = por %p34, %p35
    %p37 = scmp.ne.s32.totalorder %s29, %s32
    %p38 = scmp.eq.s32.totalorder %s19, 0
    %p39 = por %p37, %p38
    %p40 = scmp.ne.s32.totalorder %s29, %s32
    %p41 = scmp.eq.s32.totalorder %s24, 1
    %p42 = por %p40, %p41
    %p43 = scmp.ne.s32.totalorder %s32, %s33
    %p44 = scmp.eq.s32.totalorder %s24, 0
    %p45 = por %p43, %p44
    %p46 = scmp.ne.s32.totalorder %s32, %s33
    %p47 = scmp.eq.s32.totalorder %s25, 1
    %p48 = por %p46, %p47
    %p50 = scmp.ne.s32.totalorder %s33, %s49
    %p51 = scmp.eq.s32.totalorder %s25, 0
    %p52 = por %p50, %p51
    %s54 = sadd.s32 %s53, 1
    %p57 = scmp.eq.s32.totalorder %s19, 1
    %p58 = scmp.ne.s32.totalorder %s53, %s55
    %p59 = scmp.eq.s32.totalorder %s19, 0
    %p60 = por %p58, %p59
    %p61 = scmp.ne.s32.totalorder %s53, %s55
    %p62 = scmp.eq.s32.totalorder %s24, 1
    %p63 = por %p61, %p62
    %p64 = scmp.ne.s32.totalorder %s55, %s56
    %p65 = scmp.eq.s32.totalorder %s24, 0
    %p66 = por %p64, %p65
    %p67 = scmp.ne.s32.totalorder %s55, %s56
    %p68 = scmp.eq.s32.totalorder %s25, 1
    %p69 = por %p67, %p68
    %p71 = scmp.ne.s32.totalorder %s56, %s70
    %p72 = scmp.eq.s32.totalorder %s25, 0
    %p73 = por %p71, %p72
    %s75 = sadd.s32 %s74, 1
    %p78 = scmp.eq.s32.totalorder %s19, 1
    %p79 = scmp.ne.s32.totalorder %s74, %s76
    %p80 = scmp.eq.s32.totalorder %s19, 0
    %p81 = por %p79, %p80
    %p82 = scmp.ne.s32.totalorder %s74, %s76
    %p83 = scmp.eq.s32.totalorder %s24, 1
    %p84 = por %p82, %p83
    %p85 = scmp.ne.s32.totalorder %s76, %s77
    %p86 = scmp.eq.s32.totalorder %s24, 0
    %p87 = por %p85, %p86
    %p88 = scmp.ne.s32.totalorder %s76, %s77
    %p89 = scmp.eq.s32.totalorder %s25, 1
    %p90 = por %p88, %p89
    %p92 = scmp.ne.s32.totalorder %s77, %s91
    %p93 = scmp.eq.s32.totalorder %s25, 0
    %p94 = por %p92, %p93
    %s96 = sadd.s32 %s95, 1
    %p99 = scmp.eq.s32.totalorder %s19, 1
    %p100 = scmp.ne.s32.totalorder %s95, %s97
    %p101 = scmp.eq.s32.totalorder %s19, 0
    %p102 = por %p100, %p101
    %p103 = scmp.ne.s32.totalorder %s95, %s97
    %p104 = scmp.eq.s32.totalorder %s24, 1
    %p105 = por %p103, %p104
    %p106 = scmp.ne.s32.totalorder %s97, %s98
    %p107 = scmp.eq.s32.totalorder %s24, 0
    %p108 = por %p106, %p107
    %p109 = scmp.ne.s32.totalorder %s97, %s98
    %p110 = scmp.eq.s32.totalorder %s25, 1
    %p111 = por %p109, %p110
    %p113 = scmp.ne.s32.totalorder %s98, %s112
    %p114 = scmp.eq.s32.totalorder %s25, 0
    %p115 = por %p113, %p114
    %s117 = sadd.s32 %s116, 1
    %p120 = scmp.eq.s32.totalorder %s19, 1
    %p121 = scmp.ne.s32.totalorder %s116, %s118
    %p122 = scmp.eq.s32.totalorder %s19, 0
    %p123 = por %p121, %p122
    %p124 = scmp.ne.s32.totalorder %s116, %s118
    %p125 = scmp.eq.s32.totalorder %s24, 1
    %p126 = por %p124, %p125
    %p127 = scmp.ne.s32.totalorder %s118, %s119
    %p128 = scmp.eq.s32.totalorder %s24, 0
    %p129 = por %p127, %p128
    %p130 = scmp.ne.s32.totalorder %s118, %s119
    %p131 = scmp.eq.s32.totalorder %s25, 1
    %p132 = por %p130, %p131
    %p134 = scmp.ne.s32.totalorder %s119, %s133
    %p135 = scmp.eq.s32.totalorder %s25, 0
    %p136 = por %p134, %p135
    %s138 = sadd.s32 %s137, 1
    %p141 = scmp.eq.s32.totalorder %s19, 1
    %p142 = scmp.ne.s32.totalorder %s137, %s139
    %p143 = scmp.eq.s32.totalorder %s19, 0
    %p144 = por %p142, %p143
    %p145 = scmp.ne.s32.totalorder %s137, %s139
    %p146 = scmp.eq.s32.totalorder %s24, 1
    %p147 = por %p145, %p146
    %p148 = scmp.ne.s32.totalorder %s139, %s140
    %p149 = scmp.eq.s32.totalorder %s24, 0
    %p150 = por %p148, %p149
    %p151 = scmp.ne.s32.totalorder %s139, %s140
    %p152 = scmp.eq.s32.totalorder %s25, 1
    %p153 = por %p151, %p152
    %p155 = scmp.ne.s32.totalorder %s140, %s154
    %p156 = scmp.eq.s32.totalorder %s25, 0
    %p157 = por %p155, %p156
    %s159 = sadd.s32 %s158, 1
    %p162 = scmp.eq.s32.totalorder %s19, 1
    %p163 = scmp.ne.s32.totalorder %s158, %s160
    %p164 = scmp.eq.s32.totalorder %s19, 0
    %p165 = por %p163, %p164
    %p166 = scmp.ne.s32.totalorder %s158, %s160
    %p167 = scmp.eq.s32.totalorder %s24, 1
    %p168 = por %p166, %p167
    %p169 = scmp.ne.s32.totalorder %s160, %s161
    %p170 = scmp.eq.s32.totalorder %s24, 0
    %p171 = por %p169, %p170
    %p172 = scmp.ne.s32.totalorder %s160, %s161
    %p173 = scmp.eq.s32.totalorder %s25, 1
    %p174 = por %p172, %p173
    %p176 = scmp.ne.s32.totalorder %s161, %s175
    %p177 = scmp.eq.s32.totalorder %s25, 0
    %p178 = por %p176, %p177
    %s180 = sadd.s32 %s179, 1
    %p183 = scmp.eq.s32.totalorder %s19, 1
    %p184 = scmp.ne.s32.totalorder %s179, %s181
    %p185 = scmp.eq.s32.totalorder %s19, 0
    %p186 = por %p184, %p185
    %p187 = scmp.ne.s32.totalorder %s179, %s181
    %p188 = scmp.eq.s32.totalorder %s24, 1
    %p189 = por %p187, %p188
    %p190 = scmp.ne.s32.totalorder %s181, %s182
    %p191 = scmp.eq.s32.totalorder %s24, 0
    %p192 = por %p190, %p191
    %p193 = scmp.ne.s32.totalorder %s181, %s182
    %p194 = scmp.eq.s32.totalorder %s25, 1
    %p195 = por %p193, %p194
    %p197 = scmp.ne.s32.totalorder %s182, %s196
    %p198 = scmp.eq.s32.totalorder %s25, 0
    %p199 = por %p197, %p198
    %s201 = sadd.s32 %s200, 1
    %p204 = scmp.eq.s32.totalorder %s19, 1
    %p205 = scmp.ne.s32.totalorder %s200, %s202
    %p206 = scmp.eq.s32.totalorder %s19, 0
    %p207 = por %p205, %p206
    %p208 = scmp.ne.s32.totalorder %s200, %s202
    %p209 = scmp.eq.s32.totalorder %s24, 1
    %p210 = por %p208, %p209
    %p211 = scmp.ne.s32.totalorder %s202, %s203
    %p212 = scmp.eq.s32.totalorder %s24, 0
    %p213 = por %p211, %p212
    %p214 = scmp.ne.s32.totalorder %s202, %s203
    %p215 = scmp.eq.s32.totalorder %s25, 1
    %p216 = por %p214, %p215
    %p218 = scmp.ne.s32.totalorder %s203, %s217
    %p219 = scmp.eq.s32.totalorder %s25, 0
    %p220 = por %p218, %p219
    %s222 = sadd.s32 %s221, 1
    %p225 = scmp.eq.s32.totalorder %s19, 1
    %p226 = scmp.ne.s32.totalorder %s221, %s223
    %p227 = scmp.eq.s32.totalorder %s19, 0
    %p228 = por %p226, %p227
    %p229 = scmp.ne.s32.totalorder %s221, %s223
    %p230 = scmp.eq.s32.totalorder %s24, 1
    %p231 = por %p229, %p230
    %p232 = scmp.ne.s32.totalorder %s223, %s224
    %p233 = scmp.eq.s32.totalorder %s24, 0
    %p234 = por %p232, %p233
    %p235 = scmp.ne.s32.totalorder %s223, %s224
    %p236 = scmp.eq.s32.totalorder %s25, 1
    %p237 = por %p235, %p236
    %p239 = scmp.ne.s32.totalorder %s224, %s238
    %p240 = scmp.eq.s32.totalorder %s25, 0
    %p241 = por %p239, %p240
    %s243 = sadd.s32 %s242, 1
    %p246 = scmp.eq.s32.totalorder %s19, 1
    %p247 = scmp.ne.s32.totalorder %s242, %s244
    %p248 = scmp.eq.s32.totalorder %s19, 0
    %p249 = por %p247, %p248
    %p250 = scmp.ne.s32.totalorder %s242, %s244
    %p251 = scmp.eq.s32.totalorder %s24, 1
    %p252 = por %p250, %p251
    %p253 = scmp.ne.s32.totalorder %s244, %s245
    %p254 = scmp.eq.s32.totalorder %s24, 0
    %p255 = por %p253, %p254
    %p256 = scmp.ne.s32.totalorder %s244, %s245
    %p257 = scmp.eq.s32.totalorder %s25, 1
    %p258 = por %p256, %p257
    %p260 = scmp.ne.s32.totalorder %s245, %s259
    %p261 = scmp.eq.s32.totalorder %s25, 0
    %p262 = por %p260, %p261
    %s264 = sadd.s32 %s263, 1
    %p267 = scmp.eq.s32.totalorder %s19, 1
    %p268 = scmp.ne.s32.totalorder %s263, %s265
    %p269 = scmp.eq.s32.totalorder %s19, 0
    %p270 = por %p268, %p269
    %p271 = scmp.ne.s32.totalorder %s263, %s265
    %p272 = scmp.eq.s32.totalorder %s24, 1
    %p273 = por %p271, %p272
    %p274 = scmp.ne.s32.totalorder %s265, %s266
    %p275 = scmp.eq.s32.totalorder %s24, 0
    %p276 = por %p274, %p275
    %p277 = scmp.ne.s32.totalorder %s265, %s266
    %p278 = scmp.eq.s32.totalorder %s25, 1
    %p279 = por %p277, %p278
    %p281 = scmp.ne.s32.totalorder %s266, %s280
    %p282 = scmp.eq.s32.totalorder %s25, 0
    %p283 = por %p281, %p282
    %s285 = sadd.s32 %s284, 1
    %p288 = scmp.eq.s32.totalorder %s19, 1
    %p289 = scmp.ne.s32.totalorder %s284, %s286
    %p290 = scmp.eq.s32.totalorder %s19, 0
    %p291 = por %p289, %p290
    %p292 = scmp.ne.s32.totalorder %s284, %s286
    %p293 = scmp.eq.s32.totalorder %s24, 1
    %p294 = por %p292, %p293
    %p295 = scmp.ne.s32.totalorder %s286, %s287
    %p296 = scmp.eq.s32.totalorder %s24, 0
    %p297 = por %p295, %p296
    %p298 = scmp.ne.s32.totalorder %s286, %s287
    %p299 = scmp.eq.s32.totalorder %s25, 1
    %p300 = por %p298, %p299
    %p302 = scmp.ne.s32.totalorder %s287, %s301
    %p303 = scmp.eq.s32.totalorder %s25, 0
    %p304 = por %p302, %p303
    %s305 = ssub.s32 %s19, %s26
    %p306 = scmp.eq.s32.totalorder %s305, 0
    %s308 = sadd.s32 %s307, 1
    %s309 = scalar_select %p306, %s307, %s308
    %p312 = pneg %p306
    %p313 = scmp.eq.s32.totalorder %s19, 1
    %p314 = por %p312, %p313
    %p315 = scmp.ne.s32.totalorder %s307, %s310
    %p316 = scmp.eq.s32.totalorder %s19, 0
    %p317 = por %p315, %p316
    %p318 = scmp.ne.s32.totalorder %s307, %s310
    %p319 = scmp.eq.s32.totalorder %s24, 1
    %p320 = por %p318, %p319
    %p321 = scmp.ne.s32.totalorder %s310, %s311
    %p322 = scmp.eq.s32.totalorder %s24, 0
    %p323 = por %p321, %p322
    %p324 = scmp.ne.s32.totalorder %s310, %s311
    %p325 = scmp.eq.s32.totalorder %s25, 1
    %p326 = por %p324, %p325
    %p328 = scmp.ne.s32.totalorder %s311, %s327
    %p329 = scmp.eq.s32.totalorder %s25, 0
    %p330 = por %p328, %p329
    %p331 = scmp.le.s32.totalorder 1, %s19
    %p332 = scmp.lt.s32.totalorder %s19, 3
    %p333 = pnand %p331, %p332
    %p334 = pneg %p333
    // Predicated region
    $region9: #{cnn32_forward_pallas.1} parent=5 // pred_check
      _
    $region10: #{cnn32_forward_pallas.1} parent=5 // pred_check_branch
      %336 = sbr.rel (%p333) target = $region12
    $region11: #{cnn32_forward_pallas.1} parent=5 // pred_region
      %s337 = ssub.s32 %s19, 1
      // Predicated region
      $region13: #{cnn32_forward_pallas.1} parent=11 // pred_check
        %p338 = pneg %p66
      $region14: #{cnn32_forward_pallas.1} parent=11 // pred_check_branch
        %340 = sbr.rel (%p338) target = $region16
      $region15: #{cnn32_forward_pallas.1} parent=11 // pred_region
        _
      $region16: #{cnn32_forward_pallas.1} parent=11 // pred_fallthru
        _
      // Predicated region
      $region17: #{cnn32_forward_pallas.1} parent=11 // pred_check
        %p341 = pneg %p87
      $region18: #{cnn32_forward_pallas.1} parent=11 // pred_check_branch
        %343 = sbr.rel (%p341) target = $region20
      $region19: #{cnn32_forward_pallas.1} parent=11 // pred_region
        _
      $region20: #{cnn32_forward_pallas.1} parent=11 // pred_fallthru
        _
      // Predicated region
      $region21: #{cnn32_forward_pallas.1} parent=11 // pred_check
        %p344 = pneg %p108
      $region22: #{cnn32_forward_pallas.1} parent=11 // pred_check_branch
        %346 = sbr.rel (%p344) target = $region24
      $region23: #{cnn32_forward_pallas.1} parent=11 // pred_region
        _
      $region24: #{cnn32_forward_pallas.1} parent=11 // pred_fallthru
        _
      // Predicated region
      $region25: #{cnn32_forward_pallas.1} parent=11 // pred_check
        %p347 = pneg %p129
      $region26: #{cnn32_forward_pallas.1} parent=11 // pred_check_branch
        %349 = sbr.rel (%p347) target = $region28
      $region27: #{cnn32_forward_pallas.1} parent=11 // pred_region
        _
      $region28: #{cnn32_forward_pallas.1} parent=11 // pred_fallthru
        _
      // Predicated region
      $region29: #{cnn32_forward_pallas.1} parent=11 // pred_check
        %p350 = pneg %p150
      $region30: #{cnn32_forward_pallas.1} parent=11 // pred_check_branch
        %352 = sbr.rel (%p350) target = $region32
      $region31: #{cnn32_forward_pallas.1} parent=11 // pred_region
        _
      $region32: #{cnn32_forward_pallas.1} parent=11 // pred_fallthru
        _
      // Predicated region
      $region33: #{cnn32_forward_pallas.1} parent=11 // pred_check
        %p353 = pneg %p171
      $region34: #{cnn32_forward_pallas.1} parent=11 // pred_check_branch
        %355 = sbr.rel (%p353) target = $region36
      $region35: #{cnn32_forward_pallas.1} parent=11 // pred_region
        _
      $region36: #{cnn32_forward_pallas.1} parent=11 // pred_fallthru
        _
      // Predicated region
      $region37: #{cnn32_forward_pallas.1} parent=11 // pred_check
        %p356 = pneg %p192
      $region38: #{cnn32_forward_pallas.1} parent=11 // pred_check_branch
        %358 = sbr.rel (%p356) target = $region40
      $region39: #{cnn32_forward_pallas.1} parent=11 // pred_region
        _
      $region40: #{cnn32_forward_pallas.1} parent=11 // pred_fallthru
        _
      // Predicated region
      $region41: #{cnn32_forward_pallas.1} parent=11 // pred_check
        %p359 = pneg %p213
      $region42: #{cnn32_forward_pallas.1} parent=11 // pred_check_branch
        %361 = sbr.rel (%p359) target = $region44
      $region43: #{cnn32_forward_pallas.1} parent=11 // pred_region
        _
      $region44: #{cnn32_forward_pallas.1} parent=11 // pred_fallthru
        _
      // Predicated region
      $region45: #{cnn32_forward_pallas.1} parent=11 // pred_check
        %p362 = pneg %p234
      $region46: #{cnn32_forward_pallas.1} parent=11 // pred_check_branch
        %364 = sbr.rel (%p362) target = $region48
      $region47: #{cnn32_forward_pallas.1} parent=11 // pred_region
        _
      $region48: #{cnn32_forward_pallas.1} parent=11 // pred_fallthru
        _
      // Predicated region
      $region49: #{cnn32_forward_pallas.1} parent=11 // pred_check
        %p365 = pneg %p255
      $region50: #{cnn32_forward_pallas.1} parent=11 // pred_check_branch
        %367 = sbr.rel (%p365) target = $region52
      $region51: #{cnn32_forward_pallas.1} parent=11 // pred_region
        _
      $region52: #{cnn32_forward_pallas.1} parent=11 // pred_fallthru
        _
      // Predicated region
      $region53: #{cnn32_forward_pallas.1} parent=11 // pred_check
        %p368 = pneg %p276
      $region54: #{cnn32_forward_pallas.1} parent=11 // pred_check_branch
        %370 = sbr.rel (%p368) target = $region56
      $region55: #{cnn32_forward_pallas.1} parent=11 // pred_region
        _
      $region56: #{cnn32_forward_pallas.1} parent=11 // pred_fallthru
        _
      // Predicated region
      $region57: #{cnn32_forward_pallas.1} parent=11 // pred_check
        %p371 = pneg %p297
      $region58: #{cnn32_forward_pallas.1} parent=11 // pred_check_branch
        %373 = sbr.rel (%p371) target = $region60
      $region59: #{cnn32_forward_pallas.1} parent=11 // pred_region
        _
      $region60: #{cnn32_forward_pallas.1} parent=11 // pred_fallthru
        _
    $region12: #{cnn32_forward_pallas.1} parent=5 // pred_fallthru
      _
    %p374 = scmp.lt.s32.totalorder %s19, 2
    // Predicated region
    $region61: #{cnn32_forward_pallas.1} parent=5 // pred_check
      %p375 = pneg %p374
    $region62: #{cnn32_forward_pallas.1} parent=5 // pred_check_branch
      %377 = sbr.rel (%p375) target = $region64
    $region63: #{cnn32_forward_pallas.1} parent=5 // pred_region
      // Predicated region
      $region65: #{cnn32_forward_pallas.1} parent=63 // pred_check
        %p378 = pneg %p39
      $region66: #{cnn32_forward_pallas.1} parent=63 // pred_check_branch
        %380 = sbr.rel (%p378) target = $region68
      $region67: #{cnn32_forward_pallas.1} parent=63 // pred_region
        %s381 = smul.u32 43, %s19
        %p382 = scmp.lt.s32.totalorder %s381, 85
        %s383 = scalar_select %p382, %s381, 85
        %s384 = smul.addr %s383, 8
        %s385 = scalar_lea.vmem %s0, %s384
        %s386 = smul.u32 43, %s19
      $region68: #{cnn32_forward_pallas.1} parent=63 // pred_fallthru
        _
    $region64: #{cnn32_forward_pallas.1} parent=5 // pred_fallthru
      _
    %p387 = scmp.le.s32.totalorder 1, %s19
    %p388 = scmp.lt.s32.totalorder %s19, 3
    %p389 = pnand %p387, %p388
    %p390 = pneg %p389
    // Predicated region
    $region69: #{cnn32_forward_pallas.1} parent=5 // pred_check
      _
    $region70: #{cnn32_forward_pallas.1} parent=5 // pred_check_branch
      %392 = sbr.rel (%p389) target = $region72
    $region71: #{cnn32_forward_pallas.1} parent=5 // pred_region
      %s393 = ssub.s32 %s19, 1
      %s394 = smul.u32 43, %s24
      %p395 = scmp.lt.s32.totalorder %s394, 85
      %s396 = scalar_select %p395, %s394, 85
      %s397 = smul.addr %s396, 8
      %s398 = scalar_lea.vmem %s0, %s397
      %p399 = pneg %p45
      %p400 = pneg %p42
      %p401 = pneg %p66
      %p402 = pneg %p63
      %p403 = pneg %p87
      %p404 = pneg %p84
      %p405 = pneg %p108
      %p406 = pneg %p105
      %p407 = pneg %p129
      %p408 = pneg %p126
      %p409 = pneg %p150
      %p410 = pneg %p147
      %p411 = pneg %p171
      %p412 = pneg %p168
      %p413 = pneg %p192
      %p414 = pneg %p189
      %p415 = pneg %p213
      %p416 = pneg %p210
      %p417 = pneg %p234
      %p418 = pneg %p231
      %p419 = pneg %p255
      %p420 = pneg %p252
      %p421 = pneg %p276
      %p422 = pneg %p273
      %p423 = pneg %p297
      %p424 = pneg %p294
      %p425 = pneg %p323
      %p426 = pneg %p320
      %p427 = scmp.lt.s32.totalorder %s24, 1
      %s428 = scalar_select %p427, %s24, 1
      %s429 = smul.addr %s428, 8
      %s430 = scalar_lea.vmem %s13, %s429
      %s431 = smul.u32 43, %s24
      %p432 = scmp.lt.s32.totalorder %s431, 85
      %s433 = scalar_select %p432, %s431, 85
      %s434 = smul.addr %s433, 8
      %s435 = scalar_lea.vmem %s0, %s434
      %s436 = smul.u32 43, %s24
      %p437 = scmp.lt.s32.totalorder %s24, 1
      %s438 = scalar_select %p437, %s24, 1
      %s439 = smul.addr %s438, 8
      %s440 = scalar_lea.vmem %s13, %s439
      %v442 = vld [vmem:[%s435] sm:$0xff]
      %v443 = vld [vmem:[%s435 + $0x8] sm:$0xff]
      %v444 = vld [vmem:[%s435 + $0x10] sm:$0xff]
      %v445 = vld [vmem:[%s435 + $0x18] sm:$0xff]
      %v446 = vld [vmem:[%s435 + $0x20] sm:$0xff]
      %v447 = vld [vmem:[%s435 + $0x28] sm:$0xff]
      %v448 = vld [vmem:[%s435 + $0x30] sm:$0xff]
      %v449 = vld [vmem:[%s435 + $0x38] sm:$0xff]
      %v450 = vld [vmem:[%s435 + $0x40] sm:$0xff]
      %v451 = vld [vmem:[%s435 + $0x48] sm:$0xff]
      %v452 = vld [vmem:[%s435 + $0x50] sm:$0xff]
      %v453 = vld [vmem:[%s435 + $0x58] sm:$0xff]
      %v454 = vld [vmem:[%s435 + $0x60] sm:$0xff]
      %v455 = vld [vmem:[%s435 + $0x68] sm:$0xff]
      %v456 = vld [vmem:[%s435 + $0x70] sm:$0xff]
      %v457 = vld [vmem:[%s435 + $0x78] sm:$0xff]
      %v458 = vld [vmem:[%s435 + $0x80] sm:$0xff]
      %v459 = vld [vmem:[%s435 + $0x88] sm:$0xff]
      %v460 = vld [vmem:[%s435 + $0x90] sm:$0xff]
      %v461 = vld [vmem:[%s435 + $0x98] sm:$0xff]
      %v462 = vld [vmem:[%s435 + $0xa0] sm:$0xff]
      %v463 = vld [vmem:[%s435 + $0xa8] sm:$0xff]
      %v464 = vld [vmem:[%s435 + $0xb0] sm:$0xff]
      %v465 = vld [vmem:[%s435 + $0xb8] sm:$0xff]
      %v466 = vld [vmem:[%s435 + $0xc0] sm:$0xff]
      %v467 = vld [vmem:[%s435 + $0xc8] sm:$0xff]
      %v468 = vld [vmem:[%s435 + $0xd0] sm:$0xff]
      %v469 = vld [vmem:[%s435 + $0xd8] sm:$0xff]
      %v470 = vld [vmem:[%s435 + $0xe0] sm:$0xff]
      %v471 = vld [vmem:[%s435 + $0xe8] sm:$0xff]
      %v472 = vld [vmem:[%s435 + $0xf0] sm:$0xff]
      %v473 = vld [vmem:[%s435 + $0xf8] sm:$0xff]
      %v474 = vld [vmem:[%s435 + $0x100] sm:$0xff]
      %v475 = vld [vmem:[%s435 + $0x108] sm:$0xff]
      %v476 = vld [vmem:[%s435 + $0x110] sm:$0xff]
      %v477 = vld [vmem:[%s435 + $0x118] sm:$0xff]
      %v478 = vld [vmem:[%s435 + $0x120] sm:$0xff]
      %v479 = vld [vmem:[%s435 + $0x128] sm:$0xff]
      %v480 = vld [vmem:[%s435 + $0x130] sm:$0xff]
      %v481 = vld [vmem:[%s435 + $0x138] sm:$0xff]
      %v482 = vld [vmem:[%s435 + $0x140] sm:$0xf]
      %v483 = vld [vmem:[%s1] sm:$0x1]
      %485 = vset.pattern.permute.xlu0 0
      %486 = vperm.xlu0 %485, %v442
      %v487 = vpop.permute.xlu0 %486
      %490 = vset.pattern.permute.xlu0 0
      %491 = vperm.xlu0 %490, %v443
      %v492 = vpop.permute.xlu0 %491
      %495 = vset.pattern.permute.xlu0 0
      %496 = vperm.xlu0 %495, %v444
      %v497 = vpop.permute.xlu0 %496
      %500 = vset.pattern.permute.xlu0 0
      %501 = vperm.xlu0 %500, %v445
      %v502 = vpop.permute.xlu0 %501
      %505 = vset.pattern.permute.xlu0 0
      %506 = vperm.xlu0 %505, %v446
      %v507 = vpop.permute.xlu0 %506
      %510 = vset.pattern.permute.xlu0 0
      %511 = vperm.xlu0 %510, %v447
      %v512 = vpop.permute.xlu0 %511
      %515 = vset.pattern.permute.xlu0 0
      %516 = vperm.xlu0 %515, %v448
      %v517 = vpop.permute.xlu0 %516
      %520 = vset.pattern.permute.xlu0 0
      %521 = vperm.xlu0 %520, %v449
      %v522 = vpop.permute.xlu0 %521
      %525 = vset.pattern.permute.xlu0 0
      %526 = vperm.xlu0 %525, %v450
      %v527 = vpop.permute.xlu0 %526
      %530 = vset.pattern.permute.xlu0 0
      %531 = vperm.xlu0 %530, %v451
      %v532 = vpop.permute.xlu0 %531
      %535 = vset.pattern.permute.xlu0 0
      %536 = vperm.xlu0 %535, %v452
      %v537 = vpop.permute.xlu0 %536
      %540 = vset.pattern.permute.xlu0 0
      %541 = vperm.xlu0 %540, %v453
      %v542 = vpop.permute.xlu0 %541
      %545 = vset.pattern.permute.xlu0 0
      %546 = vperm.xlu0 %545, %v454
      %v547 = vpop.permute.xlu0 %546
      %550 = vset.pattern.permute.xlu0 0
      %551 = vperm.xlu0 %550, %v455
      %v552 = vpop.permute.xlu0 %551
      %555 = vset.pattern.permute.xlu0 0
      %556 = vperm.xlu0 %555, %v456
      %v557 = vpop.permute.xlu0 %556
      %560 = vset.pattern.permute.xlu0 0
      %561 = vperm.xlu0 %560, %v457
      %v562 = vpop.permute.xlu0 %561
      %565 = vset.pattern.permute.xlu0 0
      %566 = vperm.xlu0 %565, %v458
      %v567 = vpop.permute.xlu0 %566
      %570 = vset.pattern.permute.xlu0 0
      %571 = vperm.xlu0 %570, %v459
      %v572 = vpop.permute.xlu0 %571
      %575 = vset.pattern.permute.xlu0 0
      %576 = vperm.xlu0 %575, %v460
      %v577 = vpop.permute.xlu0 %576
      %580 = vset.pattern.permute.xlu0 0
      %581 = vperm.xlu0 %580, %v461
      %v582 = vpop.permute.xlu0 %581
      %585 = vset.pattern.permute.xlu0 0
      %586 = vperm.xlu0 %585, %v462
      %v587 = vpop.permute.xlu0 %586
      %590 = vset.pattern.permute.xlu0 0
      %591 = vperm.xlu0 %590, %v463
      %v592 = vpop.permute.xlu0 %591
      %595 = vset.pattern.permute.xlu0 0
      %596 = vperm.xlu0 %595, %v464
      %v597 = vpop.permute.xlu0 %596
      %600 = vset.pattern.permute.xlu0 0
      %601 = vperm.xlu0 %600, %v465
      %v602 = vpop.permute.xlu0 %601
      %605 = vset.pattern.permute.xlu0 0
      %606 = vperm.xlu0 %605, %v466
      %v607 = vpop.permute.xlu0 %606
      %610 = vset.pattern.permute.xlu0 0
      %611 = vperm.xlu0 %610, %v467
      %v612 = vpop.permute.xlu0 %611
      %615 = vset.pattern.permute.xlu0 0
      %616 = vperm.xlu0 %615, %v468
      %v617 = vpop.permute.xlu0 %616
      %620 = vset.pattern.permute.xlu0 0
      %621 = vperm.xlu0 %620, %v469
      %v622 = vpop.permute.xlu0 %621
      %625 = vset.pattern.permute.xlu0 0
      %626 = vperm.xlu0 %625, %v470
      %v627 = vpop.permute.xlu0 %626
      %630 = vset.pattern.permute.xlu0 0
      %631 = vperm.xlu0 %630, %v471
      %v632 = vpop.permute.xlu0 %631
      %635 = vset.pattern.permute.xlu0 0
      %636 = vperm.xlu0 %635, %v472
      %v637 = vpop.permute.xlu0 %636
      %640 = vset.pattern.permute.xlu0 0
      %641 = vperm.xlu0 %640, %v473
      %v642 = vpop.permute.xlu0 %641
      %645 = vset.pattern.permute.xlu0 0
      %646 = vperm.xlu0 %645, %v474
      %v647 = vpop.permute.xlu0 %646
      %650 = vset.pattern.permute.xlu0 0
      %651 = vperm.xlu0 %650, %v475
      %v652 = vpop.permute.xlu0 %651
      %655 = vset.pattern.permute.xlu0 0
      %656 = vperm.xlu0 %655, %v476
      %v657 = vpop.permute.xlu0 %656
      %660 = vset.pattern.permute.xlu0 0
      %661 = vperm.xlu0 %660, %v477
      %v662 = vpop.permute.xlu0 %661
      %665 = vset.pattern.permute.xlu0 0
      %666 = vperm.xlu0 %665, %v478
      %v667 = vpop.permute.xlu0 %666
      %670 = vset.pattern.permute.xlu0 0
      %671 = vperm.xlu0 %670, %v479
      %v672 = vpop.permute.xlu0 %671
      %675 = vset.pattern.permute.xlu0 0
      %676 = vperm.xlu0 %675, %v480
      %v677 = vpop.permute.xlu0 %676
      %680 = vset.pattern.permute.xlu0 0
      %681 = vperm.xlu0 %680, %v481
      %v682 = vpop.permute.xlu0 %681
      %685 = vset.pattern.permute.xlu0 0
      %686 = vperm.xlu0 %685, %v482
      %v687 = vpop.permute.xlu0 %686
      %v689 = vlaneseq
      %v690 = vshrl.u32 %v689, 7
      %v691 = vsub.s32 0, %v690
      %v692 = vrot.slane %v483, %v691
      %v693 = vmul.f32 %v487, %v692
      %v694 = vmul.f32 %v492, %v692
      %v695 = vmul.f32 %v497, %v692
      %v696 = vmul.f32 %v502, %v692
      %v697 = vmul.f32 %v507, %v692
      %v698 = vmul.f32 %v512, %v692
      %v699 = vmul.f32 %v517, %v692
      %v700 = vmul.f32 %v522, %v692
      %v701 = vmul.f32 %v527, %v692
      %v702 = vmul.f32 %v532, %v692
      %v703 = vmul.f32 %v537, %v692
      %v704 = vmul.f32 %v542, %v692
      %v705 = vmul.f32 %v547, %v692
      %v706 = vmul.f32 %v552, %v692
      %v707 = vmul.f32 %v557, %v692
      %v708 = vmul.f32 %v562, %v692
      %v709 = vmul.f32 %v567, %v692
      %v710 = vmul.f32 %v572, %v692
      %v711 = vmul.f32 %v577, %v692
      %v712 = vmul.f32 %v582, %v692
      %v713 = vmul.f32 %v587, %v692
      %v714 = vmul.f32 %v592, %v692
      %v715 = vmul.f32 %v597, %v692
      %v716 = vmul.f32 %v602, %v692
      %v717 = vmul.f32 %v607, %v692
      %v718 = vmul.f32 %v612, %v692
      %v719 = vmul.f32 %v617, %v692
      %v720 = vmul.f32 %v622, %v692
      %v721 = vmul.f32 %v627, %v692
      %v722 = vmul.f32 %v632, %v692
      %v723 = vmul.f32 %v637, %v692
      %v724 = vmul.f32 %v642, %v692
      %v725 = vmul.f32 %v647, %v692
      %v726 = vmul.f32 %v652, %v692
      %v727 = vmul.f32 %v657, %v692
      %v728 = vmul.f32 %v662, %v692
      %v729 = vmul.f32 %v667, %v692
      %v730 = vmul.f32 %v672, %v692
      %v731 = vmul.f32 %v677, %v692
      %v732 = vmul.f32 %v682, %v692
      %v733 = vmul.f32 %v687, %v692
      %v734 = vld [vmem:[%s435 + $0x1] sm:$0xff]
      %v735 = vld [vmem:[%s435 + $0x9] sm:$0xff]
      %v736 = vld [vmem:[%s435 + $0x11] sm:$0xff]
      %v737 = vld [vmem:[%s435 + $0x19] sm:$0xff]
      %v738 = vld [vmem:[%s435 + $0x21] sm:$0xff]
      %v739 = vld [vmem:[%s435 + $0x29] sm:$0xff]
      %v740 = vld [vmem:[%s435 + $0x31] sm:$0xff]
      %v741 = vld [vmem:[%s435 + $0x39] sm:$0xff]
      %v742 = vld [vmem:[%s435 + $0x41] sm:$0xff]
      %v743 = vld [vmem:[%s435 + $0x49] sm:$0xff]
      %v744 = vld [vmem:[%s435 + $0x51] sm:$0xff]
      %v745 = vld [vmem:[%s435 + $0x59] sm:$0xff]
      %v746 = vld [vmem:[%s435 + $0x61] sm:$0xff]
      %v747 = vld [vmem:[%s435 + $0x69] sm:$0xff]
      %v748 = vld [vmem:[%s435 + $0x71] sm:$0xff]
      %v749 = vld [vmem:[%s435 + $0x79] sm:$0xff]
      %v750 = vld [vmem:[%s435 + $0x81] sm:$0xff]
      %v751 = vld [vmem:[%s435 + $0x89] sm:$0xff]
      %v752 = vld [vmem:[%s435 + $0x91] sm:$0xff]
      %v753 = vld [vmem:[%s435 + $0x99] sm:$0xff]
      %v754 = vld [vmem:[%s435 + $0xa1] sm:$0xff]
      %v755 = vld [vmem:[%s435 + $0xa9] sm:$0xff]
      %v756 = vld [vmem:[%s435 + $0xb1] sm:$0xff]
      %v757 = vld [vmem:[%s435 + $0xb9] sm:$0xff]
      %v758 = vld [vmem:[%s435 + $0xc1] sm:$0xff]
      %v759 = vld [vmem:[%s435 + $0xc9] sm:$0xff]
      %v760 = vld [vmem:[%s435 + $0xd1] sm:$0xff]
      %v761 = vld [vmem:[%s435 + $0xd9] sm:$0xff]
      %v762 = vld [vmem:[%s435 + $0xe1] sm:$0xff]
      %v763 = vld [vmem:[%s435 + $0xe9] sm:$0xff]
      %v764 = vld [vmem:[%s435 + $0xf1] sm:$0xff]
      %v765 = vld [vmem:[%s435 + $0xf9] sm:$0xff]
      %v766 = vld [vmem:[%s435 + $0x101] sm:$0xff]
      %v767 = vld [vmem:[%s435 + $0x109] sm:$0xff]
      %v768 = vld [vmem:[%s435 + $0x111] sm:$0xff]
      %v769 = vld [vmem:[%s435 + $0x119] sm:$0xff]
      %v770 = vld [vmem:[%s435 + $0x121] sm:$0xff]
      %v771 = vld [vmem:[%s435 + $0x129] sm:$0xff]
      %v772 = vld [vmem:[%s435 + $0x131] sm:$0xff]
      %v773 = vld [vmem:[%s435 + $0x139] sm:$0xff]
      %v774 = vld [vmem:[%s435 + $0x141] sm:$0xf]
      %v775 = vld [vmem:[%s1 + $0x1] sm:$0x1]
      %777 = vset.pattern.permute.xlu0 0
      %778 = vperm.xlu0 %777, %v734
      %v779 = vpop.permute.xlu0 %778
      %782 = vset.pattern.permute.xlu0 0
      %783 = vperm.xlu0 %782, %v735
      %v784 = vpop.permute.xlu0 %783
      %787 = vset.pattern.permute.xlu0 0
      %788 = vperm.xlu0 %787, %v736
      %v789 = vpop.permute.xlu0 %788
      %792 = vset.pattern.permute.xlu0 0
      %793 = vperm.xlu0 %792, %v737
      %v794 = vpop.permute.xlu0 %793
      %797 = vset.pattern.permute.xlu0 0
      %798 = vperm.xlu0 %797, %v738
      %v799 = vpop.permute.xlu0 %798
      %802 = vset.pattern.permute.xlu0 0
      %803 = vperm.xlu0 %802, %v739
      %v804 = vpop.permute.xlu0 %803
      %807 = vset.pattern.permute.xlu0 0
      %808 = vperm.xlu0 %807, %v740
      %v809 = vpop.permute.xlu0 %808
      %812 = vset.pattern.permute.xlu0 0
      %813 = vperm.xlu0 %812, %v741
      %v814 = vpop.permute.xlu0 %813
      %817 = vset.pattern.permute.xlu0 0
      %818 = vperm.xlu0 %817, %v742
      %v819 = vpop.permute.xlu0 %818
      %822 = vset.pattern.permute.xlu0 0
      %823 = vperm.xlu0 %822, %v743
      %v824 = vpop.permute.xlu0 %823
      %827 = vset.pattern.permute.xlu0 0
      %828 = vperm.xlu0 %827, %v744
      %v829 = vpop.permute.xlu0 %828
      %832 = vset.pattern.permute.xlu0 0
      %833 = vperm.xlu0 %832, %v745
      %v834 = vpop.permute.xlu0 %833
      %837 = vset.pattern.permute.xlu0 0
      %838 = vperm.xlu0 %837, %v746
      %v839 = vpop.permute.xlu0 %838
      %842 = vset.pattern.permute.xlu0 0
      %843 = vperm.xlu0 %842, %v747
      %v844 = vpop.permute.xlu0 %843
      %847 = vset.pattern.permute.xlu0 0
      %848 = vperm.xlu0 %847, %v748
      %v849 = vpop.permute.xlu0 %848
      %852 = vset.pattern.permute.xlu0 0
      %853 = vperm.xlu0 %852, %v749
      %v854 = vpop.permute.xlu0 %853
      %857 = vset.pattern.permute.xlu0 0
      %858 = vperm.xlu0 %857, %v750
      %v859 = vpop.permute.xlu0 %858
      %862 = vset.pattern.permute.xlu0 0
      %863 = vperm.xlu0 %862, %v751
      %v864 = vpop.permute.xlu0 %863
      %867 = vset.pattern.permute.xlu0 0
      %868 = vperm.xlu0 %867, %v752
      %v869 = vpop.permute.xlu0 %868
      %872 = vset.pattern.permute.xlu0 0
      %873 = vperm.xlu0 %872, %v753
      %v874 = vpop.permute.xlu0 %873
      %877 = vset.pattern.permute.xlu0 0
      %878 = vperm.xlu0 %877, %v754
      %v879 = vpop.permute.xlu0 %878
      %882 = vset.pattern.permute.xlu0 0
      %883 = vperm.xlu0 %882, %v755
      %v884 = vpop.permute.xlu0 %883
      %887 = vset.pattern.permute.xlu0 0
      %888 = vperm.xlu0 %887, %v756
      %v889 = vpop.permute.xlu0 %888
      %892 = vset.pattern.permute.xlu0 0
      %893 = vperm.xlu0 %892, %v757
      %v894 = vpop.permute.xlu0 %893
      %897 = vset.pattern.permute.xlu0 0
      %898 = vperm.xlu0 %897, %v758
      %v899 = vpop.permute.xlu0 %898
      %902 = vset.pattern.permute.xlu0 0
      %903 = vperm.xlu0 %902, %v759
      %v904 = vpop.permute.xlu0 %903
      %907 = vset.pattern.permute.xlu0 0
      %908 = vperm.xlu0 %907, %v760
      %v909 = vpop.permute.xlu0 %908
      %912 = vset.pattern.permute.xlu0 0
      %913 = vperm.xlu0 %912, %v761
      %v914 = vpop.permute.xlu0 %913
      %917 = vset.pattern.permute.xlu0 0
      %918 = vperm.xlu0 %917, %v762
      %v919 = vpop.permute.xlu0 %918
      %922 = vset.pattern.permute.xlu0 0
      %923 = vperm.xlu0 %922, %v763
      %v924 = vpop.permute.xlu0 %923
      %927 = vset.pattern.permute.xlu0 0
      %928 = vperm.xlu0 %927, %v764
      %v929 = vpop.permute.xlu0 %928
      %932 = vset.pattern.permute.xlu0 0
      %933 = vperm.xlu0 %932, %v765
      %v934 = vpop.permute.xlu0 %933
      %937 = vset.pattern.permute.xlu0 0
      %938 = vperm.xlu0 %937, %v766
      %v939 = vpop.permute.xlu0 %938
      %942 = vset.pattern.permute.xlu0 0
      %943 = vperm.xlu0 %942, %v767
      %v944 = vpop.permute.xlu0 %943
      %947 = vset.pattern.permute.xlu0 0
      %948 = vperm.xlu0 %947, %v768
      %v949 = vpop.permute.xlu0 %948
      %952 = vset.pattern.permute.xlu0 0
      %953 = vperm.xlu0 %952, %v769
      %v954 = vpop.permute.xlu0 %953
      %957 = vset.pattern.permute.xlu0 0
      %958 = vperm.xlu0 %957, %v770
      %v959 = vpop.permute.xlu0 %958
      %962 = vset.pattern.permute.xlu0 0
      %963 = vperm.xlu0 %962, %v771
      %v964 = vpop.permute.xlu0 %963
      %967 = vset.pattern.permute.xlu0 0
      %968 = vperm.xlu0 %967, %v772
      %v969 = vpop.permute.xlu0 %968
      %972 = vset.pattern.permute.xlu0 0
      %973 = vperm.xlu0 %972, %v773
      %v974 = vpop.permute.xlu0 %973
      %977 = vset.pattern.permute.xlu0 0
      %978 = vperm.xlu0 %977, %v774
      %v979 = vpop.permute.xlu0 %978
      %v981 = vlaneseq
      %v982 = vshrl.u32 %v981, 7
      %v983 = vsub.s32 0, %v982
      %v984 = vrot.slane %v775, %v983
      %v985 = vmul.f32 %v779, %v984
      %v986 = vmul.f32 %v784, %v984
      %v987 = vmul.f32 %v789, %v984
      %v988 = vmul.f32 %v794, %v984
      %v989 = vmul.f32 %v799, %v984
      %v990 = vmul.f32 %v804, %v984
      %v991 = vmul.f32 %v809, %v984
      %v992 = vmul.f32 %v814, %v984
      %v993 = vmul.f32 %v819, %v984
      %v994 = vmul.f32 %v824, %v984
      %v995 = vmul.f32 %v829, %v984
      %v996 = vmul.f32 %v834, %v984
      %v997 = vmul.f32 %v839, %v984
      %v998 = vmul.f32 %v844, %v984
      %v999 = vmul.f32 %v849, %v984
      %v1000 = vmul.f32 %v854, %v984
      %v1001 = vmul.f32 %v859, %v984
      %v1002 = vmul.f32 %v864, %v984
      %v1003 = vmul.f32 %v869, %v984
      %v1004 = vmul.f32 %v874, %v984
      %v1005 = vmul.f32 %v879, %v984
      %v1006 = vmul.f32 %v884, %v984
      %v1007 = vmul.f32 %v889, %v984
      %v1008 = vmul.f32 %v894, %v984
      %v1009 = vmul.f32 %v899, %v984
      %v1010 = vmul.f32 %v904, %v984
      %v1011 = vmul.f32 %v909, %v984
      %v1012 = vmul.f32 %v914, %v984
      %v1013 = vmul.f32 %v919, %v984
      %v1014 = vmul.f32 %v924, %v984
      %v1015 = vmul.f32 %v929, %v984
      %v1016 = vmul.f32 %v934, %v984
      %v1017 = vmul.f32 %v939, %v984
      %v1018 = vmul.f32 %v944, %v984
      %v1019 = vmul.f32 %v949, %v984
      %v1020 = vmul.f32 %v954, %v984
      %v1021 = vmul.f32 %v959, %v984
      %v1022 = vmul.f32 %v964, %v984
      %v1023 = vmul.f32 %v969, %v984
      %v1024 = vmul.f32 %v974, %v984
      %v1025 = vmul.f32 %v979, %v984
      %v1026 = vadd.f32 %v693, %v985
      %v1027 = vadd.f32 %v694, %v986
      %v1028 = vadd.f32 %v695, %v987
      %v1029 = vadd.f32 %v696, %v988
      %v1030 = vadd.f32 %v697, %v989
      %v1031 = vadd.f32 %v698, %v990
      %v1032 = vadd.f32 %v699, %v991
      %v1033 = vadd.f32 %v700, %v992
      %v1034 = vadd.f32 %v701, %v993
      %v1035 = vadd.f32 %v702, %v994
      %v1036 = vadd.f32 %v703, %v995
      %v1037 = vadd.f32 %v704, %v996
      %v1038 = vadd.f32 %v705, %v997
      %v1039 = vadd.f32 %v706, %v998
      %v1040 = vadd.f32 %v707, %v999
      %v1041 = vadd.f32 %v708, %v1000
      %v1042 = vadd.f32 %v709, %v1001
      %v1043 = vadd.f32 %v710, %v1002
      %v1044 = vadd.f32 %v711, %v1003
      %v1045 = vadd.f32 %v712, %v1004
      %v1046 = vadd.f32 %v713, %v1005
      %v1047 = vadd.f32 %v714, %v1006
      %v1048 = vadd.f32 %v715, %v1007
      %v1049 = vadd.f32 %v716, %v1008
      %v1050 = vadd.f32 %v717, %v1009
      %v1051 = vadd.f32 %v718, %v1010
      %v1052 = vadd.f32 %v719, %v1011
      %v1053 = vadd.f32 %v720, %v1012
      %v1054 = vadd.f32 %v721, %v1013
      %v1055 = vadd.f32 %v722, %v1014
      %v1056 = vadd.f32 %v723, %v1015
      %v1057 = vadd.f32 %v724, %v1016
      %v1058 = vadd.f32 %v725, %v1017
      %v1059 = vadd.f32 %v726, %v1018
      %v1060 = vadd.f32 %v727, %v1019
      %v1061 = vadd.f32 %v728, %v1020
      %v1062 = vadd.f32 %v729, %v1021
      %v1063 = vadd.f32 %v730, %v1022
      %v1064 = vadd.f32 %v731, %v1023
      %v1065 = vadd.f32 %v732, %v1024
      %v1066 = vadd.f32 %v733, %v1025
      %v1067 = vld [vmem:[%s435 + $0x12] sm:$0xff]
      %v1068 = vld [vmem:[%s435 + $0x1a] sm:$0xff]
      %v1069 = vld [vmem:[%s435 + $0x22] sm:$0xff]
      %v1070 = vld [vmem:[%s435 + $0x2a] sm:$0xff]
      %v1071 = vld [vmem:[%s435 + $0x32] sm:$0xff]
      %v1072 = vld [vmem:[%s435 + $0x3a] sm:$0xff]
      %v1073 = vld [vmem:[%s435 + $0x42] sm:$0xff]
      %v1074 = vld [vmem:[%s435 + $0x4a] sm:$0xff]
      %v1075 = vld [vmem:[%s435 + $0x52] sm:$0xff]
      %v1076 = vld [vmem:[%s435 + $0x5a] sm:$0xff]
      %v1077 = vld [vmem:[%s435 + $0x62] sm:$0xff]
      %v1078 = vld [vmem:[%s435 + $0x6a] sm:$0xff]
      %v1079 = vld [vmem:[%s435 + $0x72] sm:$0xff]
      %v1080 = vld [vmem:[%s435 + $0x7a] sm:$0xff]
      %v1081 = vld [vmem:[%s435 + $0x82] sm:$0xff]
      %v1082 = vld [vmem:[%s435 + $0x8a] sm:$0xff]
      %v1083 = vld [vmem:[%s435 + $0x92] sm:$0xff]
      %v1084 = vld [vmem:[%s435 + $0x9a] sm:$0xff]
      %v1085 = vld [vmem:[%s435 + $0xa2] sm:$0xff]
      %v1086 = vld [vmem:[%s435 + $0xaa] sm:$0xff]
      %v1087 = vld [vmem:[%s435 + $0xb2] sm:$0xff]
      %v1088 = vld [vmem:[%s435 + $0xba] sm:$0xff]
      %v1089 = vld [vmem:[%s435 + $0xc2] sm:$0xff]
      %v1090 = vld [vmem:[%s435 + $0xca] sm:$0xff]
      %v1091 = vld [vmem:[%s435 + $0xd2] sm:$0xff]
      %v1092 = vld [vmem:[%s435 + $0xda] sm:$0xff]
      %v1093 = vld [vmem:[%s435 + $0xe2] sm:$0xff]
      %v1094 = vld [vmem:[%s435 + $0xea] sm:$0xff]
      %v1095 = vld [vmem:[%s435 + $0xf2] sm:$0xff]
      %v1096 = vld [vmem:[%s435 + $0xfa] sm:$0xff]
      %v1097 = vld [vmem:[%s435 + $0x102] sm:$0xff]
      %v1098 = vld [vmem:[%s435 + $0x10a] sm:$0xff]
      %v1099 = vld [vmem:[%s435 + $0x112] sm:$0xff]
      %v1100 = vld [vmem:[%s435 + $0x11a] sm:$0xff]
      %v1101 = vld [vmem:[%s435 + $0x122] sm:$0xff]
      %v1102 = vld [vmem:[%s435 + $0x12a] sm:$0xff]
      %v1103 = vld [vmem:[%s435 + $0x132] sm:$0xff]
      %v1104 = vld [vmem:[%s435 + $0x13a] sm:$0xff]
      %v1105 = vld [vmem:[%s435 + $0x142] sm:$0xff]
      %v1106 = vld [vmem:[%s435 + $0x14a] sm:$0xff]
      %v1107 = vld [vmem:[%s435 + $0x152] sm:$0xf]
      %v1108 = vld [vmem:[%s1 + $0x2] sm:$0x1]
      %1110 = vset.pattern.permute.xlu0 0
      %1111 = vperm.xlu0 %1110, %v1067
      %v1112 = vpop.permute.xlu0 %1111
      %1115 = vset.pattern.permute.xlu0 0
      %1116 = vperm.xlu0 %1115, %v1068
      %v1117 = vpop.permute.xlu0 %1116
      %1120 = vset.pattern.permute.xlu0 0
      %1121 = vperm.xlu0 %1120, %v1069
      %v1122 = vpop.permute.xlu0 %1121
      %1125 = vset.pattern.permute.xlu0 0
      %1126 = vperm.xlu0 %1125, %v1070
      %v1127 = vpop.permute.xlu0 %1126
      %1130 = vset.pattern.permute.xlu0 0
      %1131 = vperm.xlu0 %1130, %v1071
      %v1132 = vpop.permute.xlu0 %1131
      %1135 = vset.pattern.permute.xlu0 0
      %1136 = vperm.xlu0 %1135, %v1072
      %v1137 = vpop.permute.xlu0 %1136
      %1140 = vset.pattern.permute.xlu0 0
      %1141 = vperm.xlu0 %1140, %v1073
      %v1142 = vpop.permute.xlu0 %1141
      %1145 = vset.pattern.permute.xlu0 0
      %1146 = vperm.xlu0 %1145, %v1074
      %v1147 = vpop.permute.xlu0 %1146
      %1150 = vset.pattern.permute.xlu0 0
      %1151 = vperm.xlu0 %1150, %v1075
      %v1152 = vpop.permute.xlu0 %1151
      %1155 = vset.pattern.permute.xlu0 0
      %1156 = vperm.xlu0 %1155, %v1076
      %v1157 = vpop.permute.xlu0 %1156
      %1160 = vset.pattern.permute.xlu0 0
      %1161 = vperm.xlu0 %1160, %v1077
      %v1162 = vpop.permute.xlu0 %1161
      %1165 = vset.pattern.permute.xlu0 0
      %1166 = vperm.xlu0 %1165, %v1078
      %v1167 = vpop.permute.xlu0 %1166
      %1170 = vset.pattern.permute.xlu0 0
      %1171 = vperm.xlu0 %1170, %v1079
      %v1172 = vpop.permute.xlu0 %1171
      %1175 = vset.pattern.permute.xlu0 0
      %1176 = vperm.xlu0 %1175, %v1080
      %v1177 = vpop.permute.xlu0 %1176
      %1180 = vset.pattern.permute.xlu0 0
      %1181 = vperm.xlu0 %1180, %v1081
      %v1182 = vpop.permute.xlu0 %1181
      %1185 = vset.pattern.permute.xlu0 0
      %1186 = vperm.xlu0 %1185, %v1082
      %v1187 = vpop.permute.xlu0 %1186
      %1190 = vset.pattern.permute.xlu0 0
      %1191 = vperm.xlu0 %1190, %v1083
      %v1192 = vpop.permute.xlu0 %1191
      %1195 = vset.pattern.permute.xlu0 0
      %1196 = vperm.xlu0 %1195, %v1084
      %v1197 = vpop.permute.xlu0 %1196
      %1200 = vset.pattern.permute.xlu0 0
      %1201 = vperm.xlu0 %1200, %v1085
      %v1202 = vpop.permute.xlu0 %1201
      %1205 = vset.pattern.permute.xlu0 0
      %1206 = vperm.xlu0 %1205, %v1086
      %v1207 = vpop.permute.xlu0 %1206
      %1210 = vset.pattern.permute.xlu0 0
      %1211 = vperm.xlu0 %1210, %v1087
      %v1212 = vpop.permute.xlu0 %1211
      %1215 = vset.pattern.permute.xlu0 0
      %1216 = vperm.xlu0 %1215, %v1088
      %v1217 = vpop.permute.xlu0 %1216
      %1220 = vset.pattern.permute.xlu0 0
      %1221 = vperm.xlu0 %1220, %v1089
      %v1222 = vpop.permute.xlu0 %1221
      %1225 = vset.pattern.permute.xlu0 0
      %1226 = vperm.xlu0 %1225, %v1090
      %v1227 = vpop.permute.xlu0 %1226
      %1230 = vset.pattern.permute.xlu0 0
      %1231 = vperm.xlu0 %1230, %v1091
      %v1232 = vpop.permute.xlu0 %1231
      %1235 = vset.pattern.permute.xlu0 0
      %1236 = vperm.xlu0 %1235, %v1092
      %v1237 = vpop.permute.xlu0 %1236
      %1240 = vset.pattern.permute.xlu0 0
      %1241 = vperm.xlu0 %1240, %v1093
      %v1242 = vpop.permute.xlu0 %1241
      %1245 = vset.pattern.permute.xlu0 0
      %1246 = vperm.xlu0 %1245, %v1094
      %v1247 = vpop.permute.xlu0 %1246
      %1250 = vset.pattern.permute.xlu0 0
      %1251 = vperm.xlu0 %1250, %v1095
      %v1252 = vpop.permute.xlu0 %1251
      %1255 = vset.pattern.permute.xlu0 0
      %1256 = vperm.xlu0 %1255, %v1096
      %v1257 = vpop.permute.xlu0 %1256
      %1260 = vset.pattern.permute.xlu0 0
      %1261 = vperm.xlu0 %1260, %v1097
      %v1262 = vpop.permute.xlu0 %1261
      %1265 = vset.pattern.permute.xlu0 0
      %1266 = vperm.xlu0 %1265, %v1098
      %v1267 = vpop.permute.xlu0 %1266
      %1270 = vset.pattern.permute.xlu0 0
      %1271 = vperm.xlu0 %1270, %v1099
      %v1272 = vpop.permute.xlu0 %1271
      %1275 = vset.pattern.permute.xlu0 0
      %1276 = vperm.xlu0 %1275, %v1100
      %v1277 = vpop.permute.xlu0 %1276
      %1280 = vset.pattern.permute.xlu0 0
      %1281 = vperm.xlu0 %1280, %v1101
      %v1282 = vpop.permute.xlu0 %1281
      %1285 = vset.pattern.permute.xlu0 0
      %1286 = vperm.xlu0 %1285, %v1102
      %v1287 = vpop.permute.xlu0 %1286
      %1290 = vset.pattern.permute.xlu0 0
      %1291 = vperm.xlu0 %1290, %v1103
      %v1292 = vpop.permute.xlu0 %1291
      %1295 = vset.pattern.permute.xlu0 0
      %1296 = vperm.xlu0 %1295, %v1104
      %v1297 = vpop.permute.xlu0 %1296
      %1300 = vset.pattern.permute.xlu0 0
      %1301 = vperm.xlu0 %1300, %v1105
      %v1302 = vpop.permute.xlu0 %1301
      %1305 = vset.pattern.permute.xlu0 0
      %1306 = vperm.xlu0 %1305, %v1106
      %v1307 = vpop.permute.xlu0 %1306
      %1310 = vset.pattern.permute.xlu0 0
      %1311 = vperm.xlu0 %1310, %v1107
      %v1312 = vpop.permute.xlu0 %1311
      %v1314 = vlaneseq
      %v1315 = vshrl.u32 %v1314, 7
      %v1316 = vsub.s32 0, %v1315
      %v1317 = vrot.slane %v1108, %v1316
      %v1318 = vmul.f32 %v1112, %v1317
      %v1319 = vmul.f32 %v1117, %v1317
      %v1320 = vmul.f32 %v1122, %v1317
      %v1321 = vmul.f32 %v1127, %v1317
      %v1322 = vmul.f32 %v1132, %v1317
      %v1323 = vmul.f32 %v1137, %v1317
      %v1324 = vmul.f32 %v1142, %v1317
      %v1325 = vmul.f32 %v1147, %v1317
      %v1326 = vmul.f32 %v1152, %v1317
      %v1327 = vmul.f32 %v1157, %v1317
      %v1328 = vmul.f32 %v1162, %v1317
      %v1329 = vmul.f32 %v1167, %v1317
      %v1330 = vmul.f32 %v1172, %v1317
      %v1331 = vmul.f32 %v1177, %v1317
      %v1332 = vmul.f32 %v1182, %v1317
      %v1333 = vmul.f32 %v1187, %v1317
      %v1334 = vmul.f32 %v1192, %v1317
      %v1335 = vmul.f32 %v1197, %v1317
      %v1336 = vmul.f32 %v1202, %v1317
      %v1337 = vmul.f32 %v1207, %v1317
      %v1338 = vmul.f32 %v1212, %v1317
      %v1339 = vmul.f32 %v1217, %v1317
      %v1340 = vmul.f32 %v1222, %v1317
      %v1341 = vmul.f32 %v1227, %v1317
      %v1342 = vmul.f32 %v1232, %v1317
      %v1343 = vmul.f32 %v1237, %v1317
      %v1344 = vmul.f32 %v1242, %v1317
      %v1345 = vmul.f32 %v1247, %v1317
      %v1346 = vmul.f32 %v1252, %v1317
      %v1347 = vmul.f32 %v1257, %v1317
      %v1348 = vmul.f32 %v1262, %v1317
      %v1349 = vmul.f32 %v1267, %v1317
      %v1350 = vmul.f32 %v1272, %v1317
      %v1351 = vmul.f32 %v1277, %v1317
      %v1352 = vmul.f32 %v1282, %v1317
      %v1353 = vmul.f32 %v1287, %v1317
      %v1354 = vmul.f32 %v1292, %v1317
      %v1355 = vmul.f32 %v1297, %v1317
      %v1356 = vmul.f32 %v1302, %v1317
      %v1357 = vmul.f32 %v1307, %v1317
      %v1358 = vmul.f32 %v1312, %v1317
      %v1359 = vadd.f32 %v1026, %v1318
      %v1360 = vadd.f32 %v1027, %v1319
      %v1361 = vadd.f32 %v1028, %v1320
      %v1362 = vadd.f32 %v1029, %v1321
      %v1363 = vadd.f32 %v1030, %v1322
      %v1364 = vadd.f32 %v1031, %v1323
      %v1365 = vadd.f32 %v1032, %v1324
      %v1366 = vadd.f32 %v1033, %v1325
      %v1367 = vadd.f32 %v1034, %v1326
      %v1368 = vadd.f32 %v1035, %v1327
      %v1369 = vadd.f32 %v1036, %v1328
      %v1370 = vadd.f32 %v1037, %v1329
      %v1371 = vadd.f32 %v1038, %v1330
      %v1372 = vadd.f32 %v1039, %v1331
      %v1373 = vadd.f32 %v1040, %v1332
      %v1374 = vadd.f32 %v1041, %v1333
      %v1375 = vadd.f32 %v1042, %v1334
      %v1376 = vadd.f32 %v1043, %v1335
      %v1377 = vadd.f32 %v1044, %v1336
      %v1378 = vadd.f32 %v1045, %v1337
      %v1379 = vadd.f32 %v1046, %v1338
      %v1380 = vadd.f32 %v1047, %v1339
      %v1381 = vadd.f32 %v1048, %v1340
      %v1382 = vadd.f32 %v1049, %v1341
      %v1383 = vadd.f32 %v1050, %v1342
      %v1384 = vadd.f32 %v1051, %v1343
      %v1385 = vadd.f32 %v1052, %v1344
      %v1386 = vadd.f32 %v1053, %v1345
      %v1387 = vadd.f32 %v1054, %v1346
      %v1388 = vadd.f32 %v1055, %v1347
      %v1389 = vadd.f32 %v1056, %v1348
      %v1390 = vadd.f32 %v1057, %v1349
      %v1391 = vadd.f32 %v1058, %v1350
      %v1392 = vadd.f32 %v1059, %v1351
      %v1393 = vadd.f32 %v1060, %v1352
      %v1394 = vadd.f32 %v1061, %v1353
      %v1395 = vadd.f32 %v1062, %v1354
      %v1396 = vadd.f32 %v1063, %v1355
      %v1397 = vadd.f32 %v1064, %v1356
      %v1398 = vadd.f32 %v1065, %v1357
      %v1399 = vadd.f32 %v1066, %v1358
      %v1400 = vld [vmem:[%s435 + $0x13] sm:$0xff]
      %v1401 = vld [vmem:[%s435 + $0x1b] sm:$0xff]
      %v1402 = vld [vmem:[%s435 + $0x23] sm:$0xff]
      %v1403 = vld [vmem:[%s435 + $0x2b] sm:$0xff]
      %v1404 = vld [vmem:[%s435 + $0x33] sm:$0xff]
      %v1405 = vld [vmem:[%s435 + $0x3b] sm:$0xff]
      %v1406 = vld [vmem:[%s435 + $0x43] sm:$0xff]
      %v1407 = vld [vmem:[%s435 + $0x4b] sm:$0xff]
      %v1408 = vld [vmem:[%s435 + $0x53] sm:$0xff]
      %v1409 = vld [vmem:[%s435 + $0x5b] sm:$0xff]
      %v1410 = vld [vmem:[%s435 + $0x63] sm:$0xff]
      %v1411 = vld [vmem:[%s435 + $0x6b] sm:$0xff]
      %v1412 = vld [vmem:[%s435 + $0x73] sm:$0xff]
      %v1413 = vld [vmem:[%s435 + $0x7b] sm:$0xff]
      %v1414 = vld [vmem:[%s435 + $0x83] sm:$0xff]
      %v1415 = vld [vmem:[%s435 + $0x8b] sm:$0xff]
      %v1416 = vld [vmem:[%s435 + $0x93] sm:$0xff]
      %v1417 = vld [vmem:[%s435 + $0x9b] sm:$0xff]
      %v1418 = vld [vmem:[%s435 + $0xa3] sm:$0xff]
      %v1419 = vld [vmem:[%s435 + $0xab] sm:$0xff]
      %v1420 = vld [vmem:[%s435 + $0xb3] sm:$0xff]
      %v1421 = vld [vmem:[%s435 + $0xbb] sm:$0xff]
      %v1422 = vld [vmem:[%s435 + $0xc3] sm:$0xff]
      %v1423 = vld [vmem:[%s435 + $0xcb] sm:$0xff]
      %v1424 = vld [vmem:[%s435 + $0xd3] sm:$0xff]
      %v1425 = vld [vmem:[%s435 + $0xdb] sm:$0xff]
      %v1426 = vld [vmem:[%s435 + $0xe3] sm:$0xff]
      %v1427 = vld [vmem:[%s435 + $0xeb] sm:$0xff]
      %v1428 = vld [vmem:[%s435 + $0xf3] sm:$0xff]
      %v1429 = vld [vmem:[%s435 + $0xfb] sm:$0xff]
      %v1430 = vld [vmem:[%s435 + $0x103] sm:$0xff]
      %v1431 = vld [vmem:[%s435 + $0x10b] sm:$0xff]
      %v1432 = vld [vmem:[%s435 + $0x113] sm:$0xff]
      %v1433 = vld [vmem:[%s435 + $0x11b] sm:$0xff]
      %v1434 = vld [vmem:[%s435 + $0x123] sm:$0xff]
      %v1435 = vld [vmem:[%s435 + $0x12b] sm:$0xff]
      %v1436 = vld [vmem:[%s435 + $0x133] sm:$0xff]
      %v1437 = vld [vmem:[%s435 + $0x13b] sm:$0xff]
      %v1438 = vld [vmem:[%s435 + $0x143] sm:$0xff]
      %v1439 = vld [vmem:[%s435 + $0x14b] sm:$0xff]
      %v1440 = vld [vmem:[%s435 + $0x153] sm:$0xf]
      %v1441 = vld [vmem:[%s1 + $0x3] sm:$0x1]
      %1443 = vset.pattern.permute.xlu0 0
      %1444 = vperm.xlu0 %1443, %v1400
      %v1445 = vpop.permute.xlu0 %1444
      %1448 = vset.pattern.permute.xlu0 0
      %1449 = vperm.xlu0 %1448, %v1401
      %v1450 = vpop.permute.xlu0 %1449
      %1453 = vset.pattern.permute.xlu0 0
      %1454 = vperm.xlu0 %1453, %v1402
      %v1455 = vpop.permute.xlu0 %1454
      %1458 = vset.pattern.permute.xlu0 0
      %1459 = vperm.xlu0 %1458, %v1403
      %v1460 = vpop.permute.xlu0 %1459
      %1463 = vset.pattern.permute.xlu0 0
      %1464 = vperm.xlu0 %1463, %v1404
      %v1465 = vpop.permute.xlu0 %1464
      %1468 = vset.pattern.permute.xlu0 0
      %1469 = vperm.xlu0 %1468, %v1405
      %v1470 = vpop.permute.xlu0 %1469
      %1473 = vset.pattern.permute.xlu0 0
      %1474 = vperm.xlu0 %1473, %v1406
      %v1475 = vpop.permute.xlu0 %1474
      %1478 = vset.pattern.permute.xlu0 0
      %1479 = vperm.xlu0 %1478, %v1407
      %v1480 = vpop.permute.xlu0 %1479
      %1483 = vset.pattern.permute.xlu0 0
      %1484 = vperm.xlu0 %1483, %v1408
      %v1485 = vpop.permute.xlu0 %1484
      %1488 = vset.pattern.permute.xlu0 0
      %1489 = vperm.xlu0 %1488, %v1409
      %v1490 = vpop.permute.xlu0 %1489
      %1493 = vset.pattern.permute.xlu0 0
      %1494 = vperm.xlu0 %1493, %v1410
      %v1495 = vpop.permute.xlu0 %1494
      %1498 = vset.pattern.permute.xlu0 0
      %1499 = vperm.xlu0 %1498, %v1411
      %v1500 = vpop.permute.xlu0 %1499
      %1503 = vset.pattern.permute.xlu0 0
      %1504 = vperm.xlu0 %1503, %v1412
      %v1505 = vpop.permute.xlu0 %1504
      %1508 = vset.pattern.permute.xlu0 0
      %1509 = vperm.xlu0 %1508, %v1413
      %v1510 = vpop.permute.xlu0 %1509
      %1513 = vset.pattern.permute.xlu0 0
      %1514 = vperm.xlu0 %1513, %v1414
      %v1515 = vpop.permute.xlu0 %1514
      %1518 = vset.pattern.permute.xlu0 0
      %1519 = vperm.xlu0 %1518, %v1415
      %v1520 = vpop.permute.xlu0 %1519
      %1523 = vset.pattern.permute.xlu0 0
      %1524 = vperm.xlu0 %1523, %v1416
      %v1525 = vpop.permute.xlu0 %1524
      %1528 = vset.pattern.permute.xlu0 0
      %1529 = vperm.xlu0 %1528, %v1417
      %v1530 = vpop.permute.xlu0 %1529
      %1533 = vset.pattern.permute.xlu0 0
      %1534 = vperm.xlu0 %1533, %v1418
      %v1535 = vpop.permute.xlu0 %1534
      %1538 = vset.pattern.permute.xlu0 0
      %1539 = vperm.xlu0 %1538, %v1419
      %v1540 = vpop.permute.xlu0 %1539
      %1543 = vset.pattern.permute.xlu0 0
      %1544 = vperm.xlu0 %1543, %v1420
      %v1545 = vpop.permute.xlu0 %1544
      %1548 = vset.pattern.permute.xlu0 0
      %1549 = vperm.xlu0 %1548, %v1421
      %v1550 = vpop.permute.xlu0 %1549
      %1553 = vset.pattern.permute.xlu0 0
      %1554 = vperm.xlu0 %1553, %v1422
      %v1555 = vpop.permute.xlu0 %1554
      %1558 = vset.pattern.permute.xlu0 0
      %1559 = vperm.xlu0 %1558, %v1423
      %v1560 = vpop.permute.xlu0 %1559
      %1563 = vset.pattern.permute.xlu0 0
      %1564 = vperm.xlu0 %1563, %v1424
      %v1565 = vpop.permute.xlu0 %1564
      %1568 = vset.pattern.permute.xlu0 0
      %1569 = vperm.xlu0 %1568, %v1425
      %v1570 = vpop.permute.xlu0 %1569
      %1573 = vset.pattern.permute.xlu0 0
      %1574 = vperm.xlu0 %1573, %v1426
      %v1575 = vpop.permute.xlu0 %1574
      %1578 = vset.pattern.permute.xlu0 0
      %1579 = vperm.xlu0 %1578, %v1427
      %v1580 = vpop.permute.xlu0 %1579
      %1583 = vset.pattern.permute.xlu0 0
      %1584 = vperm.xlu0 %1583, %v1428
      %v1585 = vpop.permute.xlu0 %1584
      %1588 = vset.pattern.permute.xlu0 0
      %1589 = vperm.xlu0 %1588, %v1429
      %v1590 = vpop.permute.xlu0 %1589
      %1593 = vset.pattern.permute.xlu0 0
      %1594 = vperm.xlu0 %1593, %v1430
      %v1595 = vpop.permute.xlu0 %1594
      %1598 = vset.pattern.permute.xlu0 0
      %1599 = vperm.xlu0 %1598, %v1431
      %v1600 = vpop.permute.xlu0 %1599
      %1603 = vset.pattern.permute.xlu0 0
      %1604 = vperm.xlu0 %1603, %v1432
      %v1605 = vpop.permute.xlu0 %1604
      %1608 = vset.pattern.permute.xlu0 0
      %1609 = vperm.xlu0 %1608, %v1433
      %v1610 = vpop.permute.xlu0 %1609
      %1613 = vset.pattern.permute.xlu0 0
      %1614 = vperm.xlu0 %1613, %v1434
      %v1615 = vpop.permute.xlu0 %1614
      %1618 = vset.pattern.permute.xlu0 0
      %1619 = vperm.xlu0 %1618, %v1435
      %v1620 = vpop.permute.xlu0 %1619
      %1623 = vset.pattern.permute.xlu0 0
      %1624 = vperm.xlu0 %1623, %v1436
      %v1625 = vpop.permute.xlu0 %1624
      %1628 = vset.pattern.permute.xlu0 0
      %1629 = vperm.xlu0 %1628, %v1437
      %v1630 = vpop.permute.xlu0 %1629
      %1633 = vset.pattern.permute.xlu0 0
      %1634 = vperm.xlu0 %1633, %v1438
      %v1635 = vpop.permute.xlu0 %1634
      %1638 = vset.pattern.permute.xlu0 0
      %1639 = vperm.xlu0 %1638, %v1439
      %v1640 = vpop.permute.xlu0 %1639
      %1643 = vset.pattern.permute.xlu0 0
      %1644 = vperm.xlu0 %1643, %v1440
      %v1645 = vpop.permute.xlu0 %1644
      %v1647 = vlaneseq
      %v1648 = vshrl.u32 %v1647, 7
      %v1649 = vsub.s32 0, %v1648
      %v1650 = vrot.slane %v1441, %v1649
      %v1651 = vmul.f32 %v1445, %v1650
      %v1652 = vmul.f32 %v1450, %v1650
      %v1653 = vmul.f32 %v1455, %v1650
      %v1654 = vmul.f32 %v1460, %v1650
      %v1655 = vmul.f32 %v1465, %v1650
      %v1656 = vmul.f32 %v1470, %v1650
      %v1657 = vmul.f32 %v1475, %v1650
      %v1658 = vmul.f32 %v1480, %v1650
      %v1659 = vmul.f32 %v1485, %v1650
      %v1660 = vmul.f32 %v1490, %v1650
      %v1661 = vmul.f32 %v1495, %v1650
      %v1662 = vmul.f32 %v1500, %v1650
      %v1663 = vmul.f32 %v1505, %v1650
      %v1664 = vmul.f32 %v1510, %v1650
      %v1665 = vmul.f32 %v1515, %v1650
      %v1666 = vmul.f32 %v1520, %v1650
      %v1667 = vmul.f32 %v1525, %v1650
      %v1668 = vmul.f32 %v1530, %v1650
      %v1669 = vmul.f32 %v1535, %v1650
      %v1670 = vmul.f32 %v1540, %v1650
      %v1671 = vmul.f32 %v1545, %v1650
      %v1672 = vmul.f32 %v1550, %v1650
      %v1673 = vmul.f32 %v1555, %v1650
      %v1674 = vmul.f32 %v1560, %v1650
      %v1675 = vmul.f32 %v1565, %v1650
      %v1676 = vmul.f32 %v1570, %v1650
      %v1677 = vmul.f32 %v1575, %v1650
      %v1678 = vmul.f32 %v1580, %v1650
      %v1679 = vmul.f32 %v1585, %v1650
      %v1680 = vmul.f32 %v1590, %v1650
      %v1681 = vmul.f32 %v1595, %v1650
      %v1682 = vmul.f32 %v1600, %v1650
      %v1683 = vmul.f32 %v1605, %v1650
      %v1684 = vmul.f32 %v1610, %v1650
      %v1685 = vmul.f32 %v1615, %v1650
      %v1686 = vmul.f32 %v1620, %v1650
      %v1687 = vmul.f32 %v1625, %v1650
      %v1688 = vmul.f32 %v1630, %v1650
      %v1689 = vmul.f32 %v1635, %v1650
      %v1690 = vmul.f32 %v1640, %v1650
      %v1691 = vmul.f32 %v1645, %v1650
      %v1692 = vadd.f32 %v1359, %v1651
      %v1693 = vadd.f32 %v1360, %v1652
      %v1694 = vadd.f32 %v1361, %v1653
      %v1695 = vadd.f32 %v1362, %v1654
      %v1696 = vadd.f32 %v1363, %v1655
      %v1697 = vadd.f32 %v1364, %v1656
      %v1698 = vadd.f32 %v1365, %v1657
      %v1699 = vadd.f32 %v1366, %v1658
      %v1700 = vadd.f32 %v1367, %v1659
      %v1701 = vadd.f32 %v1368, %v1660
      %v1702 = vadd.f32 %v1369, %v1661
      %v1703 = vadd.f32 %v1370, %v1662
      %v1704 = vadd.f32 %v1371, %v1663
      %v1705 = vadd.f32 %v1372, %v1664
      %v1706 = vadd.f32 %v1373, %v1665
      %v1707 = vadd.f32 %v1374, %v1666
      %v1708 = vadd.f32 %v1375, %v1667
      %v1709 = vadd.f32 %v1376, %v1668
      %v1710 = vadd.f32 %v1377, %v1669
      %v1711 = vadd.f32 %v1378, %v1670
      %v1712 = vadd.f32 %v1379, %v1671
      %v1713 = vadd.f32 %v1380, %v1672
      %v1714 = vadd.f32 %v1381, %v1673
      %v1715 = vadd.f32 %v1382, %v1674
      %v1716 = vadd.f32 %v1383, %v1675
      %v1717 = vadd.f32 %v1384, %v1676
      %v1718 = vadd.f32 %v1385, %v1677
      %v1719 = vadd.f32 %v1386, %v1678
      %v1720 = vadd.f32 %v1387, %v1679
      %v1721 = vadd.f32 %v1388, %v1680
      %v1722 = vadd.f32 %v1389, %v1681
      %v1723 = vadd.f32 %v1390, %v1682
      %v1724 = vadd.f32 %v1391, %v1683
      %v1725 = vadd.f32 %v1392, %v1684
      %v1726 = vadd.f32 %v1393, %v1685
      %v1727 = vadd.f32 %v1394, %v1686
      %v1728 = vadd.f32 %v1395, %v1687
      %v1729 = vadd.f32 %v1396, %v1688
      %v1730 = vadd.f32 %v1397, %v1689
      %v1731 = vadd.f32 %v1398, %v1690
      %v1732 = vadd.f32 %v1399, %v1691
      %v1733 = vld [vmem:[%s2] sm:$0x1]
      %v1735 = vlaneseq
      %v1736 = vshrl.u32 %v1735, 7
      %v1737 = vsub.s32 0, %v1736
      %v1738 = vrot.slane %v1733, %v1737
      %v1740 = vadd.f32 %v1692, %v1738
      %v1741 = vadd.f32 %v1693, %v1738
      %v1742 = vadd.f32 %v1694, %v1738
      %v1743 = vadd.f32 %v1695, %v1738
      %v1744 = vadd.f32 %v1696, %v1738
      %v1745 = vadd.f32 %v1697, %v1738
      %v1746 = vadd.f32 %v1698, %v1738
      %v1747 = vadd.f32 %v1699, %v1738
      %v1748 = vadd.f32 %v1700, %v1738
      %v1749 = vadd.f32 %v1701, %v1738
      %v1750 = vadd.f32 %v1702, %v1738
      %v1751 = vadd.f32 %v1703, %v1738
      %v1752 = vadd.f32 %v1704, %v1738
      %v1753 = vadd.f32 %v1705, %v1738
      %v1754 = vadd.f32 %v1706, %v1738
      %v1755 = vadd.f32 %v1707, %v1738
      %v1756 = vadd.f32 %v1708, %v1738
      %v1757 = vadd.f32 %v1709, %v1738
      %v1758 = vadd.f32 %v1710, %v1738
      %v1759 = vadd.f32 %v1711, %v1738
      %v1760 = vadd.f32 %v1712, %v1738
      %v1761 = vadd.f32 %v1713, %v1738
      %v1762 = vadd.f32 %v1714, %v1738
      %v1763 = vadd.f32 %v1715, %v1738
      %v1764 = vadd.f32 %v1716, %v1738
      %v1765 = vadd.f32 %v1717, %v1738
      %v1766 = vadd.f32 %v1718, %v1738
      %v1767 = vadd.f32 %v1719, %v1738
      %v1768 = vadd.f32 %v1720, %v1738
      %v1769 = vadd.f32 %v1721, %v1738
      %v1770 = vadd.f32 %v1722, %v1738
      %v1771 = vadd.f32 %v1723, %v1738
      %v1772 = vadd.f32 %v1724, %v1738
      %v1773 = vadd.f32 %v1725, %v1738
      %v1774 = vadd.f32 %v1726, %v1738
      %v1775 = vadd.f32 %v1727, %v1738
      %v1776 = vadd.f32 %v1728, %v1738
      %v1777 = vadd.f32 %v1729, %v1738
      %v1778 = vadd.f32 %v1730, %v1738
      %v1779 = vadd.f32 %v1731, %v1738
      %v1780 = vadd.f32 %v1732, %v1738
      %v1781 = vmax.f32 %v1740, 0.0
      %v1782 = vmax.f32 %v1741, 0.0
      %v1783 = vmax.f32 %v1742, 0.0
      %v1784 = vmax.f32 %v1743, 0.0
      %v1785 = vmax.f32 %v1744, 0.0
      %v1786 = vmax.f32 %v1745, 0.0
      %v1787 = vmax.f32 %v1746, 0.0
      %v1788 = vmax.f32 %v1747, 0.0
      %v1789 = vmax.f32 %v1748, 0.0
      %v1790 = vmax.f32 %v1749, 0.0
      %v1791 = vmax.f32 %v1750, 0.0
      %v1792 = vmax.f32 %v1751, 0.0
      %v1793 = vmax.f32 %v1752, 0.0
      %v1794 = vmax.f32 %v1753, 0.0
      %v1795 = vmax.f32 %v1754, 0.0
      %v1796 = vmax.f32 %v1755, 0.0
      %v1797 = vmax.f32 %v1756, 0.0
      %v1798 = vmax.f32 %v1757, 0.0
      %v1799 = vmax.f32 %v1758, 0.0
      %v1800 = vmax.f32 %v1759, 0.0
      %v1801 = vmax.f32 %v1760, 0.0
      %v1802 = vmax.f32 %v1761, 0.0
      %v1803 = vmax.f32 %v1762, 0.0
      %v1804 = vmax.f32 %v1763, 0.0
      %v1805 = vmax.f32 %v1764, 0.0
      %v1806 = vmax.f32 %v1765, 0.0
      %v1807 = vmax.f32 %v1766, 0.0
      %v1808 = vmax.f32 %v1767, 0.0
      %v1809 = vmax.f32 %v1768, 0.0
      %v1810 = vmax.f32 %v1769, 0.0
      %v1811 = vmax.f32 %v1770, 0.0
      %v1812 = vmax.f32 %v1771, 0.0
      %v1813 = vmax.f32 %v1772, 0.0
      %v1814 = vmax.f32 %v1773, 0.0
      %v1815 = vmax.f32 %v1774, 0.0
      %v1816 = vmax.f32 %v1775, 0.0
      %v1817 = vmax.f32 %v1776, 0.0
      %v1818 = vmax.f32 %v1777, 0.0
      %v1819 = vmax.f32 %v1778, 0.0
      %v1820 = vmax.f32 %v1779, 0.0
      %v1821 = vmax.f32 %v1780, 0.0
      %v1822 = vpack.c.bf16 %v1782, %v1781
      %v1823 = vpack.c.bf16 %v1784, %v1783
      %v1824 = vpack.c.bf16 %v1786, %v1785
      %v1825 = vpack.c.bf16 %v1788, %v1787
      %v1826 = vpack.c.bf16 %v1790, %v1789
      %v1827 = vpack.c.bf16 %v1792, %v1791
      %v1828 = vpack.c.bf16 %v1794, %v1793
      %v1829 = vpack.c.bf16 %v1796, %v1795
      %v1830 = vpack.c.bf16 %v1798, %v1797
      %v1831 = vpack.c.bf16 %v1800, %v1799
      %v1832 = vpack.c.bf16 %v1802, %v1801
      %v1833 = vpack.c.bf16 %v1804, %v1803
      %v1834 = vpack.c.bf16 %v1806, %v1805
      %v1835 = vpack.c.bf16 %v1808, %v1807
      %v1836 = vpack.c.bf16 %v1810, %v1809
      %v1837 = vpack.c.bf16 %v1812, %v1811
      %v1838 = vpack.c.bf16 %v1814, %v1813
      %v1839 = vpack.c.bf16 %v1816, %v1815
      %v1840 = vpack.c.bf16 %v1818, %v1817
      %v1841 = vpack.c.bf16 %v1820, %v1819
      %v1842 = vpack.c.bf16 %v1821, %v1821
      %v1864 = vunpack.c.l.b16 %v1822
      %v1865 = vunpack.c.h.b16 %v1822
      %v1866 = vunpack.c.l.b16 %v1823
      %v1867 = vunpack.c.h.b16 %v1823
      %v1868 = vunpack.c.l.b16 %v1824
      %v1869 = vunpack.c.h.b16 %v1824
      %v1870 = vunpack.c.l.b16 %v1825
      %v1871 = vunpack.c.h.b16 %v1825
      %v1872 = vunpack.c.l.b16 %v1826
      %v1873 = vunpack.c.h.b16 %v1826
      %v1874 = vunpack.c.l.b16 %v1827
      %v1875 = vunpack.c.h.b16 %v1827
      %v1876 = vunpack.c.l.b16 %v1828
      %v1877 = vunpack.c.h.b16 %v1828
      %v1878 = vunpack.c.l.b16 %v1829
      %v1879 = vunpack.c.h.b16 %v1829
      %v1880 = vunpack.c.l.b16 %v1830
      %v1881 = vunpack.c.h.b16 %v1830
      %v1882 = vunpack.c.l.b16 %v1831
      %v1883 = vunpack.c.h.b16 %v1831
      %v1884 = vunpack.c.l.b16 %v1832
      %v1885 = vunpack.c.h.b16 %v1832
      %v1886 = vunpack.c.l.b16 %v1833
      %v1887 = vunpack.c.h.b16 %v1833
      %v1888 = vunpack.c.l.b16 %v1834
      %v1889 = vunpack.c.h.b16 %v1834
      %v1890 = vunpack.c.l.b16 %v1835
      %v1891 = vunpack.c.h.b16 %v1835
      %v1892 = vunpack.c.l.b16 %v1836
      %v1893 = vunpack.c.h.b16 %v1836
      %v1894 = vunpack.c.l.b16 %v1837
      %v1895 = vunpack.c.h.b16 %v1837
      %v1896 = vunpack.c.l.b16 %v1838
      %v1897 = vunpack.c.h.b16 %v1838
      %v1898 = vunpack.c.l.b16 %v1839
      %v1899 = vunpack.c.h.b16 %v1839
      %v1900 = vunpack.c.l.b16 %v1840
      %v1901 = vunpack.c.h.b16 %v1840
      %v1902 = vunpack.c.l.b16 %v1841
      %v1903 = vunpack.c.h.b16 %v1841
      %v1904 = vunpack.c.l.b16 %v1842
      %v1905 = vpack.c.b16 %v1864, %v1864
      %v1906 = vpack.c.b16 %v1865, %v1865
      %v1907 = vpack.c.b16 %v1866, %v1866
      %v1908 = vpack.c.b16 %v1867, %v1867
      %v1909 = vpack.c.b16 %v1868, %v1868
      %v1910 = vpack.c.b16 %v1869, %v1869
      %v1911 = vpack.c.b16 %v1870, %v1870
      %v1912 = vpack.c.b16 %v1871, %v1871
      %v1913 = vpack.c.b16 %v1872, %v1872
      %v1914 = vpack.c.b16 %v1873, %v1873
      %v1915 = vpack.c.b16 %v1874, %v1874
      %v1916 = vpack.c.b16 %v1875, %v1875
      %v1917 = vpack.c.b16 %v1876, %v1876
      %v1918 = vpack.c.b16 %v1877, %v1877
      %v1919 = vpack.c.b16 %v1878, %v1878
      %v1920 = vpack.c.b16 %v1879, %v1879
      %v1921 = vpack.c.b16 %v1880, %v1880
      %v1922 = vpack.c.b16 %v1881, %v1881
      %v1923 = vpack.c.b16 %v1882, %v1882
      %v1924 = vpack.c.b16 %v1883, %v1883
      %v1925 = vpack.c.b16 %v1884, %v1884
      %v1926 = vpack.c.b16 %v1885, %v1885
      %v1927 = vpack.c.b16 %v1886, %v1886
      %v1928 = vpack.c.b16 %v1887, %v1887
      %v1929 = vpack.c.b16 %v1888, %v1888
      %v1930 = vpack.c.b16 %v1889, %v1889
      %v1931 = vpack.c.b16 %v1890, %v1890
      %v1932 = vpack.c.b16 %v1891, %v1891
      %v1933 = vpack.c.b16 %v1892, %v1892
      %v1934 = vpack.c.b16 %v1893, %v1893
      %v1935 = vpack.c.b16 %v1894, %v1894
      %v1936 = vpack.c.b16 %v1895, %v1895
      %v1937 = vpack.c.b16 %v1896, %v1896
      %v1938 = vpack.c.b16 %v1897, %v1897
      %v1939 = vpack.c.b16 %v1898, %v1898
      %v1940 = vpack.c.b16 %v1899, %v1899
      %v1941 = vpack.c.b16 %v1900, %v1900
      %v1942 = vpack.c.b16 %v1901, %v1901
      %v1943 = vpack.c.b16 %v1902, %v1902
      %v1944 = vpack.c.b16 %v1903, %v1903
      %v1945 = vpack.c.b16 %v1904, %v1904
      %1987 = vst [vmem:[#allocation2] sm:$0xf] %v1905
      %1988 = vst [vmem:[#allocation2 + $0x4] sm:$0xf] %v1906
      %1989 = vst [vmem:[#allocation2 + $0x8] sm:$0xf] %v1907
      %1990 = vst [vmem:[#allocation2 + $0xc] sm:$0xf] %v1908
      %1991 = vst [vmem:[#allocation2 + $0x10] sm:$0xf] %v1909
      %1992 = vst [vmem:[#allocation2 + $0x14] sm:$0xf] %v1910
      %1993 = vst [vmem:[#allocation2 + $0x18] sm:$0xf] %v1911
      %1994 = vst [vmem:[#allocation2 + $0x1c] sm:$0xf] %v1912
      %1995 = vst [vmem:[#allocation2 + $0x20] sm:$0xf] %v1913
      %1996 = vst [vmem:[#allocation2 + $0x24] sm:$0xf] %v1914
      %1997 = vst [vmem:[#allocation2 + $0x28] sm:$0xf] %v1915
      %1998 = vst [vmem:[#allocation2 + $0x2c] sm:$0xf] %v1916
      %1999 = vst [vmem:[#allocation2 + $0x30] sm:$0xf] %v1917
      %2000 = vst [vmem:[#allocation2 + $0x34] sm:$0xf] %v1918
      %2001 = vst [vmem:[#allocation2 + $0x38] sm:$0xf] %v1919
      %2002 = vst [vmem:[#allocation2 + $0x3c] sm:$0xf] %v1920
      %2003 = vst [vmem:[#allocation2 + $0x40] sm:$0xf] %v1921
      %2004 = vst [vmem:[#allocation2 + $0x44] sm:$0xf] %v1922
      %2005 = vst [vmem:[#allocation2 + $0x48] sm:$0xf] %v1923
      %2006 = vst [vmem:[#allocation2 + $0x4c] sm:$0xf] %v1924
      %2007 = vst [vmem:[#allocation2 + $0x50] sm:$0xf] %v1925
      %2008 = vst [vmem:[#allocation2 + $0x54] sm:$0xf] %v1926
      %2009 = vst [vmem:[#allocation2 + $0x58] sm:$0xf] %v1927
      %2010 = vst [vmem:[#allocation2 + $0x5c] sm:$0xf] %v1928
      %2011 = vst [vmem:[#allocation2 + $0x60] sm:$0xf] %v1929
      %2012 = vst [vmem:[#allocation2 + $0x64] sm:$0xf] %v1930
      %2013 = vst [vmem:[#allocation2 + $0x68] sm:$0xf] %v1931
      %2014 = vst [vmem:[#allocation2 + $0x6c] sm:$0xf] %v1932
      %2015 = vst [vmem:[#allocation2 + $0x70] sm:$0xf] %v1933
      %2016 = vst [vmem:[#allocation2 + $0x74] sm:$0xf] %v1934
      %2017 = vst [vmem:[#allocation2 + $0x78] sm:$0xf] %v1935
      %2018 = vst [vmem:[#allocation2 + $0x7c] sm:$0xf] %v1936
      %2019 = vst [vmem:[#allocation2 + $0x80] sm:$0xf] %v1937
      %2020 = vst [vmem:[#allocation2 + $0x84] sm:$0xf] %v1938
      %2021 = vst [vmem:[#allocation2 + $0x88] sm:$0xf] %v1939
      %2022 = vst [vmem:[#allocation2 + $0x8c] sm:$0xf] %v1940
      %2023 = vst [vmem:[#allocation2 + $0x90] sm:$0xf] %v1941
      %2024 = vst [vmem:[#allocation2 + $0x94] sm:$0xf] %v1942
      %2025 = vst [vmem:[#allocation2 + $0x98] sm:$0xf] %v1943
      %2026 = vst [vmem:[#allocation2 + $0x9c] sm:$0xf] %v1944
      %2027 = vst [vmem:[#allocation2 + $0xa0] sm:$0x3] %v1945
      %2028 = vst [vmem:[#allocation3 + $0x30] sm:$0xc] 0
      %2029 = vst [vmem:[#allocation3 + $0x34] sm:$0xf] 0
      %v2030 = vld [vmem:[%s7] sm:$0xff]
      %v2031 = vld [vmem:[%s7 + $0x8] sm:$0xf]
      %v2032 = vld [vmem:[%s7 + $0xc] sm:$0xff]
      %v2033 = vld [vmem:[%s7 + $0x14] sm:$0xf]
      %v2034 = vld [vmem:[%s7 + $0x18] sm:$0xff]
      %v2035 = vld [vmem:[%s7 + $0x20] sm:$0xf]
      %v2036 = vld [vmem:[%s7 + $0x24] sm:$0xff]
      %v2037 = vld [vmem:[%s7 + $0x2c] sm:$0xf]
      %v2038 = vld [vmem:[%s7 + $0x30] sm:$0xff]
      %v2039 = vld [vmem:[%s7 + $0x38] sm:$0xf]
      %v2040 = vld [vmem:[%s7 + $0x3c] sm:$0xff]
      %v2041 = vld [vmem:[%s7 + $0x44] sm:$0xf]
      %v2042 = vld [vmem:[%s7 + $0x48] sm:$0xff]
      %v2043 = vld [vmem:[%s7 + $0x50] sm:$0xf]
      %v2044 = vld [vmem:[%s7 + $0x54] sm:$0xff]
      %v2045 = vld [vmem:[%s7 + $0x5c] sm:$0xf]
      %v2046 = vld [vmem:[%s7 + $0x60] sm:$0xff]
      %v2047 = vld [vmem:[%s7 + $0x68] sm:$0xf]
      %v2048 = vld [vmem:[%s7 + $0x6c] sm:$0xff]
      %v2049 = vld [vmem:[%s7 + $0x74] sm:$0xf]
      %v2050 = vld [vmem:[%s7 + $0x78] sm:$0xff]
      %v2051 = vld [vmem:[%s7 + $0x80] sm:$0xf]
      %v2052 = vld [vmem:[%s7 + $0x84] sm:$0xff]
      %v2053 = vld [vmem:[%s7 + $0x8c] sm:$0xf]
      %v2054 = vld [vmem:[%s7 + $0x90] sm:$0x33]
      %v2055 = vld [vmem:[%s7 + $0x98] sm:$0x3]
      %v2056 = vld [vmem:[#allocation2] sm:$0xf]
      %v2057 = vld [vmem:[#allocation2 + $0x4] sm:$0xf]
      %v2058 = vld [vmem:[#allocation2 + $0x8] sm:$0xf]
      %v2059 = vld [vmem:[#allocation2 + $0xc] sm:$0xf]
      %v2060 = vld [vmem:[#allocation2 + $0x10] sm:$0xf]
      %v2061 = vld [vmem:[#allocation2 + $0x14] sm:$0xf]
      %v2062 = vld [vmem:[#allocation2 + $0x18] sm:$0xf]
      %v2063 = vld [vmem:[#allocation2 + $0x1c] sm:$0xf]
      %v2064 = vld [vmem:[#allocation2 + $0x20] sm:$0xf]
      %v2065 = vld [vmem:[#allocation2 + $0x24] sm:$0xf]
      %v2066 = vld [vmem:[#allocation2 + $0x28] sm:$0xf]
      %v2067 = vld [vmem:[#allocation2 + $0x2c] sm:$0xf]
      %v2068 = vld [vmem:[#allocation2 + $0x30] sm:$0xf]
      %v2069 = vld [vmem:[#allocation2 + $0x34] sm:$0xf]
      %v2070 = vld [vmem:[#allocation2 + $0x38] sm:$0xf]
      %v2071 = vld [vmem:[#allocation2 + $0x3c] sm:$0xf]
      %v2072 = vld [vmem:[#allocation2 + $0x40] sm:$0xf]
      %v2073 = vld [vmem:[#allocation2 + $0x44] sm:$0xf]
      %v2074 = vld [vmem:[#allocation2 + $0x48] sm:$0xf]
      %v2075 = vld [vmem:[#allocation2 + $0x4c] sm:$0xf]
      %v2076 = vld [vmem:[#allocation2 + $0x50] sm:$0xf]
      %v2077 = vld [vmem:[#allocation2 + $0x54] sm:$0xf]
      %v2078 = vld [vmem:[#allocation2 + $0x58] sm:$0xf]
      %v2079 = vld [vmem:[#allocation2 + $0x5c] sm:$0xf]
      %v2080 = vld [vmem:[#allocation2 + $0x60] sm:$0xf]
      %v2081 = vld [vmem:[#allocation2 + $0x64] sm:$0xf]
      %v2082 = vld [vmem:[#allocation2 + $0x68] sm:$0xf]
      %v2083 = vld [vmem:[#allocation2 + $0x6c] sm:$0xf]
      %v2084 = vld [vmem:[#allocation2 + $0x70] sm:$0xf]
      %v2085 = vld [vmem:[#allocation2 + $0x74] sm:$0xf]
      %v2086 = vld [vmem:[#allocation2 + $0x78] sm:$0xf]
      %v2087 = vld [vmem:[#allocation2 + $0x7c] sm:$0xf]
      %v2088 = vld [vmem:[#allocation2 + $0x80] sm:$0xf]
      %v2089 = vld [vmem:[#allocation2 + $0x84] sm:$0xf]
      %v2090 = vld [vmem:[#allocation2 + $0x88] sm:$0x1]
      %vm2091 = vsmask.f32 3328
      %vm2092 = vsmask.f32 7440
      %vm2093 = vmor %vm2091, %vm2092
      %v2095 = vshrl.u32 %v2056, 16
      %v2097 = vrot.slane %v2095, 4
      %v2098 = vshll.u32 %v2056, 16
      %v2100 = vrot.slane %v2098, 5
      %v2101 = vor.u32 %v2097, %v2100
      %v2102 = vrot.slane %v2101, 4
      %v2104 = vshll.u32 %v2057, 16
      %v2106 = vrot.slane %v2104, 5
      %v2107 = vsel %vm2093, %v2102, %v2106
      %v2108 = vshrl.u32 %v2057, 16
      %v2110 = vrot.slane %v2108, 4
      %v2111 = vor.u32 %v2110, %v2106
      %v2112 = vrot.slane %v2111, 4
      %v2114 = vshll.u32 %v2058, 16
      %v2116 = vrot.slane %v2114, 5
      %v2117 = vsel %vm2093, %v2112, %v2116
      %v2118 = vshrl.u32 %v2058, 16
      %v2120 = vrot.slane %v2118, 4
      %v2121 = vor.u32 %v2120, %v2116
      %v2122 = vrot.slane %v2121, 4
      %v2124 = vshll.u32 %v2059, 16
      %v2126 = vrot.slane %v2124, 5
      %v2127 = vsel %vm2093, %v2122, %v2126
      %v2128 = vshrl.u32 %v2059, 16
      %v2130 = vrot.slane %v2128, 4
      %v2131 = vor.u32 %v2130, %v2126
      %v2132 = vrot.slane %v2131, 4
      %v2134 = vshll.u32 %v2060, 16
      %v2136 = vrot.slane %v2134, 5
      %v2137 = vsel %vm2093, %v2132, %v2136
      %v2138 = vshrl.u32 %v2060, 16
      %v2140 = vrot.slane %v2138, 4
      %v2141 = vor.u32 %v2140, %v2136
      %v2142 = vrot.slane %v2141, 4
      %v2144 = vshll.u32 %v2061, 16
      %v2146 = vrot.slane %v2144, 5
      %v2147 = vsel %vm2093, %v2142, %v2146
      %v2148 = vshrl.u32 %v2061, 16
      %v2150 = vrot.slane %v2148, 4
      %v2151 = vor.u32 %v2150, %v2146
      %v2152 = vrot.slane %v2151, 4
      %v2154 = vshll.u32 %v2062, 16
      %v2156 = vrot.slane %v2154, 5
      %v2157 = vsel %vm2093, %v2152, %v2156
      %v2158 = vshrl.u32 %v2062, 16
      %v2160 = vrot.slane %v2158, 4
      %v2161 = vor.u32 %v2160, %v2156
      %v2162 = vrot.slane %v2161, 4
      %v2164 = vshll.u32 %v2063, 16
      %v2166 = vrot.slane %v2164, 5
      %v2167 = vsel %vm2093, %v2162, %v2166
      %v2168 = vshrl.u32 %v2063, 16
      %v2170 = vrot.slane %v2168, 4
      %v2171 = vor.u32 %v2170, %v2166
      %v2172 = vrot.slane %v2171, 4
      %v2174 = vshll.u32 %v2064, 16
      %v2176 = vrot.slane %v2174, 5
      %v2177 = vsel %vm2093, %v2172, %v2176
      %v2178 = vshrl.u32 %v2064, 16
      %v2180 = vrot.slane %v2178, 4
      %v2181 = vor.u32 %v2180, %v2176
      %v2182 = vrot.slane %v2181, 4
      %v2184 = vshll.u32 %v2065, 16
      %v2186 = vrot.slane %v2184, 5
      %v2187 = vsel %vm2093, %v2182, %v2186
      %v2188 = vshrl.u32 %v2065, 16
      %v2190 = vrot.slane %v2188, 4
      %v2191 = vor.u32 %v2190, %v2186
      %v2192 = vrot.slane %v2191, 4
      %v2194 = vshll.u32 %v2066, 16
      %v2196 = vrot.slane %v2194, 5
      %v2197 = vsel %vm2093, %v2192, %v2196
      %v2198 = vshrl.u32 %v2066, 16
      %v2200 = vrot.slane %v2198, 4
      %v2201 = vor.u32 %v2200, %v2196
      %v2202 = vrot.slane %v2201, 4
      %v2204 = vshll.u32 %v2067, 16
      %v2206 = vrot.slane %v2204, 5
      %v2207 = vsel %vm2093, %v2202, %v2206
      %v2208 = vshrl.u32 %v2067, 16
      %v2210 = vrot.slane %v2208, 4
      %v2211 = vor.u32 %v2210, %v2206
      %v2212 = vrot.slane %v2211, 4
      %v2214 = vshll.u32 %v2068, 16
      %v2216 = vrot.slane %v2214, 5
      %v2217 = vsel %vm2093, %v2212, %v2216
      %v2218 = vshrl.u32 %v2068, 16
      %v2220 = vrot.slane %v2218, 4
      %v2221 = vor.u32 %v2220, %v2216
      %v2222 = vrot.slane %v2221, 4
      %v2224 = vshll.u32 %v2069, 16
      %v2226 = vrot.slane %v2224, 5
      %v2227 = vsel %vm2093, %v2222, %v2226
      %v2228 = vshrl.u32 %v2069, 16
      %v2230 = vrot.slane %v2228, 4
      %v2231 = vor.u32 %v2230, %v2226
      %v2232 = vrot.slane %v2231, 4
      %v2234 = vshll.u32 %v2070, 16
      %v2236 = vrot.slane %v2234, 5
      %v2237 = vsel %vm2093, %v2232, %v2236
      %v2238 = vshrl.u32 %v2070, 16
      %v2240 = vrot.slane %v2238, 4
      %v2241 = vor.u32 %v2240, %v2236
      %v2242 = vrot.slane %v2241, 4
      %v2244 = vshll.u32 %v2071, 16
      %v2246 = vrot.slane %v2244, 5
      %v2247 = vsel %vm2093, %v2242, %v2246
      %v2248 = vshrl.u32 %v2071, 16
      %v2250 = vrot.slane %v2248, 4
      %v2251 = vor.u32 %v2250, %v2246
      %v2252 = vrot.slane %v2251, 4
      %v2254 = vshll.u32 %v2072, 16
      %v2256 = vrot.slane %v2254, 5
      %v2257 = vsel %vm2093, %v2252, %v2256
      %v2258 = vshrl.u32 %v2072, 16
      %v2260 = vrot.slane %v2258, 4
      %v2261 = vor.u32 %v2260, %v2256
      %v2262 = vrot.slane %v2261, 4
      %v2264 = vshll.u32 %v2073, 16
      %v2266 = vrot.slane %v2264, 5
      %v2267 = vsel %vm2093, %v2262, %v2266
      %v2268 = vshrl.u32 %v2073, 16
      %v2270 = vrot.slane %v2268, 4
      %v2271 = vor.u32 %v2270, %v2266
      %v2272 = vrot.slane %v2271, 4
      %v2274 = vshll.u32 %v2074, 16
      %v2276 = vrot.slane %v2274, 5
      %v2277 = vsel %vm2093, %v2272, %v2276
      %v2278 = vshrl.u32 %v2074, 16
      %v2280 = vrot.slane %v2278, 4
      %v2281 = vor.u32 %v2280, %v2276
      %v2282 = vrot.slane %v2281, 4
      %v2284 = vshll.u32 %v2075, 16
      %v2286 = vrot.slane %v2284, 5
      %v2287 = vsel %vm2093, %v2282, %v2286
      %v2288 = vshrl.u32 %v2075, 16
      %v2290 = vrot.slane %v2288, 4
      %v2291 = vor.u32 %v2290, %v2286
      %v2292 = vrot.slane %v2291, 4
      %v2294 = vshll.u32 %v2076, 16
      %v2296 = vrot.slane %v2294, 5
      %v2297 = vsel %vm2093, %v2292, %v2296
      %v2298 = vshrl.u32 %v2076, 16
      %v2300 = vrot.slane %v2298, 4
      %v2301 = vor.u32 %v2300, %v2296
      %v2302 = vrot.slane %v2301, 4
      %v2304 = vshll.u32 %v2077, 16
      %v2306 = vrot.slane %v2304, 5
      %v2307 = vsel %vm2093, %v2302, %v2306
      %v2308 = vshrl.u32 %v2077, 16
      %v2310 = vrot.slane %v2308, 4
      %v2311 = vor.u32 %v2310, %v2306
      %v2312 = vrot.slane %v2311, 4
      %v2314 = vshll.u32 %v2078, 16
      %v2316 = vrot.slane %v2314, 5
      %v2317 = vsel %vm2093, %v2312, %v2316
      %v2318 = vshrl.u32 %v2078, 16
      %v2320 = vrot.slane %v2318, 4
      %v2321 = vor.u32 %v2320, %v2316
      %v2322 = vrot.slane %v2321, 4
      %v2324 = vshll.u32 %v2079, 16
      %v2326 = vrot.slane %v2324, 5
      %v2327 = vsel %vm2093, %v2322, %v2326
      %v2328 = vshrl.u32 %v2079, 16
      %v2330 = vrot.slane %v2328, 4
      %v2331 = vor.u32 %v2330, %v2326
      %v2332 = vrot.slane %v2331, 4
      %v2334 = vshll.u32 %v2080, 16
      %v2336 = vrot.slane %v2334, 5
      %v2337 = vsel %vm2093, %v2332, %v2336
      %v2338 = vshrl.u32 %v2080, 16
      %v2340 = vrot.slane %v2338, 4
      %v2341 = vor.u32 %v2340, %v2336
      %v2342 = vrot.slane %v2341, 4
      %v2344 = vshll.u32 %v2081, 16
      %v2346 = vrot.slane %v2344, 5
      %v2347 = vsel %vm2093, %v2342, %v2346
      %v2348 = vshrl.u32 %v2081, 16
      %v2350 = vrot.slane %v2348, 4
      %v2351 = vor.u32 %v2350, %v2346
      %v2352 = vrot.slane %v2351, 4
      %v2354 = vshll.u32 %v2082, 16
      %v2356 = vrot.slane %v2354, 5
      %v2357 = vsel %vm2093, %v2352, %v2356
      %v2358 = vshrl.u32 %v2082, 16
      %v2360 = vrot.slane %v2358, 4
      %v2361 = vor.u32 %v2360, %v2356
      %v2362 = vrot.slane %v2361, 4
      %v2364 = vshll.u32 %v2083, 16
      %v2366 = vrot.slane %v2364, 5
      %v2367 = vsel %vm2093, %v2362, %v2366
      %v2368 = vshrl.u32 %v2083, 16
      %v2370 = vrot.slane %v2368, 4
      %v2371 = vor.u32 %v2370, %v2366
      %v2372 = vrot.slane %v2371, 4
      %v2374 = vshll.u32 %v2084, 16
      %v2376 = vrot.slane %v2374, 5
      %v2377 = vsel %vm2093, %v2372, %v2376
      %v2378 = vshrl.u32 %v2084, 16
      %v2380 = vrot.slane %v2378, 4
      %v2381 = vor.u32 %v2380, %v2376
      %v2382 = vrot.slane %v2381, 4
      %v2384 = vshll.u32 %v2085, 16
      %v2386 = vrot.slane %v2384, 5
      %v2387 = vsel %vm2093, %v2382, %v2386
      %v2388 = vshrl.u32 %v2085, 16
      %v2390 = vrot.slane %v2388, 4
      %v2391 = vor.u32 %v2390, %v2386
      %v2392 = vrot.slane %v2391, 4
      %v2394 = vshll.u32 %v2086, 16
      %v2396 = vrot.slane %v2394, 5
      %v2397 = vsel %vm2093, %v2392, %v2396
      %v2398 = vshrl.u32 %v2086, 16
      %v2400 = vrot.slane %v2398, 4
      %v2401 = vor.u32 %v2400, %v2396
      %v2402 = vrot.slane %v2401, 4
      %v2404 = vshll.u32 %v2087, 16
      %v2406 = vrot.slane %v2404, 5
      %v2407 = vsel %vm2093, %v2402, %v2406
      %v2408 = vshrl.u32 %v2087, 16
      %v2410 = vrot.slane %v2408, 4
      %v2411 = vor.u32 %v2410, %v2406
      %v2412 = vrot.slane %v2411, 4
      %v2414 = vshll.u32 %v2088, 16
      %v2416 = vrot.slane %v2414, 5
      %v2417 = vsel %vm2093, %v2412, %v2416
      %v2418 = vshrl.u32 %v2088, 16
      %v2420 = vrot.slane %v2418, 4
      %v2421 = vor.u32 %v2420, %v2416
      %v2422 = vrot.slane %v2421, 4
      %v2424 = vshll.u32 %v2089, 16
      %v2426 = vrot.slane %v2424, 5
      %v2427 = vsel %vm2093, %v2422, %v2426
      %v2428 = vshrl.u32 %v2089, 16
      %v2430 = vrot.slane %v2428, 4
      %v2431 = vor.u32 %v2430, %v2426
      %v2432 = vrot.slane %v2431, 4
      %v2434 = vshll.u32 %v2090, 16
      %v2436 = vrot.slane %v2434, 5
      %v2437 = vsel %vm2093, %v2432, %v2436
      %v2472 = vmax.bf16 %v2056, %v2107
      %v2473 = vmax.bf16 %v2057, %v2117
      %v2474 = vmax.bf16 %v2058, %v2127
      %v2475 = vmax.bf16 %v2059, %v2137
      %v2476 = vmax.bf16 %v2060, %v2147
      %v2477 = vmax.bf16 %v2061, %v2157
      %v2478 = vmax.bf16 %v2062, %v2167
      %v2479 = vmax.bf16 %v2063, %v2177
      %v2480 = vmax.bf16 %v2064, %v2187
      %v2481 = vmax.bf16 %v2065, %v2197
      %v2482 = vmax.bf16 %v2066, %v2207
      %v2483 = vmax.bf16 %v2067, %v2217
      %v2484 = vmax.bf16 %v2068, %v2227
      %v2485 = vmax.bf16 %v2069, %v2237
      %v2486 = vmax.bf16 %v2070, %v2247
      %v2487 = vmax.bf16 %v2071, %v2257
      %v2488 = vmax.bf16 %v2072, %v2267
      %v2489 = vmax.bf16 %v2073, %v2277
      %v2490 = vmax.bf16 %v2074, %v2287
      %v2491 = vmax.bf16 %v2075, %v2297
      %v2492 = vmax.bf16 %v2076, %v2307
      %v2493 = vmax.bf16 %v2077, %v2317
      %v2494 = vmax.bf16 %v2078, %v2327
      %v2495 = vmax.bf16 %v2079, %v2337
      %v2496 = vmax.bf16 %v2080, %v2347
      %v2497 = vmax.bf16 %v2081, %v2357
      %v2498 = vmax.bf16 %v2082, %v2367
      %v2499 = vmax.bf16 %v2083, %v2377
      %v2500 = vmax.bf16 %v2084, %v2387
      %v2501 = vmax.bf16 %v2085, %v2397
      %v2502 = vmax.bf16 %v2086, %v2407
      %v2503 = vmax.bf16 %v2087, %v2417
      %v2504 = vmax.bf16 %v2088, %v2427
      %v2505 = vmax.bf16 %v2089, %v2437
      %v2506 = vld [vmem:[#allocation2 + $0x8] sm:$0xe]
      %v2507 = vld [vmem:[#allocation2 + $0x88] sm:$0xf]
      %v2508 = vld [vmem:[#allocation2 + $0x8c] sm:$0xf]
      %v2509 = vld [vmem:[#allocation2 + $0x90] sm:$0x1]
      %v2510 = vld [vmem:[#allocation2 + $0x90] sm:$0x3]
      %v2512 = vshrl.u32 %v2506, 16
      %v2514 = vrot.slane %v2512, 4
      %v2515 = vshll.u32 %v2506, 16
      %v2517 = vrot.slane %v2515, 5
      %v2518 = vor.u32 %v2514, %v2517
      %v2519 = vrot.slane %v2518, 4
      %v2520 = vsel %vm2093, %v2519, %v2126
      %v2522 = vshll.u32 %v2507, 16
      %v2524 = vrot.slane %v2522, 5
      %v2525 = vsel %vm2093, %v2432, %v2524
      %v2526 = vshrl.u32 %v2507, 16
      %v2528 = vrot.slane %v2526, 4
      %v2529 = vor.u32 %v2528, %v2524
      %v2530 = vrot.slane %v2529, 4
      %v2532 = vshll.u32 %v2508, 16
      %v2534 = vrot.slane %v2532, 5
      %v2535 = vsel %vm2093, %v2530, %v2534
      %v2536 = vshrl.u32 %v2508, 16
      %v2538 = vrot.slane %v2536, 4
      %v2539 = vor.u32 %v2538, %v2534
      %v2540 = vrot.slane %v2539, 4
      %v2542 = vshll.u32 %v2510, 16
      %v2544 = vrot.slane %v2542, 5
      %v2545 = vsel %vm2093, %v2540, %v2544
      %v2546 = vshrl.u32 %v2510, 16
      %v2548 = vrot.slane %v2546, 4
      %v2549 = vor.u32 %v2548, %v2544
      %v2550 = vrot.slane %v2549, 4
      %v2556 = vmax.bf16 %v2506, %v2520
      %v2557 = vmax.bf16 %v2089, %v2525
      %v2558 = vmax.bf16 %v2507, %v2535
      %v2559 = vmax.bf16 %v2508, %v2545
      %v2560 = vmax.bf16 %v2509, %v2550
      %vm2596 = vcmask 1042432
      %vm2597 = vcmask 1046532
      %vm2598 = vmor %vm2596, %vm2597
      %v2599 = vrot.slane %v2556, 5
      %v2600 = vrot.slane %v2599, 4
      %v2601 = vrot.slane %v2475, 5
      %v2602 = vsel %vm2598, %v2600, %v2601
      %v2603 = vrot.slane %v2601, 4
      %v2604 = vrot.slane %v2476, 5
      %v2605 = vsel %vm2598, %v2603, %v2604
      %v2606 = vrot.slane %v2604, 4
      %v2607 = vrot.slane %v2477, 5
      %v2608 = vsel %vm2598, %v2606, %v2607
      %v2609 = vrot.slane %v2607, 4
      %v2610 = vrot.slane %v2478, 5
      %v2611 = vsel %vm2598, %v2609, %v2610
      %v2612 = vrot.slane %v2610, 4
      %v2613 = vrot.slane %v2479, 5
      %v2614 = vsel %vm2598, %v2612, %v2613
      %v2615 = vrot.slane %v2613, 4
      %v2616 = vrot.slane %v2480, 5
      %v2617 = vsel %vm2598, %v2615, %v2616
      %v2618 = vrot.slane %v2616, 4
      %v2619 = vrot.slane %v2481, 5
      %v2620 = vsel %vm2598, %v2618, %v2619
      %v2621 = vrot.slane %v2619, 4
      %v2622 = vrot.slane %v2482, 5
      %v2623 = vsel %vm2598, %v2621, %v2622
      %v2624 = vrot.slane %v2622, 4
      %v2625 = vrot.slane %v2483, 5
      %v2626 = vsel %vm2598, %v2624, %v2625
      %v2627 = vrot.slane %v2625, 4
      %v2628 = vrot.slane %v2484, 5
      %v2629 = vsel %vm2598, %v2627, %v2628
      %v2630 = vrot.slane %v2628, 4
      %v2631 = vrot.slane %v2485, 5
      %v2632 = vsel %vm2598, %v2630, %v2631
      %v2633 = vrot.slane %v2631, 4
      %v2634 = vrot.slane %v2486, 5
      %v2635 = vsel %vm2598, %v2633, %v2634
      %v2636 = vrot.slane %v2634, 4
      %v2637 = vrot.slane %v2487, 5
      %v2638 = vsel %vm2598, %v2636, %v2637
      %v2639 = vrot.slane %v2637, 4
      %v2640 = vrot.slane %v2488, 5
      %v2641 = vsel %vm2598, %v2639, %v2640
      %v2642 = vrot.slane %v2640, 4
      %v2643 = vrot.slane %v2489, 5
      %v2644 = vsel %vm2598, %v2642, %v2643
      %v2645 = vrot.slane %v2643, 4
      %v2646 = vrot.slane %v2490, 5
      %v2647 = vsel %vm2598, %v2645, %v2646
      %v2648 = vrot.slane %v2646, 4
      %v2649 = vrot.slane %v2491, 5
      %v2650 = vsel %vm2598, %v2648, %v2649
      %v2651 = vrot.slane %v2649, 4
      %v2652 = vrot.slane %v2492, 5
      %v2653 = vsel %vm2598, %v2651, %v2652
      %v2654 = vrot.slane %v2652, 4
      %v2655 = vrot.slane %v2493, 5
      %v2656 = vsel %vm2598, %v2654, %v2655
      %v2657 = vrot.slane %v2655, 4
      %v2658 = vrot.slane %v2494, 5
      %v2659 = vsel %vm2598, %v2657, %v2658
      %v2660 = vrot.slane %v2658, 4
      %v2661 = vrot.slane %v2495, 5
      %v2662 = vsel %vm2598, %v2660, %v2661
      %v2663 = vrot.slane %v2661, 4
      %v2664 = vrot.slane %v2496, 5
      %v2665 = vsel %vm2598, %v2663, %v2664
      %v2666 = vrot.slane %v2664, 4
      %v2667 = vrot.slane %v2497, 5
      %v2668 = vsel %vm2598, %v2666, %v2667
      %v2669 = vrot.slane %v2667, 4
      %v2670 = vrot.slane %v2498, 5
      %v2671 = vsel %vm2598, %v2669, %v2670
      %v2672 = vrot.slane %v2670, 4
      %v2673 = vrot.slane %v2499, 5
      %v2674 = vsel %vm2598, %v2672, %v2673
      %v2675 = vrot.slane %v2673, 4
      %v2676 = vrot.slane %v2500, 5
      %v2677 = vsel %vm2598, %v2675, %v2676
      %v2678 = vrot.slane %v2676, 4
      %v2679 = vrot.slane %v2501, 5
      %v2680 = vsel %vm2598, %v2678, %v2679
      %v2681 = vrot.slane %v2679, 4
      %v2682 = vrot.slane %v2502, 5
      %v2683 = vsel %vm2598, %v2681, %v2682
      %v2684 = vrot.slane %v2682, 4
      %v2685 = vrot.slane %v2503, 5
      %v2686 = vsel %vm2598, %v2684, %v2685
      %v2687 = vrot.slane %v2685, 4
      %v2688 = vrot.slane %v2504, 5
      %v2689 = vsel %vm2598, %v2687, %v2688
      %v2690 = vrot.slane %v2688, 4
      %v2691 = vrot.slane %v2557, 5
      %v2692 = vsel %vm2598, %v2690, %v2691
      %v2693 = vrot.slane %v2691, 4
      %v2694 = vrot.slane %v2558, 5
      %v2695 = vsel %vm2598, %v2693, %v2694
      %v2696 = vrot.slane %v2694, 4
      %v2697 = vrot.slane %v2559, 5
      %v2698 = vsel %vm2598, %v2696, %v2697
      %v2699 = vrot.slane %v2697, 4
      %v2700 = vrot.slane %v2560, 5
      %v2701 = vsel %vm2598, %v2699, %v2700
      %v2736 = vmax.bf16 %v2472, %v2602
      %v2737 = vmax.bf16 %v2473, %v2605
      %v2738 = vmax.bf16 %v2474, %v2608
      %v2739 = vmax.bf16 %v2475, %v2611
      %v2740 = vmax.bf16 %v2476, %v2614
      %v2741 = vmax.bf16 %v2477, %v2617
      %v2742 = vmax.bf16 %v2478, %v2620
      %v2743 = vmax.bf16 %v2479, %v2623
      %v2744 = vmax.bf16 %v2480, %v2626
      %v2745 = vmax.bf16 %v2481, %v2629
      %v2746 = vmax.bf16 %v2482, %v2632
      %v2747 = vmax.bf16 %v2483, %v2635
      %v2748 = vmax.bf16 %v2484, %v2638
      %v2749 = vmax.bf16 %v2485, %v2641
      %v2750 = vmax.bf16 %v2486, %v2644
      %v2751 = vmax.bf16 %v2487, %v2647
      %v2752 = vmax.bf16 %v2488, %v2650
      %v2753 = vmax.bf16 %v2489, %v2653
      %v2754 = vmax.bf16 %v2490, %v2656
      %v2755 = vmax.bf16 %v2491, %v2659
      %v2756 = vmax.bf16 %v2492, %v2662
      %v2757 = vmax.bf16 %v2493, %v2665
      %v2758 = vmax.bf16 %v2494, %v2668
      %v2759 = vmax.bf16 %v2495, %v2671
      %v2760 = vmax.bf16 %v2496, %v2674
      %v2761 = vmax.bf16 %v2497, %v2677
      %v2762 = vmax.bf16 %v2498, %v2680
      %v2763 = vmax.bf16 %v2499, %v2683
      %v2764 = vmax.bf16 %v2500, %v2686
      %v2765 = vmax.bf16 %v2501, %v2689
      %v2766 = vmax.bf16 %v2502, %v2692
      %v2767 = vmax.bf16 %v2503, %v2695
      %v2768 = vmax.bf16 %v2504, %v2698
      %v2769 = vmax.bf16 %v2505, %v2701
      %v2796 = vunpack.c.l.b16 %v2030
      %v2797 = vunpack.c.h.b16 %v2030
      %v2798 = vunpack.c.l.b16 %v2031
      %v2799 = vunpack.c.l.b16 %v2032
      %v2800 = vunpack.c.h.b16 %v2032
      %v2801 = vunpack.c.l.b16 %v2033
      %v2802 = vunpack.c.l.b16 %v2034
      %v2803 = vunpack.c.h.b16 %v2034
      %v2804 = vunpack.c.l.b16 %v2035
      %v2805 = vunpack.c.l.b16 %v2036
      %v2806 = vunpack.c.h.b16 %v2036
      %v2807 = vunpack.c.l.b16 %v2037
      %v2808 = vunpack.c.l.b16 %v2038
      %v2809 = vunpack.c.h.b16 %v2038
      %v2810 = vunpack.c.l.b16 %v2039
      %v2811 = vunpack.c.l.b16 %v2040
      %v2812 = vunpack.c.h.b16 %v2040
      %v2813 = vunpack.c.l.b16 %v2041
      %v2814 = vunpack.c.l.b16 %v2042
      %v2815 = vunpack.c.h.b16 %v2042
      %v2816 = vunpack.c.l.b16 %v2043
      %v2817 = vunpack.c.l.b16 %v2044
      %v2818 = vunpack.c.h.b16 %v2044
      %v2819 = vunpack.c.l.b16 %v2045
      %v2820 = vunpack.c.l.b16 %v2046
      %v2821 = vunpack.c.h.b16 %v2046
      %v2822 = vunpack.c.l.b16 %v2047
      %v2823 = vunpack.c.l.b16 %v2048
      %v2824 = vunpack.c.h.b16 %v2048
      %v2825 = vunpack.c.l.b16 %v2049
      %v2826 = vunpack.c.l.b16 %v2050
      %v2827 = vunpack.c.h.b16 %v2050
      %v2828 = vunpack.c.l.b16 %v2051
      %v2829 = vunpack.c.l.b16 %v2052
      %v2830 = vunpack.c.h.b16 %v2052
      %v2831 = vunpack.c.l.b16 %v2053
      %v2832 = vunpack.c.l.b16 %v2054
      %v2833 = vunpack.c.h.b16 %v2054
      %v2834 = vunpack.c.l.b16 %v2055
      %v2835 = vpack.c.b16 %v2799, %v2796
      %v2836 = vpack.c.b16 %v2800, %v2797
      %v2837 = vpack.c.b16 %v2801, %v2798
      %v2838 = vpack.c.b16 %v2805, %v2802
      %v2839 = vpack.c.b16 %v2806, %v2803
      %v2840 = vpack.c.b16 %v2807, %v2804
      %v2841 = vpack.c.b16 %v2811, %v2808
      %v2842 = vpack.c.b16 %v2812, %v2809
      %v2843 = vpack.c.b16 %v2813, %v2810
      %v2844 = vpack.c.b16 %v2817, %v2814
      %v2845 = vpack.c.b16 %v2818, %v2815
      %v2846 = vpack.c.b16 %v2819, %v2816
      %v2847 = vpack.c.b16 %v2823, %v2820
      %v2848 = vpack.c.b16 %v2824, %v2821
      %v2849 = vpack.c.b16 %v2825, %v2822
      %v2850 = vpack.c.b16 %v2829, %v2826
      %v2851 = vpack.c.b16 %v2830, %v2827
      %v2852 = vpack.c.b16 %v2831, %v2828
      %v2853 = vpack.c.b16 %v2832, %v2832
      %v2854 = vpack.c.b16 %v2833, %v2833
      %v2855 = vpack.c.b16 %v2834, %v2834
      %v2904 = vunpack.c.l.b16 %v2736
      %v2905 = vunpack.c.l.b16 %v2737
      %v2906 = vunpack.c.l.b16 %v2738
      %v2907 = vunpack.c.l.b16 %v2739
      %v2908 = vunpack.c.l.b16 %v2740
      %v2909 = vunpack.c.l.b16 %v2741
      %v2910 = vunpack.c.l.b16 %v2742
      %v2911 = vunpack.c.l.b16 %v2743
      %v2912 = vunpack.c.l.b16 %v2744
      %v2913 = vunpack.c.l.b16 %v2745
      %v2914 = vunpack.c.l.b16 %v2746
      %v2915 = vunpack.c.l.b16 %v2747
      %v2916 = vunpack.c.l.b16 %v2748
      %v2917 = vunpack.c.l.b16 %v2749
      %v2918 = vunpack.c.l.b16 %v2750
      %v2919 = vunpack.c.l.b16 %v2751
      %v2920 = vunpack.c.l.b16 %v2752
      %v2921 = vunpack.c.l.b16 %v2753
      %v2922 = vunpack.c.l.b16 %v2754
      %v2923 = vunpack.c.l.b16 %v2755
      %v2924 = vunpack.c.l.b16 %v2756
      %v2925 = vunpack.c.l.b16 %v2757
      %v2926 = vunpack.c.l.b16 %v2758
      %v2927 = vunpack.c.l.b16 %v2759
      %v2928 = vunpack.c.l.b16 %v2760
      %v2929 = vunpack.c.l.b16 %v2761
      %v2930 = vunpack.c.l.b16 %v2762
      %v2931 = vunpack.c.l.b16 %v2763
      %v2932 = vunpack.c.l.b16 %v2764
      %v2933 = vunpack.c.l.b16 %v2765
      %v2934 = vunpack.c.l.b16 %v2766
      %v2935 = vunpack.c.l.b16 %v2767
      %v2936 = vunpack.c.l.b16 %v2768
      %v2937 = vunpack.c.l.b16 %v2769
      %v2938 = vpack.c.b16 %v2905, %v2904
      %v2939 = vpack.c.b16 %v2907, %v2906
      %v2940 = vpack.c.b16 %v2909, %v2908
      %v2941 = vpack.c.b16 %v2911, %v2910
      %v2942 = vpack.c.b16 %v2913, %v2912
      %v2943 = vpack.c.b16 %v2915, %v2914
      %v2944 = vpack.c.b16 %v2917, %v2916
      %v2945 = vpack.c.b16 %v2919, %v2918
      %v2946 = vpack.c.b16 %v2921, %v2920
      %v2947 = vpack.c.b16 %v2923, %v2922
      %v2948 = vpack.c.b16 %v2925, %v2924
      %v2949 = vpack.c.b16 %v2927, %v2926
      %v2950 = vpack.c.b16 %v2929, %v2928
      %v2951 = vpack.c.b16 %v2931, %v2930
      %v2952 = vpack.c.b16 %v2933, %v2932
      %v2953 = vpack.c.b16 %v2935, %v2934
      %v2954 = vpack.c.b16 %v2937, %v2936
      %vm2972 = vcmask 130048
      %v2974 = vsel %vm2972, %v2837, 0
      %v2977 = vsel %vm2972, %v2840, 0
      %v2980 = vsel %vm2972, %v2843, 0
      %v2983 = vsel %vm2972, %v2846, 0
      %v2986 = vsel %vm2972, %v2849, 0
      %v2989 = vsel %vm2972, %v2852, 0
      %v2992 = vsel %vm2972, %v2855, 0
      %2994 = vmatprep.subr.bf16.mxu0 0
      %2995 = vmatpush1.bf16.msra.mxu0 %v2945
      %2996 = vmatprep.subr.bf16.mxu0 0
      %2997 = vmatpush1.bf16.msra.mxu0 %v2944
      %2998 = vmatprep.subr.bf16.mxu0 0
      %2999 = vmatpush1.bf16.msra.mxu0 %v2943
      %3000 = vmatprep.subr.bf16.mxu0 0
      %3001 = vmatpush1.bf16.msra.mxu0 %v2942
      %3002 = vmatprep.subr.bf16.mxu0 0
      %3003 = vmatpush1.bf16.msra.mxu0 %v2941
      %3004 = vmatprep.subr.bf16.mxu0 0
      %3005 = vmatpush1.bf16.msra.mxu0 %v2940
      %3006 = vmatprep.subr.bf16.mxu0 0
      %3007 = vmatpush1.bf16.msra.mxu0 %v2939
      %3008 = vmatprep.subr.bf16.mxu0 0
      %3009 = vmatpush1.bf16.msra.mxu0 %v2938
      %3010 = vmatprep.subr.bf16.mxu0 0
      %3011 = vmatpush2.bf16.msra.mxu0 %v2953
      %3012 = vmatprep.subr.bf16.mxu0 0
      %3013 = vmatpush2.bf16.msra.mxu0 %v2952
      %3014 = vmatprep.subr.bf16.mxu0 0
      %3015 = vmatpush2.bf16.msra.mxu0 %v2951
      %3016 = vmatprep.subr.bf16.mxu0 0
      %3017 = vmatpush2.bf16.msra.mxu0 %v2950
      %3018 = vmatprep.subr.bf16.mxu0 0
      %3019 = vmatpush2.bf16.msra.mxu0 %v2949
      %3020 = vmatprep.subr.bf16.mxu0 0
      %3021 = vmatpush2.bf16.msra.mxu0 %v2948
      %3022 = vmatprep.subr.bf16.mxu0 0
      %3023 = vmatpush2.bf16.msra.mxu0 %v2947
      %3024 = vmatprep.subr.bf16.mxu0 0
      %3025 = vmatpush2.bf16.msra.mxu0 %v2946
      %3026 = vmatprep.mubr.bf16.mxu0 %v2836
      %3027 = vmatmul.mubr.bf16.gmra.mxu0 %v2835
      %v3028 = vpop.f32.mrf.mxu0
      %v3029 = vadd.f32 0.0, %v3028
      %v3030 = vpop.f32.mrf.mxu0
      %v3031 = vpop.f32.mrf.mxu0
      %v3032 = vadd.f32 0.0, %v3031
      %v3033 = vpop.f32.mrf.mxu0
      %3034 = vmatprep.mubr.bf16.mxu0 %v2839
      %3035 = vmatmul.mubr.bf16.gmra.mxu0 %v2838
      %v3036 = vpop.f32.mrf.mxu0
      %v3037 = vadd.f32 0.0, %v3036
      %v3038 = vpop.f32.mrf.mxu0
      %v3039 = vpop.f32.mrf.mxu0
      %v3040 = vadd.f32 0.0, %v3039
      %v3041 = vpop.f32.mrf.mxu0
      %3042 = vmatprep.mubr.bf16.mxu0 %v2842
      %3043 = vmatmul.mubr.bf16.gmra.mxu0 %v2841
      %v3044 = vpop.f32.mrf.mxu0
      %v3045 = vadd.f32 0.0, %v3044
      %v3046 = vpop.f32.mrf.mxu0
      %v3047 = vpop.f32.mrf.mxu0
      %v3048 = vadd.f32 0.0, %v3047
      %v3049 = vpop.f32.mrf.mxu0
      %3050 = vmatprep.mubr.bf16.mxu0 %v2845
      %3051 = vmatmul.mubr.bf16.gmra.mxu0 %v2844
      %v3052 = vpop.f32.mrf.mxu0
      %v3053 = vadd.f32 0.0, %v3052
      %v3054 = vpop.f32.mrf.mxu0
      %v3055 = vpop.f32.mrf.mxu0
      %v3056 = vadd.f32 0.0, %v3055
      %v3057 = vpop.f32.mrf.mxu0
      %3058 = vmatprep.mubr.bf16.mxu0 %v2848
      %3059 = vmatmul.mubr.bf16.gmra.mxu0 %v2847
      %v3060 = vpop.f32.mrf.mxu0
      %v3061 = vadd.f32 0.0, %v3060
      %v3062 = vpop.f32.mrf.mxu0
      %v3063 = vpop.f32.mrf.mxu0
      %v3064 = vadd.f32 0.0, %v3063
      %v3065 = vpop.f32.mrf.mxu0
      %3066 = vmatprep.mubr.bf16.mxu0 %v2851
      %3067 = vmatmul.mubr.bf16.gmra.mxu0 %v2850
      %v3068 = vpop.f32.mrf.mxu0
      %v3069 = vadd.f32 0.0, %v3068
      %v3070 = vpop.f32.mrf.mxu0
      %v3071 = vpop.f32.mrf.mxu0
      %v3072 = vadd.f32 0.0, %v3071
      %v3073 = vpop.f32.mrf.mxu0
      %3074 = vmatprep.mubr.bf16.mxu0 %v2854
      %3075 = vmatmul.mubr.bf16.gmra.mxu0 %v2853
      %v3076 = vpop.f32.mrf.mxu0
      %v3077 = vadd.f32 0.0, %v3076
      %v3078 = vpop.f32.mrf.mxu0
      %v3079 = vpop.f32.mrf.mxu0
      %v3080 = vpop.f32.mrf.mxu0
      %3081 = vdwg.mxu0
      %3082 = vmatprep.subr.bf16.mxu0 0
      %3083 = vmatpush1.bf16.msra.mxu0 0
      %3084 = vmatprep.subr.bf16.mxu0 0
      %3085 = vmatpush1.bf16.msra.mxu0 0
      %3086 = vmatprep.subr.bf16.mxu0 0
      %3087 = vmatpush1.bf16.msra.mxu0 0
      %3088 = vmatprep.subr.bf16.mxu0 0
      %3089 = vmatpush1.bf16.msra.mxu0 0
      %3090 = vmatprep.subr.bf16.mxu0 0
      %3091 = vmatpush1.bf16.msra.mxu0 0
      %3092 = vmatprep.subr.bf16.mxu0 0
      %3093 = vmatpush1.bf16.msra.mxu0 0
      %3094 = vmatprep.subr.bf16.mxu0 0
      %3095 = vmatpush1.bf16.msra.mxu0 0
      %3096 = vmatprep.subr.bf16.mxu0 0
      %3097 = vmatpush1.bf16.msra.mxu0 %v2954
      %3098 = vmatprep.subr.bf16.mxu0 0
      %3099 = vmatpush2.bf16.msra.mxu0 0
      %3100 = vmatprep.subr.bf16.mxu0 0
      %3101 = vmatpush2.bf16.msra.mxu0 0
      %3102 = vmatprep.subr.bf16.mxu0 0
      %3103 = vmatpush2.bf16.msra.mxu0 0
      %3104 = vmatprep.subr.bf16.mxu0 0
      %3105 = vmatpush2.bf16.msra.mxu0 0
      %3106 = vmatprep.subr.bf16.mxu0 0
      %3107 = vmatpush2.bf16.msra.mxu0 0
      %3108 = vmatprep.subr.bf16.mxu0 0
      %3109 = vmatpush2.bf16.msra.mxu0 0
      %3110 = vmatprep.subr.bf16.mxu0 0
      %3111 = vmatpush2.bf16.msra.mxu0 0
      %3112 = vmatprep.subr.bf16.mxu0 0
      %3113 = vmatpush2.bf16.msra.mxu0 0
      %3114 = vmatprep.mubr.bf16.mxu0 0
      %3115 = vmatmul.mubr.bf16.gmra.mxu0 %v2974
      %v3116 = vpop.f32.mrf.mxu0
      %v3117 = vadd.f32 %v3029, %v3116
      %v3118 = vpop.f32.mrf.mxu0
      %v3119 = vpop.f32.mrf.mxu0
      %v3120 = vadd.f32 %v3032, %v3119
      %v3121 = vpop.f32.mrf.mxu0
      %3122 = vmatprep.mubr.bf16.mxu0 0
      %3123 = vmatmul.mubr.bf16.gmra.mxu0 %v2977
      %v3124 = vpop.f32.mrf.mxu0
      %v3125 = vadd.f32 %v3037, %v3124
      %v3126 = vpop.f32.mrf.mxu0
      %v3127 = vpop.f32.mrf.mxu0
      %v3128 = vadd.f32 %v3040, %v3127
      %v3129 = vpop.f32.mrf.mxu0
      %3130 = vmatprep.mubr.bf16.mxu0 0
      %3131 = vmatmul.mubr.bf16.gmra.mxu0 %v2980
      %v3132 = vpop.f32.mrf.mxu0
      %v3133 = vadd.f32 %v3045, %v3132
      %v3134 = vpop.f32.mrf.mxu0
      %v3135 = vpop.f32.mrf.mxu0
      %v3136 = vadd.f32 %v3048, %v3135
      %v3137 = vpop.f32.mrf.mxu0
      %3138 = vmatprep.mubr.bf16.mxu0 0
      %3139 = vmatmul.mubr.bf16.gmra.mxu0 %v2983
      %v3140 = vpop.f32.mrf.mxu0
      %v3141 = vadd.f32 %v3053, %v3140
      %v3142 = vpop.f32.mrf.mxu0
      %v3143 = vpop.f32.mrf.mxu0
      %v3144 = vadd.f32 %v3056, %v3143
      %v3145 = vpop.f32.mrf.mxu0
      %3146 = vmatprep.mubr.bf16.mxu0 0
      %3147 = vmatmul.mubr.bf16.gmra.mxu0 %v2986
      %v3148 = vpop.f32.mrf.mxu0
      %v3149 = vadd.f32 %v3061, %v3148
      %v3150 = vpop.f32.mrf.mxu0
      %v3151 = vpop.f32.mrf.mxu0
      %v3152 = vadd.f32 %v3064, %v3151
      %v3153 = vpop.f32.mrf.mxu0
      %3154 = vmatprep.mubr.bf16.mxu0 0
      %3155 = vmatmul.mubr.bf16.gmra.mxu0 %v2989
      %v3156 = vpop.f32.mrf.mxu0
      %v3157 = vadd.f32 %v3069, %v3156
      %v3158 = vpop.f32.mrf.mxu0
      %v3159 = vpop.f32.mrf.mxu0
      %v3160 = vadd.f32 %v3072, %v3159
      %v3161 = vpop.f32.mrf.mxu0
      %3162 = vmatprep.mubr.bf16.mxu0 0
      %3163 = vmatmul.mubr.bf16.gmra.mxu0 %v2992
      %v3164 = vpop.f32.mrf.mxu0
      %v3165 = vadd.f32 %v3077, %v3164
      %v3166 = vpop.f32.mrf.mxu0
      %v3167 = vpop.f32.mrf.mxu0
      %v3168 = vpop.f32.mrf.mxu0
      %3169 = vdwg.mxu0
      %v3170 = vpack.c.bf16 %v3120, %v3117
      %v3171 = vpack.c.bf16 %v3128, %v3125
      %v3172 = vpack.c.bf16 %v3136, %v3133
      %v3173 = vpack.c.bf16 %v3144, %v3141
      %v3174 = vpack.c.bf16 %v3152, %v3149
      %v3175 = vpack.c.bf16 %v3160, %v3157
      %v3176 = vpack.c.bf16 %v3165, %v3165
      %v3184 = vunpack.c.l.b16 %v3170
      %v3185 = vunpack.c.h.b16 %v3170
      %v3186 = vunpack.c.l.b16 %v3171
      %v3187 = vunpack.c.h.b16 %v3171
      %v3188 = vunpack.c.l.b16 %v3172
      %v3189 = vunpack.c.h.b16 %v3172
      %v3190 = vunpack.c.l.b16 %v3173
      %v3191 = vunpack.c.h.b16 %v3173
      %v3192 = vunpack.c.l.b16 %v3174
      %v3193 = vunpack.c.h.b16 %v3174
      %v3194 = vunpack.c.l.b16 %v3175
      %v3195 = vunpack.c.h.b16 %v3175
      %v3196 = vunpack.c.l.b16 %v3176
      %v3197 = vpack.c.b16 %v3184, %v3184
      %v3198 = vpack.c.b16 %v3185, %v3185
      %v3199 = vpack.c.b16 %v3186, %v3186
      %v3200 = vpack.c.b16 %v3187, %v3187
      %v3201 = vpack.c.b16 %v3188, %v3188
      %v3202 = vpack.c.b16 %v3189, %v3189
      %v3203 = vpack.c.b16 %v3190, %v3190
      %v3204 = vpack.c.b16 %v3191, %v3191
      %v3205 = vpack.c.b16 %v3192, %v3192
      %v3206 = vpack.c.b16 %v3193, %v3193
      %v3207 = vpack.c.b16 %v3194, %v3194
      %v3208 = vpack.c.b16 %v3195, %v3195
      %v3209 = vpack.c.b16 %v3196, %v3196
      %3223 = vst [vmem:[#allocation3] sm:$0xf] %v3197
      %3224 = vst [vmem:[#allocation3 + $0x4] sm:$0xf] %v3198
      %3225 = vst [vmem:[#allocation3 + $0x8] sm:$0xf] %v3199
      %3226 = vst [vmem:[#allocation3 + $0xc] sm:$0xf] %v3200
      %3227 = vst [vmem:[#allocation3 + $0x10] sm:$0xf] %v3201
      %3228 = vst [vmem:[#allocation3 + $0x14] sm:$0xf] %v3202
      %3229 = vst [vmem:[#allocation3 + $0x18] sm:$0xf] %v3203
      %3230 = vst [vmem:[#allocation3 + $0x1c] sm:$0xf] %v3204
      %3231 = vst [vmem:[#allocation3 + $0x20] sm:$0xf] %v3205
      %3232 = vst [vmem:[#allocation3 + $0x24] sm:$0xf] %v3206
      %3233 = vst [vmem:[#allocation3 + $0x28] sm:$0xf] %v3207
      %3234 = vst [vmem:[#allocation3 + $0x2c] sm:$0xf] %v3208
      %3235 = vst [vmem:[#allocation3 + $0x30] sm:$0x3] %v3209
      %v3236 = vld [vmem:[#allocation3] sm:$0xf]
      %v3237 = vld [vmem:[#allocation3 + $0x4] sm:$0xf]
      %v3238 = vld [vmem:[#allocation3 + $0x8] sm:$0xf]
      %v3239 = vld [vmem:[#allocation3 + $0xc] sm:$0xf]
      %v3240 = vld [vmem:[#allocation3 + $0x10] sm:$0xf]
      %v3241 = vld [vmem:[#allocation3 + $0x14] sm:$0xf]
      %v3242 = vld [vmem:[#allocation3 + $0x18] sm:$0xf]
      %v3243 = vld [vmem:[#allocation3 + $0x1c] sm:$0xf]
      %v3244 = vld [vmem:[#allocation3 + $0x20] sm:$0xf]
      %v3245 = vld [vmem:[#allocation3 + $0x24] sm:$0xf]
      %v3246 = vld [vmem:[#allocation3 + $0x28] sm:$0xf]
      %v3247 = vld [vmem:[#allocation3 + $0x2c] sm:$0xf]
      %v3248 = vld [vmem:[#allocation3 + $0x30] sm:$0x3]
      %v3249 = vld [vmem:[%s3] sm:$0xf]
      %v3250 = vld [vmem:[%s3 + $0x4] sm:$0xf]
      %v3251 = vld [vmem:[%s3 + $0x8] sm:$0xf]
      %v3252 = vld [vmem:[%s3 + $0xc] sm:$0xf]
      %v3253 = vld [vmem:[%s3 + $0x10] sm:$0xf]
      %v3254 = vld [vmem:[%s3 + $0x14] sm:$0xf]
      %v3255 = vld [vmem:[%s3 + $0x18] sm:$0xf]
      %v3256 = vld [vmem:[%s3 + $0x1c] sm:$0xf]
      %v3257 = vld [vmem:[%s3 + $0x20] sm:$0xf]
      %v3258 = vld [vmem:[%s3 + $0x24] sm:$0xf]
      %v3259 = vld [vmem:[%s3 + $0x28] sm:$0xf]
      %v3260 = vld [vmem:[%s3 + $0x2c] sm:$0xf]
      %v3261 = vld [vmem:[%s3 + $0x30] sm:$0xf]
      %v3262 = vld [vmem:[%s3 + $0x34] sm:$0xf]
      %v3263 = vld [vmem:[%s3 + $0x38] sm:$0xf]
      %v3264 = vld [vmem:[%s3 + $0x3c] sm:$0xf]
      %v3265 = vld [vmem:[#allocation3 + $0x30] sm:$0x7]
      %s3266 = scalar_lea.vmem %s3, 64
      %v3267 = vld [vmem:[%s3266] sm:$0xf]
      %v3268 = vld [vmem:[%s3266 + $0x4] sm:$0xf]
      %v3269 = vld [vmem:[%s3266 + $0x8] sm:$0xf]
      %v3270 = vld [vmem:[%s3266 + $0xc] sm:$0xf]
      %v3271 = vld [vmem:[%s3266 + $0x10] sm:$0xf]
      %v3272 = vld [vmem:[%s3266 + $0x14] sm:$0xf]
      %v3273 = vld [vmem:[%s3266 + $0x18] sm:$0xf]
      %v3274 = vld [vmem:[%s3266 + $0x1c] sm:$0xf]
      %v3275 = vld [vmem:[%s3266 + $0x20] sm:$0xf]
      %v3276 = vld [vmem:[%s3266 + $0x24] sm:$0xf]
      %v3277 = vld [vmem:[%s3266 + $0x28] sm:$0xf]
      %v3278 = vld [vmem:[%s3266 + $0x2c] sm:$0xf]
      %v3279 = vld [vmem:[%s3266 + $0x30] sm:$0xf]
      %v3280 = vld [vmem:[%s3266 + $0x34] sm:$0xf]
      %v3281 = vld [vmem:[%s3266 + $0x38] sm:$0xf]
      %v3282 = vld [vmem:[%s3266 + $0x3c] sm:$0xf]
      %v3296 = vunpack.c.l.b16 %v3236
      %v3297 = vunpack.c.l.b16 %v3237
      %v3298 = vunpack.c.l.b16 %v3238
      %v3299 = vunpack.c.l.b16 %v3239
      %v3300 = vunpack.c.l.b16 %v3240
      %v3301 = vunpack.c.l.b16 %v3241
      %v3302 = vunpack.c.l.b16 %v3242
      %v3303 = vunpack.c.l.b16 %v3243
      %v3304 = vunpack.c.l.b16 %v3244
      %v3305 = vunpack.c.l.b16 %v3245
      %v3306 = vunpack.c.l.b16 %v3246
      %v3307 = vunpack.c.l.b16 %v3247
      %v3308 = vunpack.c.l.b16 %v3265
      %v3309 = vpack.c.b16 %v3297, %v3296
      %v3310 = vpack.c.b16 %v3299, %v3298
      %v3311 = vpack.c.b16 %v3301, %v3300
      %v3312 = vpack.c.b16 %v3303, %v3302
      %v3313 = vpack.c.b16 %v3305, %v3304
      %v3314 = vpack.c.b16 %v3307, %v3306
      %v3315 = vpack.c.b16 %v3308, %v3308
      %vm3316 = vsmask.f32 7424
      %v3318 = vshrl.u32 %v3309, 16
      %v3320 = vshll.u32 %v3309, 16
      %v3322 = vrot.slane %v3320, 1
      %v3323 = vor.u32 %v3318, %v3322
      %v3325 = vshll.u32 %v3310, 16
      %v3327 = vrot.slane %v3325, 1
      %v3328 = vsel %vm3316, %v3323, %v3327
      %v3329 = vshrl.u32 %v3310, 16
      %v3331 = vor.u32 %v3329, %v3327
      %v3333 = vshll.u32 %v3311, 16
      %v3335 = vrot.slane %v3333, 1
      %v3336 = vsel %vm3316, %v3331, %v3335
      %v3337 = vshrl.u32 %v3311, 16
      %v3339 = vor.u32 %v3337, %v3335
      %v3341 = vshll.u32 %v3312, 16
      %v3343 = vrot.slane %v3341, 1
      %v3344 = vsel %vm3316, %v3339, %v3343
      %v3345 = vshrl.u32 %v3312, 16
      %v3347 = vor.u32 %v3345, %v3343
      %v3349 = vshll.u32 %v3313, 16
      %v3351 = vrot.slane %v3349, 1
      %v3352 = vsel %vm3316, %v3347, %v3351
      %v3353 = vshrl.u32 %v3313, 16
      %v3355 = vor.u32 %v3353, %v3351
      %v3357 = vshll.u32 %v3314, 16
      %v3359 = vrot.slane %v3357, 1
      %v3360 = vsel %vm3316, %v3355, %v3359
      %v3361 = vshrl.u32 %v3314, 16
      %v3363 = vor.u32 %v3361, %v3359
      %v3365 = vshll.u32 %v3315, 16
      %v3367 = vrot.slane %v3365, 1
      %v3368 = vsel %vm3316, %v3363, %v3367
      %v3369 = vshrl.u32 %v3315, 16
      %v3371 = vor.u32 %v3369, %v3367
      %v3395 = vunpack.c.l.b16 %v3267
      %v3396 = vunpack.c.l.b16 %v3268
      %v3397 = vunpack.c.l.b16 %v3269
      %v3398 = vunpack.c.l.b16 %v3270
      %v3399 = vunpack.c.l.b16 %v3271
      %v3400 = vunpack.c.l.b16 %v3272
      %v3401 = vunpack.c.l.b16 %v3273
      %v3402 = vunpack.c.l.b16 %v3274
      %v3403 = vunpack.c.l.b16 %v3275
      %v3404 = vunpack.c.l.b16 %v3276
      %v3405 = vunpack.c.l.b16 %v3277
      %v3406 = vunpack.c.l.b16 %v3278
      %v3407 = vunpack.c.l.b16 %v3279
      %v3408 = vunpack.c.l.b16 %v3280
      %v3409 = vunpack.c.l.b16 %v3281
      %v3410 = vunpack.c.l.b16 %v3282
      %v3411 = vpack.c.b16 %v3396, %v3395
      %v3412 = vpack.c.b16 %v3398, %v3397
      %v3413 = vpack.c.b16 %v3400, %v3399
      %v3414 = vpack.c.b16 %v3402, %v3401
      %v3415 = vpack.c.b16 %v3404, %v3403
      %v3416 = vpack.c.b16 %v3406, %v3405
      %v3417 = vpack.c.b16 %v3408, %v3407
      %v3418 = vpack.c.b16 %v3410, %v3409
      %3427 = vmatprep.subr.bf16.mxu0 0
      %3428 = vmatpush1.bf16.msra.mxu0 %v3418
      %3429 = vmatprep.subr.bf16.mxu0 0
      %3430 = vmatpush1.bf16.msra.mxu0 %v3417
      %3431 = vmatprep.subr.bf16.mxu0 0
      %3432 = vmatpush1.bf16.msra.mxu0 %v3416
      %3433 = vmatprep.subr.bf16.mxu0 0
      %3434 = vmatpush1.bf16.msra.mxu0 %v3415
      %3435 = vmatprep.subr.bf16.mxu0 0
      %3436 = vmatpush1.bf16.msra.mxu0 %v3414
      %3437 = vmatprep.subr.bf16.mxu0 0
      %3438 = vmatpush1.bf16.msra.mxu0 %v3413
      %3439 = vmatprep.subr.bf16.mxu0 0
      %3440 = vmatpush1.bf16.msra.mxu0 %v3412
      %3441 = vmatprep.subr.bf16.mxu0 0
      %3442 = vmatpush1.bf16.msra.mxu0 %v3411
      %3443 = vmatprep.subr.bf16.mxu0 0
      %3444 = vmatpush2.bf16.msra.mxu0 0
      %3445 = vmatprep.subr.bf16.mxu0 0
      %3446 = vmatpush2.bf16.msra.mxu0 0
      %3447 = vmatprep.subr.bf16.mxu0 0
      %3448 = vmatpush2.bf16.msra.mxu0 0
      %3449 = vmatprep.subr.bf16.mxu0 0
      %3450 = vmatpush2.bf16.msra.mxu0 0
      %3451 = vmatprep.subr.bf16.mxu0 0
      %3452 = vmatpush2.bf16.msra.mxu0 0
      %3453 = vmatprep.subr.bf16.mxu0 0
      %3454 = vmatpush2.bf16.msra.mxu0 0
      %3455 = vmatprep.subr.bf16.mxu0 0
      %3456 = vmatpush2.bf16.msra.mxu0 0
      %3457 = vmatprep.subr.bf16.mxu0 0
      %3458 = vmatpush2.bf16.msra.mxu0 0
      %3459 = vmatprep.mubr.bf16.mxu0 0
      %3460 = vmatmul.mubr.bf16.gmra.mxu0 %v3328
      %v3461 = vpop.f32.mrf.mxu0
      %v3462 = vadd.f32 0.0, %v3461
      %v3463 = vpop.f32.mrf.mxu0
      %v3464 = vpop.f32.mrf.mxu0
      %v3465 = vadd.f32 0.0, %v3464
      %v3466 = vpop.f32.mrf.mxu0
      %3467 = vmatprep.mubr.bf16.mxu0 0
      %3468 = vmatmul.mubr.bf16.gmra.mxu0 %v3336
      %v3469 = vpop.f32.mrf.mxu0
      %v3470 = vadd.f32 0.0, %v3469
      %v3471 = vpop.f32.mrf.mxu0
      %v3472 = vpop.f32.mrf.mxu0
      %v3473 = vadd.f32 0.0, %v3472
      %v3474 = vpop.f32.mrf.mxu0
      %3475 = vmatprep.mubr.bf16.mxu0 0
      %3476 = vmatmul.mubr.bf16.gmra.mxu0 %v3344
      %v3477 = vpop.f32.mrf.mxu0
      %v3478 = vadd.f32 0.0, %v3477
      %v3479 = vpop.f32.mrf.mxu0
      %v3480 = vpop.f32.mrf.mxu0
      %v3481 = vadd.f32 0.0, %v3480
      %v3482 = vpop.f32.mrf.mxu0
      %3483 = vmatprep.mubr.bf16.mxu0 0
      %3484 = vmatmul.mubr.bf16.gmra.mxu0 %v3352
      %v3485 = vpop.f32.mrf.mxu0
      %v3486 = vadd.f32 0.0, %v3485
      %v3487 = vpop.f32.mrf.mxu0
      %v3488 = vpop.f32.mrf.mxu0
      %v3489 = vadd.f32 0.0, %v3488
      %v3490 = vpop.f32.mrf.mxu0
      %3491 = vmatprep.mubr.bf16.mxu0 0
      %3492 = vmatmul.mubr.bf16.gmra.mxu0 %v3360
      %v3493 = vpop.f32.mrf.mxu0
      %v3494 = vadd.f32 0.0, %v3493
      %v3495 = vpop.f32.mrf.mxu0
      %v3496 = vpop.f32.mrf.mxu0
      %v3497 = vadd.f32 0.0, %v3496
      %v3498 = vpop.f32.mrf.mxu0
      %3499 = vmatprep.mubr.bf16.mxu0 0
      %3500 = vmatmul.mubr.bf16.gmra.mxu0 %v3368
      %v3501 = vpop.f32.mrf.mxu0
      %v3502 = vadd.f32 0.0, %v3501
      %v3503 = vpop.f32.mrf.mxu0
      %v3504 = vpop.f32.mrf.mxu0
      %v3505 = vadd.f32 0.0, %v3504
      %v3506 = vpop.f32.mrf.mxu0
      %3507 = vmatprep.mubr.bf16.mxu0 0
      %3508 = vmatmul.mubr.bf16.gmra.mxu0 %v3371
      %v3509 = vpop.f32.mrf.mxu0
      %v3510 = vadd.f32 0.0, %v3509
      %v3511 = vpop.f32.mrf.mxu0
      %v3512 = vpop.f32.mrf.mxu0
      %v3513 = vpop.f32.mrf.mxu0
      %3514 = vdwg.mxu0
      %v3516 = vunpack.c.l.b16 %v3248
      %v3517 = vpack.c.b16 %v3516, %v3516
      %v3541 = vunpack.c.l.b16 %v3249
      %v3542 = vunpack.c.l.b16 %v3250
      %v3543 = vunpack.c.l.b16 %v3251
      %v3544 = vunpack.c.l.b16 %v3252
      %v3545 = vunpack.c.l.b16 %v3253
      %v3546 = vunpack.c.l.b16 %v3254
      %v3547 = vunpack.c.l.b16 %v3255
      %v3548 = vunpack.c.l.b16 %v3256
      %v3549 = vunpack.c.l.b16 %v3257
      %v3550 = vunpack.c.l.b16 %v3258
      %v3551 = vunpack.c.l.b16 %v3259
      %v3552 = vunpack.c.l.b16 %v3260
      %v3553 = vunpack.c.l.b16 %v3261
      %v3554 = vunpack.c.l.b16 %v3262
      %v3555 = vunpack.c.l.b16 %v3263
      %v3556 = vunpack.c.l.b16 %v3264
      %v3557 = vpack.c.b16 %v3542, %v3541
      %v3558 = vpack.c.b16 %v3544, %v3543
      %v3559 = vpack.c.b16 %v3546, %v3545
      %v3560 = vpack.c.b16 %v3548, %v3547
      %v3561 = vpack.c.b16 %v3550, %v3549
      %v3562 = vpack.c.b16 %v3552, %v3551
      %v3563 = vpack.c.b16 %v3554, %v3553
      %v3564 = vpack.c.b16 %v3556, %v3555
      %3573 = vmatprep.subr.bf16.mxu0 0
      %3574 = vmatpush1.bf16.msra.mxu0 %v3564
      %3575 = vmatprep.subr.bf16.mxu0 0
      %3576 = vmatpush1.bf16.msra.mxu0 %v3563
      %3577 = vmatprep.subr.bf16.mxu0 0
      %3578 = vmatpush1.bf16.msra.mxu0 %v3562
      %3579 = vmatprep.subr.bf16.mxu0 0
      %3580 = vmatpush1.bf16.msra.mxu0 %v3561
      %3581 = vmatprep.subr.bf16.mxu0 0
      %3582 = vmatpush1.bf16.msra.mxu0 %v3560
      %3583 = vmatprep.subr.bf16.mxu0 0
      %3584 = vmatpush1.bf16.msra.mxu0 %v3559
      %3585 = vmatprep.subr.bf16.mxu0 0
      %3586 = vmatpush1.bf16.msra.mxu0 %v3558
      %3587 = vmatprep.subr.bf16.mxu0 0
      %3588 = vmatpush1.bf16.msra.mxu0 %v3557
      %3589 = vmatprep.subr.bf16.mxu0 0
      %3590 = vmatpush2.bf16.msra.mxu0 0
      %3591 = vmatprep.subr.bf16.mxu0 0
      %3592 = vmatpush2.bf16.msra.mxu0 0
      %3593 = vmatprep.subr.bf16.mxu0 0
      %3594 = vmatpush2.bf16.msra.mxu0 0
      %3595 = vmatprep.subr.bf16.mxu0 0
      %3596 = vmatpush2.bf16.msra.mxu0 0
      %3597 = vmatprep.subr.bf16.mxu0 0
      %3598 = vmatpush2.bf16.msra.mxu0 0
      %3599 = vmatprep.subr.bf16.mxu0 0
      %3600 = vmatpush2.bf16.msra.mxu0 0
      %3601 = vmatprep.subr.bf16.mxu0 0
      %3602 = vmatpush2.bf16.msra.mxu0 0
      %3603 = vmatprep.subr.bf16.mxu0 0
      %3604 = vmatpush2.bf16.msra.mxu0 0
      %3605 = vmatprep.mubr.bf16.mxu0 0
      %3606 = vmatmul.mubr.bf16.gmra.mxu0 %v3309
      %v3607 = vpop.f32.mrf.mxu0
      %v3608 = vadd.f32 %v3462, %v3607
      %v3609 = vpop.f32.mrf.mxu0
      %v3610 = vpop.f32.mrf.mxu0
      %v3611 = vadd.f32 %v3465, %v3610
      %v3612 = vpop.f32.mrf.mxu0
      %3613 = vmatprep.mubr.bf16.mxu0 0
      %3614 = vmatmul.mubr.bf16.gmra.mxu0 %v3310
      %v3615 = vpop.f32.mrf.mxu0
      %v3616 = vadd.f32 %v3470, %v3615
      %v3617 = vpop.f32.mrf.mxu0
      %v3618 = vpop.f32.mrf.mxu0
      %v3619 = vadd.f32 %v3473, %v3618
      %v3620 = vpop.f32.mrf.mxu0
      %3621 = vmatprep.mubr.bf16.mxu0 0
      %3622 = vmatmul.mubr.bf16.gmra.mxu0 %v3311
      %v3623 = vpop.f32.mrf.mxu0
      %v3624 = vadd.f32 %v3478, %v3623
      %v3625 = vpop.f32.mrf.mxu0
      %v3626 = vpop.f32.mrf.mxu0
      %v3627 = vadd.f32 %v3481, %v3626
      %v3628 = vpop.f32.mrf.mxu0
      %3629 = vmatprep.mubr.bf16.mxu0 0
      %3630 = vmatmul.mubr.bf16.gmra.mxu0 %v3312
      %v3631 = vpop.f32.mrf.mxu0
      %v3632 = vadd.f32 %v3486, %v3631
      %v3633 = vpop.f32.mrf.mxu0
      %v3634 = vpop.f32.mrf.mxu0
      %v3635 = vadd.f32 %v3489, %v3634
      %v3636 = vpop.f32.mrf.mxu0
      %3637 = vmatprep.mubr.bf16.mxu0 0
      %3638 = vmatmul.mubr.bf16.gmra.mxu0 %v3313
      %v3639 = vpop.f32.mrf.mxu0
      %v3640 = vadd.f32 %v3494, %v3639
      %v3641 = vpop.f32.mrf.mxu0
      %v3642 = vpop.f32.mrf.mxu0
      %v3643 = vadd.f32 %v3497, %v3642
      %v3644 = vpop.f32.mrf.mxu0
      %3645 = vmatprep.mubr.bf16.mxu0 0
      %3646 = vmatmul.mubr.bf16.gmra.mxu0 %v3314
      %v3647 = vpop.f32.mrf.mxu0
      %v3648 = vadd.f32 %v3502, %v3647
      %v3649 = vpop.f32.mrf.mxu0
      %v3650 = vpop.f32.mrf.mxu0
      %v3651 = vadd.f32 %v3505, %v3650
      %v3652 = vpop.f32.mrf.mxu0
      %3653 = vmatprep.mubr.bf16.mxu0 0
      %3654 = vmatmul.mubr.bf16.gmra.mxu0 %v3517
      %v3655 = vpop.f32.mrf.mxu0
      %v3656 = vadd.f32 %v3510, %v3655
      %v3657 = vpop.f32.mrf.mxu0
      %v3658 = vpop.f32.mrf.mxu0
      %v3659 = vpop.f32.mrf.mxu0
      %3660 = vdwg.mxu0
      %v3661 = vld [vmem:[#allocation3 + $0x4] sm:$0xe]
      %v3662 = vld [vmem:[#allocation3 + $0x8] sm:$0xf]
      %v3663 = vld [vmem:[#allocation3 + $0xc] sm:$0xf]
      %v3664 = vld [vmem:[#allocation3 + $0x10] sm:$0xf]
      %v3665 = vld [vmem:[#allocation3 + $0x14] sm:$0xf]
      %v3666 = vld [vmem:[#allocation3 + $0x18] sm:$0xf]
      %v3667 = vld [vmem:[#allocation3 + $0x1c] sm:$0xf]
      %v3668 = vld [vmem:[#allocation3 + $0x20] sm:$0xf]
      %v3669 = vld [vmem:[#allocation3 + $0x24] sm:$0xf]
      %v3670 = vld [vmem:[#allocation3 + $0x28] sm:$0xf]
      %v3671 = vld [vmem:[#allocation3 + $0x2c] sm:$0xf]
      %v3672 = vld [vmem:[#allocation3 + $0x30] sm:$0xf]
      %v3673 = vld [vmem:[#allocation3 + $0x34] sm:$0x7]
      %s3674 = scalar_lea.vmem %s3, 128
      %v3675 = vld [vmem:[%s3674] sm:$0xf]
      %v3676 = vld [vmem:[%s3674 + $0x4] sm:$0xf]
      %v3677 = vld [vmem:[%s3674 + $0x8] sm:$0xf]
      %v3678 = vld [vmem:[%s3674 + $0xc] sm:$0xf]
      %v3679 = vld [vmem:[%s3674 + $0x10] sm:$0xf]
      %v3680 = vld [vmem:[%s3674 + $0x14] sm:$0xf]
      %v3681 = vld [vmem:[%s3674 + $0x18] sm:$0xf]
      %v3682 = vld [vmem:[%s3674 + $0x1c] sm:$0xf]
      %v3683 = vld [vmem:[%s3674 + $0x20] sm:$0xf]
      %v3684 = vld [vmem:[%s3674 + $0x24] sm:$0xf]
      %v3685 = vld [vmem:[%s3674 + $0x28] sm:$0xf]
      %v3686 = vld [vmem:[%s3674 + $0x2c] sm:$0xf]
      %v3687 = vld [vmem:[%s3674 + $0x30] sm:$0xf]
      %v3688 = vld [vmem:[%s3674 + $0x34] sm:$0xf]
      %v3689 = vld [vmem:[%s3674 + $0x38] sm:$0xf]
      %v3690 = vld [vmem:[%s3674 + $0x3c] sm:$0xf]
      %v3704 = vunpack.c.l.b16 %v3661
      %v3705 = vunpack.c.l.b16 %v3662
      %v3706 = vunpack.c.l.b16 %v3663
      %v3707 = vunpack.c.l.b16 %v3664
      %v3708 = vunpack.c.l.b16 %v3665
      %v3709 = vunpack.c.l.b16 %v3666
      %v3710 = vunpack.c.l.b16 %v3667
      %v3711 = vunpack.c.l.b16 %v3668
      %v3712 = vunpack.c.l.b16 %v3669
      %v3713 = vunpack.c.l.b16 %v3670
      %v3714 = vunpack.c.l.b16 %v3671
      %v3715 = vunpack.c.l.b16 %v3672
      %v3716 = vunpack.c.l.b16 %v3673
      %v3717 = vpack.c.b16 %v3705, %v3704
      %v3718 = vpack.c.b16 %v3707, %v3706
      %v3719 = vpack.c.b16 %v3709, %v3708
      %v3720 = vpack.c.b16 %v3711, %v3710
      %v3721 = vpack.c.b16 %v3713, %v3712
      %v3722 = vpack.c.b16 %v3715, %v3714
      %v3723 = vpack.c.b16 %v3716, %v3716
      %vm3724 = vcmask 1046528
      %v3725 = vrot.slane %v3717, 1
      %v3726 = vrot.slane %v3718, 1
      %v3727 = vsel %vm3724, %v3725, %v3726
      %v3728 = vrot.slane %v3719, 1
      %v3729 = vsel %vm3724, %v3726, %v3728
      %v3730 = vrot.slane %v3720, 1
      %v3731 = vsel %vm3724, %v3728, %v3730
      %v3732 = vrot.slane %v3721, 1
      %v3733 = vsel %vm3724, %v3730, %v3732
      %v3734 = vrot.slane %v3722, 1
      %v3735 = vsel %vm3724, %v3732, %v3734
      %v3736 = vrot.slane %v3723, 1
      %v3737 = vsel %vm3724, %v3734, %v3736
      %v3761 = vunpack.c.l.b16 %v3675
      %v3762 = vunpack.c.l.b16 %v3676
      %v3763 = vunpack.c.l.b16 %v3677
      %v3764 = vunpack.c.l.b16 %v3678
      %v3765 = vunpack.c.l.b16 %v3679
      %v3766 = vunpack.c.l.b16 %v3680
      %v3767 = vunpack.c.l.b16 %v3681
      %v3768 = vunpack.c.l.b16 %v3682
      %v3769 = vunpack.c.l.b16 %v3683
      %v3770 = vunpack.c.l.b16 %v3684
      %v3771 = vunpack.c.l.b16 %v3685
      %v3772 = vunpack.c.l.b16 %v3686
      %v3773 = vunpack.c.l.b16 %v3687
      %v3774 = vunpack.c.l.b16 %v3688
      %v3775 = vunpack.c.l.b16 %v3689
      %v3776 = vunpack.c.l.b16 %v3690
      %v3777 = vpack.c.b16 %v3762, %v3761
      %v3778 = vpack.c.b16 %v3764, %v3763
      %v3779 = vpack.c.b16 %v3766, %v3765
      %v3780 = vpack.c.b16 %v3768, %v3767
      %v3781 = vpack.c.b16 %v3770, %v3769
      %v3782 = vpack.c.b16 %v3772, %v3771
      %v3783 = vpack.c.b16 %v3774, %v3773
      %v3784 = vpack.c.b16 %v3776, %v3775
      %3793 = vmatprep.subr.bf16.mxu0 0
      %3794 = vmatpush1.bf16.msra.mxu0 %v3784
      %3795 = vmatprep.subr.bf16.mxu0 0
      %3796 = vmatpush1.bf16.msra.mxu0 %v3783
      %3797 = vmatprep.subr.bf16.mxu0 0
      %3798 = vmatpush1.bf16.msra.mxu0 %v3782
      %3799 = vmatprep.subr.bf16.mxu0 0
      %3800 = vmatpush1.bf16.msra.mxu0 %v3781
      %3801 = vmatprep.subr.bf16.mxu0 0
      %3802 = vmatpush1.bf16.msra.mxu0 %v3780
      %3803 = vmatprep.subr.bf16.mxu0 0
      %3804 = vmatpush1.bf16.msra.mxu0 %v3779
      %3805 = vmatprep.subr.bf16.mxu0 0
      %3806 = vmatpush1.bf16.msra.mxu0 %v3778
      %3807 = vmatprep.subr.bf16.mxu0 0
      %3808 = vmatpush1.bf16.msra.mxu0 %v3777
      %3809 = vmatprep.subr.bf16.mxu0 0
      %3810 = vmatpush2.bf16.msra.mxu0 0
      %3811 = vmatprep.subr.bf16.mxu0 0
      %3812 = vmatpush2.bf16.msra.mxu0 0
      %3813 = vmatprep.subr.bf16.mxu0 0
      %3814 = vmatpush2.bf16.msra.mxu0 0
      %3815 = vmatprep.subr.bf16.mxu0 0
      %3816 = vmatpush2.bf16.msra.mxu0 0
      %3817 = vmatprep.subr.bf16.mxu0 0
      %3818 = vmatpush2.bf16.msra.mxu0 0
      %3819 = vmatprep.subr.bf16.mxu0 0
      %3820 = vmatpush2.bf16.msra.mxu0 0
      %3821 = vmatprep.subr.bf16.mxu0 0
      %3822 = vmatpush2.bf16.msra.mxu0 0
      %3823 = vmatprep.subr.bf16.mxu0 0
      %3824 = vmatpush2.bf16.msra.mxu0 0
      %3825 = vmatprep.mubr.bf16.mxu0 0
      %3826 = vmatmul.mubr.bf16.gmra.mxu0 %v3727
      %v3827 = vpop.f32.mrf.mxu0
      %v3828 = vadd.f32 0.0, %v3827
      %v3829 = vpop.f32.mrf.mxu0
      %v3830 = vpop.f32.mrf.mxu0
      %v3831 = vadd.f32 0.0, %v3830
      %v3832 = vpop.f32.mrf.mxu0
      %3833 = vmatprep.mubr.bf16.mxu0 0
      %3834 = vmatmul.mubr.bf16.gmra.mxu0 %v3729
      %v3835 = vpop.f32.mrf.mxu0
      %v3836 = vadd.f32 0.0, %v3835
      %v3837 = vpop.f32.mrf.mxu0
      %v3838 = vpop.f32.mrf.mxu0
      %v3839 = vadd.f32 0.0, %v3838
      %v3840 = vpop.f32.mrf.mxu0
      %3841 = vmatprep.mubr.bf16.mxu0 0
      %3842 = vmatmul.mubr.bf16.gmra.mxu0 %v3731
      %v3843 = vpop.f32.mrf.mxu0
      %v3844 = vadd.f32 0.0, %v3843
      %v3845 = vpop.f32.mrf.mxu0
      %v3846 = vpop.f32.mrf.mxu0
      %v3847 = vadd.f32 0.0, %v3846
      %v3848 = vpop.f32.mrf.mxu0
      %3849 = vmatprep.mubr.bf16.mxu0 0
      %3850 = vmatmul.mubr.bf16.gmra.mxu0 %v3733
      %v3851 = vpop.f32.mrf.mxu0
      %v3852 = vadd.f32 0.0, %v3851
      %v3853 = vpop.f32.mrf.mxu0
      %v3854 = vpop.f32.mrf.mxu0
      %v3855 = vadd.f32 0.0, %v3854
      %v3856 = vpop.f32.mrf.mxu0
      %3857 = vmatprep.mubr.bf16.mxu0 0
      %3858 = vmatmul.mubr.bf16.gmra.mxu0 %v3735
      %v3859 = vpop.f32.mrf.mxu0
      %v3860 = vadd.f32 0.0, %v3859
      %v3861 = vpop.f32.mrf.mxu0
      %v3862 = vpop.f32.mrf.mxu0
      %v3863 = vadd.f32 0.0, %v3862
      %v3864 = vpop.f32.mrf.mxu0
      %3865 = vmatprep.mubr.bf16.mxu0 0
      %3866 = vmatmul.mubr.bf16.gmra.mxu0 %v3737
      %v3867 = vpop.f32.mrf.mxu0
      %v3868 = vadd.f32 0.0, %v3867
      %v3869 = vpop.f32.mrf.mxu0
      %v3870 = vpop.f32.mrf.mxu0
      %v3871 = vadd.f32 0.0, %v3870
      %v3872 = vpop.f32.mrf.mxu0
      %3873 = vmatprep.mubr.bf16.mxu0 0
      %3874 = vmatmul.mubr.bf16.gmra.mxu0 %v3736
      %v3875 = vpop.f32.mrf.mxu0
      %v3876 = vadd.f32 0.0, %v3875
      %v3877 = vpop.f32.mrf.mxu0
      %v3878 = vpop.f32.mrf.mxu0
      %v3879 = vpop.f32.mrf.mxu0
      %3880 = vdwg.mxu0
      %v3881 = vadd.f32 %v3608, %v3828
      %v3882 = vadd.f32 %v3611, %v3831
      %v3883 = vadd.f32 %v3616, %v3836
      %v3884 = vadd.f32 %v3619, %v3839
      %v3885 = vadd.f32 %v3624, %v3844
      %v3886 = vadd.f32 %v3627, %v3847
      %v3887 = vadd.f32 %v3632, %v3852
      %v3888 = vadd.f32 %v3635, %v3855
      %v3889 = vadd.f32 %v3640, %v3860
      %v3890 = vadd.f32 %v3643, %v3863
      %v3891 = vadd.f32 %v3648, %v3868
      %v3892 = vadd.f32 %v3651, %v3871
      %v3893 = vadd.f32 %v3656, %v3876
      %v3894 = vld [vmem:[#allocation3 + $0x34] sm:$0xf]
      %s3895 = scalar_lea.vmem %s3, 192
      %v3896 = vld [vmem:[%s3895] sm:$0xf]
      %v3897 = vld [vmem:[%s3895 + $0x4] sm:$0xf]
      %v3898 = vld [vmem:[%s3895 + $0x8] sm:$0xf]
      %v3899 = vld [vmem:[%s3895 + $0xc] sm:$0xf]
      %v3900 = vld [vmem:[%s3895 + $0x10] sm:$0xf]
      %v3901 = vld [vmem:[%s3895 + $0x14] sm:$0xf]
      %v3902 = vld [vmem:[%s3895 + $0x18] sm:$0xf]
      %v3903 = vld [vmem:[%s3895 + $0x1c] sm:$0xf]
      %v3904 = vld [vmem:[%s3895 + $0x20] sm:$0xf]
      %v3905 = vld [vmem:[%s3895 + $0x24] sm:$0xf]
      %v3906 = vld [vmem:[%s3895 + $0x28] sm:$0xf]
      %v3907 = vld [vmem:[%s3895 + $0x2c] sm:$0xf]
      %v3908 = vld [vmem:[%s3895 + $0x30] sm:$0xf]
      %v3909 = vld [vmem:[%s3895 + $0x34] sm:$0xf]
      %v3910 = vld [vmem:[%s3895 + $0x38] sm:$0xf]
      %v3911 = vld [vmem:[%s3895 + $0x3c] sm:$0xf]
      %v3913 = vunpack.c.l.b16 %v3894
      %v3914 = vpack.c.b16 %v3913, %v3913
      %vm3915 = vsmask.f32 6400
      %v3917 = vshrl.u32 %v3717, 16
      %v3919 = vrot.slane %v3917, 1
      %v3920 = vshll.u32 %v3717, 16
      %v3922 = vrot.slane %v3920, 2
      %v3923 = vor.u32 %v3919, %v3922
      %v3925 = vshrl.u32 %v3718, 16
      %v3927 = vrot.slane %v3925, 1
      %v3928 = vshll.u32 %v3718, 16
      %v3930 = vrot.slane %v3928, 2
      %v3931 = vor.u32 %v3927, %v3930
      %v3932 = vsel %vm3915, %v3923, %v3931
      %v3934 = vshrl.u32 %v3719, 16
      %v3936 = vrot.slane %v3934, 1
      %v3937 = vshll.u32 %v3719, 16
      %v3939 = vrot.slane %v3937, 2
      %v3940 = vor.u32 %v3936, %v3939
      %v3941 = vsel %vm3915, %v3931, %v3940
      %v3943 = vshrl.u32 %v3720, 16
      %v3945 = vrot.slane %v3943, 1
      %v3946 = vshll.u32 %v3720, 16
      %v3948 = vrot.slane %v3946, 2
      %v3949 = vor.u32 %v3945, %v3948
      %v3950 = vsel %vm3915, %v3940, %v3949
      %v3952 = vshrl.u32 %v3721, 16
      %v3954 = vrot.slane %v3952, 1
      %v3955 = vshll.u32 %v3721, 16
      %v3957 = vrot.slane %v3955, 2
      %v3958 = vor.u32 %v3954, %v3957
      %v3959 = vsel %vm3915, %v3949, %v3958
      %v3961 = vshrl.u32 %v3722, 16
      %v3963 = vrot.slane %v3961, 1
      %v3964 = vshll.u32 %v3722, 16
      %v3966 = vrot.slane %v3964, 2
      %v3967 = vor.u32 %v3963, %v3966
      %v3968 = vsel %vm3915, %v3958, %v3967
      %v3970 = vshrl.u32 %v3914, 16
      %v3972 = vrot.slane %v3970, 1
      %v3973 = vshll.u32 %v3914, 16
      %v3975 = vrot.slane %v3973, 2
      %v3976 = vor.u32 %v3972, %v3975
      %v3977 = vsel %vm3915, %v3967, %v3976
      %v4001 = vunpack.c.l.b16 %v3896
      %v4002 = vunpack.c.l.b16 %v3897
      %v4003 = vunpack.c.l.b16 %v3898
      %v4004 = vunpack.c.l.b16 %v3899
      %v4005 = vunpack.c.l.b16 %v3900
      %v4006 = vunpack.c.l.b16 %v3901
      %v4007 = vunpack.c.l.b16 %v3902
      %v4008 = vunpack.c.l.b16 %v3903
      %v4009 = vunpack.c.l.b16 %v3904
      %v4010 = vunpack.c.l.b16 %v3905
      %v4011 = vunpack.c.l.b16 %v3906
      %v4012 = vunpack.c.l.b16 %v3907
      %v4013 = vunpack.c.l.b16 %v3908
      %v4014 = vunpack.c.l.b16 %v3909
      %v4015 = vunpack.c.l.b16 %v3910
      %v4016 = vunpack.c.l.b16 %v3911
      %v4017 = vpack.c.b16 %v4002, %v4001
      %v4018 = vpack.c.b16 %v4004, %v4003
      %v4019 = vpack.c.b16 %v4006, %v4005
      %v4020 = vpack.c.b16 %v4008, %v4007
      %v4021 = vpack.c.b16 %v4010, %v4009
      %v4022 = vpack.c.b16 %v4012, %v4011
      %v4023 = vpack.c.b16 %v4014, %v4013
      %v4024 = vpack.c.b16 %v4016, %v4015
      %4033 = vmatprep.subr.bf16.mxu0 0
      %4034 = vmatpush1.bf16.msra.mxu0 %v4024
      %4035 = vmatprep.subr.bf16.mxu0 0
      %4036 = vmatpush1.bf16.msra.mxu0 %v4023
      %4037 = vmatprep.subr.bf16.mxu0 0
      %4038 = vmatpush1.bf16.msra.mxu0 %v4022
      %4039 = vmatprep.subr.bf16.mxu0 0
      %4040 = vmatpush1.bf16.msra.mxu0 %v4021
      %4041 = vmatprep.subr.bf16.mxu0 0
      %4042 = vmatpush1.bf16.msra.mxu0 %v4020
      %4043 = vmatprep.subr.bf16.mxu0 0
      %4044 = vmatpush1.bf16.msra.mxu0 %v4019
      %4045 = vmatprep.subr.bf16.mxu0 0
      %4046 = vmatpush1.bf16.msra.mxu0 %v4018
      %4047 = vmatprep.subr.bf16.mxu0 0
      %4048 = vmatpush1.bf16.msra.mxu0 %v4017
      %4049 = vmatprep.subr.bf16.mxu0 0
      %4050 = vmatpush2.bf16.msra.mxu0 0
      %4051 = vmatprep.subr.bf16.mxu0 0
      %4052 = vmatpush2.bf16.msra.mxu0 0
      %4053 = vmatprep.subr.bf16.mxu0 0
      %4054 = vmatpush2.bf16.msra.mxu0 0
      %4055 = vmatprep.subr.bf16.mxu0 0
      %4056 = vmatpush2.bf16.msra.mxu0 0
      %4057 = vmatprep.subr.bf16.mxu0 0
      %4058 = vmatpush2.bf16.msra.mxu0 0
      %4059 = vmatprep.subr.bf16.mxu0 0
      %4060 = vmatpush2.bf16.msra.mxu0 0
      %4061 = vmatprep.subr.bf16.mxu0 0
      %4062 = vmatpush2.bf16.msra.mxu0 0
      %4063 = vmatprep.subr.bf16.mxu0 0
      %4064 = vmatpush2.bf16.msra.mxu0 0
      %4065 = vmatprep.mubr.bf16.mxu0 0
      %4066 = vmatmul.mubr.bf16.gmra.mxu0 %v3932
      %v4067 = vpop.f32.mrf.mxu0
      %v4068 = vadd.f32 0.0, %v4067
      %v4069 = vpop.f32.mrf.mxu0
      %v4070 = vpop.f32.mrf.mxu0
      %v4071 = vadd.f32 0.0, %v4070
      %v4072 = vpop.f32.mrf.mxu0
      %4073 = vmatprep.mubr.bf16.mxu0 0
      %4074 = vmatmul.mubr.bf16.gmra.mxu0 %v3941
      %v4075 = vpop.f32.mrf.mxu0
      %v4076 = vadd.f32 0.0, %v4075
      %v4077 = vpop.f32.mrf.mxu0
      %v4078 = vpop.f32.mrf.mxu0
      %v4079 = vadd.f32 0.0, %v4078
      %v4080 = vpop.f32.mrf.mxu0
      %4081 = vmatprep.mubr.bf16.mxu0 0
      %4082 = vmatmul.mubr.bf16.gmra.mxu0 %v3950
      %v4083 = vpop.f32.mrf.mxu0
      %v4084 = vadd.f32 0.0, %v4083
      %v4085 = vpop.f32.mrf.mxu0
      %v4086 = vpop.f32.mrf.mxu0
      %v4087 = vadd.f32 0.0, %v4086
      %v4088 = vpop.f32.mrf.mxu0
      %4089 = vmatprep.mubr.bf16.mxu0 0
      %4090 = vmatmul.mubr.bf16.gmra.mxu0 %v3959
      %v4091 = vpop.f32.mrf.mxu0
      %v4092 = vadd.f32 0.0, %v4091
      %v4093 = vpop.f32.mrf.mxu0
      %v4094 = vpop.f32.mrf.mxu0
      %v4095 = vadd.f32 0.0, %v4094
      %v4096 = vpop.f32.mrf.mxu0
      %4097 = vmatprep.mubr.bf16.mxu0 0
      %4098 = vmatmul.mubr.bf16.gmra.mxu0 %v3968
      %v4099 = vpop.f32.mrf.mxu0
      %v4100 = vadd.f32 0.0, %v4099
      %v4101 = vpop.f32.mrf.mxu0
      %v4102 = vpop.f32.mrf.mxu0
      %v4103 = vadd.f32 0.0, %v4102
      %v4104 = vpop.f32.mrf.mxu0
      %4105 = vmatprep.mubr.bf16.mxu0 0
      %4106 = vmatmul.mubr.bf16.gmra.mxu0 %v3977
      %v4107 = vpop.f32.mrf.mxu0
      %v4108 = vadd.f32 0.0, %v4107
      %v4109 = vpop.f32.mrf.mxu0
      %v4110 = vpop.f32.mrf.mxu0
      %v4111 = vadd.f32 0.0, %v4110
      %v4112 = vpop.f32.mrf.mxu0
      %4113 = vmatprep.mubr.bf16.mxu0 0
      %4114 = vmatmul.mubr.bf16.gmra.mxu0 %v3976
      %v4115 = vpop.f32.mrf.mxu0
      %v4116 = vadd.f32 0.0, %v4115
      %v4117 = vpop.f32.mrf.mxu0
      %v4118 = vpop.f32.mrf.mxu0
      %v4119 = vpop.f32.mrf.mxu0
      %4120 = vdwg.mxu0
      %v4121 = vadd.f32 %v3881, %v4068
      %v4122 = vadd.f32 %v3882, %v4071
      %v4123 = vadd.f32 %v3883, %v4076
      %v4124 = vadd.f32 %v3884, %v4079
      %v4125 = vadd.f32 %v3885, %v4084
      %v4126 = vadd.f32 %v3886, %v4087
      %v4127 = vadd.f32 %v3887, %v4092
      %v4128 = vadd.f32 %v3888, %v4095
      %v4129 = vadd.f32 %v3889, %v4100
      %v4130 = vadd.f32 %v3890, %v4103
      %v4131 = vadd.f32 %v3891, %v4108
      %v4132 = vadd.f32 %v3892, %v4111
      %v4133 = vadd.f32 %v3893, %v4116
      %v4134 = vld [vmem:[%s4] sm:$0x1]
      %v4136 = vlaneseq
      %v4137 = vshrl.u32 %v4136, 7
      %v4138 = vsub.s32 0, %v4137
      %v4139 = vrot.slane %v4134, %v4138
      %v4141 = vadd.f32 %v4121, %v4139
      %v4142 = vadd.f32 %v4122, %v4139
      %v4143 = vadd.f32 %v4123, %v4139
      %v4144 = vadd.f32 %v4124, %v4139
      %v4145 = vadd.f32 %v4125, %v4139
      %v4146 = vadd.f32 %v4126, %v4139
      %v4147 = vadd.f32 %v4127, %v4139
      %v4148 = vadd.f32 %v4128, %v4139
      %v4149 = vadd.f32 %v4129, %v4139
      %v4150 = vadd.f32 %v4130, %v4139
      %v4151 = vadd.f32 %v4131, %v4139
      %v4152 = vadd.f32 %v4132, %v4139
      %v4153 = vadd.f32 %v4133, %v4139
      %v4154 = vmax.f32 %v4141, 0.0
      %v4155 = vmax.f32 %v4142, 0.0
      %v4156 = vmax.f32 %v4143, 0.0
      %v4157 = vmax.f32 %v4144, 0.0
      %v4158 = vmax.f32 %v4145, 0.0
      %v4159 = vmax.f32 %v4146, 0.0
      %v4160 = vmax.f32 %v4147, 0.0
      %v4161 = vmax.f32 %v4148, 0.0
      %v4162 = vmax.f32 %v4149, 0.0
      %v4163 = vmax.f32 %v4150, 0.0
      %v4164 = vmax.f32 %v4151, 0.0
      %v4165 = vmax.f32 %v4152, 0.0
      %v4166 = vmax.f32 %v4153, 0.0
      %v4167 = vpack.c.bf16 %v4155, %v4154
      %v4168 = vpack.c.bf16 %v4157, %v4156
      %v4169 = vpack.c.bf16 %v4159, %v4158
      %v4170 = vpack.c.bf16 %v4161, %v4160
      %v4171 = vpack.c.bf16 %v4163, %v4162
      %v4172 = vpack.c.bf16 %v4165, %v4164
      %v4173 = vpack.c.bf16 %v4166, %v4166
      %v4181 = vunpack.c.l.b16 %v4167
      %v4182 = vunpack.c.h.b16 %v4167
      %v4183 = vunpack.c.l.b16 %v4168
      %v4184 = vunpack.c.h.b16 %v4168
      %v4185 = vunpack.c.l.b16 %v4169
      %v4186 = vunpack.c.h.b16 %v4169
      %v4187 = vunpack.c.l.b16 %v4170
      %v4188 = vunpack.c.h.b16 %v4170
      %v4189 = vunpack.c.l.b16 %v4171
      %v4190 = vunpack.c.h.b16 %v4171
      %v4191 = vunpack.c.l.b16 %v4172
      %v4192 = vunpack.c.h.b16 %v4172
      %v4193 = vunpack.c.l.b16 %v4173
      %v4194 = vpack.c.b16 %v4181, %v4181
      %v4195 = vpack.c.b16 %v4182, %v4182
      %v4196 = vpack.c.b16 %v4183, %v4183
      %v4197 = vpack.c.b16 %v4184, %v4184
      %v4198 = vpack.c.b16 %v4185, %v4185
      %v4199 = vpack.c.b16 %v4186, %v4186
      %v4200 = vpack.c.b16 %v4187, %v4187
      %v4201 = vpack.c.b16 %v4188, %v4188
      %v4202 = vpack.c.b16 %v4189, %v4189
      %v4203 = vpack.c.b16 %v4190, %v4190
      %v4204 = vpack.c.b16 %v4191, %v4191
      %v4205 = vpack.c.b16 %v4192, %v4192
      %v4206 = vpack.c.b16 %v4193, %v4193
      %4220 = vst [vmem:[#allocation2] sm:$0xf] %v4194
      %4221 = vst [vmem:[#allocation2 + $0x4] sm:$0xf] %v4195
      %4222 = vst [vmem:[#allocation2 + $0x8] sm:$0xf] %v4196
      %4223 = vst [vmem:[#allocation2 + $0xc] sm:$0xf] %v4197
      %4224 = vst [vmem:[#allocation2 + $0x10] sm:$0xf] %v4198
      %4225 = vst [vmem:[#allocation2 + $0x14] sm:$0xf] %v4199
      %4226 = vst [vmem:[#allocation2 + $0x18] sm:$0xf] %v4200
      %4227 = vst [vmem:[#allocation2 + $0x1c] sm:$0xf] %v4201
      %4228 = vst [vmem:[#allocation2 + $0x20] sm:$0xf] %v4202
      %4229 = vst [vmem:[#allocation2 + $0x24] sm:$0xf] %v4203
      %4230 = vst [vmem:[#allocation2 + $0x28] sm:$0xf] %v4204
      %4231 = vst [vmem:[#allocation2 + $0x2c] sm:$0xf] %v4205
      %4232 = vst [vmem:[#allocation2 + $0x30] sm:$0x3] %v4206
      %4233 = vst [vmem:[#allocation4 + $0x10] sm:$0xc] 0
      %4234 = vst [vmem:[#allocation4 + $0x14] sm:$0xf] 0
      %v4235 = vld [vmem:[%s8] sm:$0xf]
      %v4236 = vld [vmem:[%s8 + $0x4] sm:$0xf]
      %v4237 = vld [vmem:[%s8 + $0x8] sm:$0xf]
      %v4238 = vld [vmem:[%s8 + $0xc] sm:$0xf]
      %v4239 = vld [vmem:[%s8 + $0x10] sm:$0x3]
      %v4240 = vld [vmem:[#allocation2] sm:$0xf]
      %v4241 = vld [vmem:[#allocation2 + $0x4] sm:$0xf]
      %v4242 = vld [vmem:[#allocation2 + $0x8] sm:$0xf]
      %v4243 = vld [vmem:[#allocation2 + $0xc] sm:$0xf]
      %v4244 = vld [vmem:[#allocation2 + $0x10] sm:$0xf]
      %v4245 = vld [vmem:[#allocation2 + $0x14] sm:$0xf]
      %v4246 = vld [vmem:[#allocation2 + $0x18] sm:$0xf]
      %v4247 = vld [vmem:[#allocation2 + $0x1c] sm:$0xf]
      %v4248 = vld [vmem:[#allocation2 + $0x20] sm:$0xf]
      %v4249 = vld [vmem:[#allocation2 + $0x24] sm:$0x1]
      %v4251 = vshrl.u32 %v4240, 16
      %v4253 = vrot.slane %v4251, 4
      %v4254 = vshll.u32 %v4240, 16
      %v4256 = vrot.slane %v4254, 5
      %v4257 = vor.u32 %v4253, %v4256
      %v4258 = vrot.slane %v4257, 4
      %v4260 = vshll.u32 %v4241, 16
      %v4262 = vrot.slane %v4260, 5
      %v4263 = vsel %vm2093, %v4258, %v4262
      %v4264 = vshrl.u32 %v4241, 16
      %v4266 = vrot.slane %v4264, 4
      %v4267 = vor.u32 %v4266, %v4262
      %v4268 = vrot.slane %v4267, 4
      %v4270 = vshll.u32 %v4242, 16
      %v4272 = vrot.slane %v4270, 5
      %v4273 = vsel %vm2093, %v4268, %v4272
      %v4274 = vshrl.u32 %v4242, 16
      %v4276 = vrot.slane %v4274, 4
      %v4277 = vor.u32 %v4276, %v4272
      %v4278 = vrot.slane %v4277, 4
      %v4280 = vshll.u32 %v4243, 16
      %v4282 = vrot.slane %v4280, 5
      %v4283 = vsel %vm2093, %v4278, %v4282
      %v4284 = vshrl.u32 %v4243, 16
      %v4286 = vrot.slane %v4284, 4
      %v4287 = vor.u32 %v4286, %v4282
      %v4288 = vrot.slane %v4287, 4
      %v4290 = vshll.u32 %v4244, 16
      %v4292 = vrot.slane %v4290, 5
      %v4293 = vsel %vm2093, %v4288, %v4292
      %v4294 = vshrl.u32 %v4244, 16
      %v4296 = vrot.slane %v4294, 4
      %v4297 = vor.u32 %v4296, %v4292
      %v4298 = vrot.slane %v4297, 4
      %v4300 = vshll.u32 %v4245, 16
      %v4302 = vrot.slane %v4300, 5
      %v4303 = vsel %vm2093, %v4298, %v4302
      %v4304 = vshrl.u32 %v4245, 16
      %v4306 = vrot.slane %v4304, 4
      %v4307 = vor.u32 %v4306, %v4302
      %v4308 = vrot.slane %v4307, 4
      %v4310 = vshll.u32 %v4246, 16
      %v4312 = vrot.slane %v4310, 5
      %v4313 = vsel %vm2093, %v4308, %v4312
      %v4314 = vshrl.u32 %v4246, 16
      %v4316 = vrot.slane %v4314, 4
      %v4317 = vor.u32 %v4316, %v4312
      %v4318 = vrot.slane %v4317, 4
      %v4320 = vshll.u32 %v4247, 16
      %v4322 = vrot.slane %v4320, 5
      %v4323 = vsel %vm2093, %v4318, %v4322
      %v4324 = vshrl.u32 %v4247, 16
      %v4326 = vrot.slane %v4324, 4
      %v4327 = vor.u32 %v4326, %v4322
      %v4328 = vrot.slane %v4327, 4
      %v4330 = vshll.u32 %v4248, 16
      %v4332 = vrot.slane %v4330, 5
      %v4333 = vsel %vm2093, %v4328, %v4332
      %v4334 = vshrl.u32 %v4248, 16
      %v4336 = vrot.slane %v4334, 4
      %v4337 = vor.u32 %v4336, %v4332
      %v4338 = vrot.slane %v4337, 4
      %v4340 = vshll.u32 %v4249, 16
      %v4342 = vrot.slane %v4340, 5
      %v4343 = vsel %vm2093, %v4338, %v4342
      %v4353 = vmax.bf16 %v4240, %v4263
      %v4354 = vmax.bf16 %v4241, %v4273
      %v4355 = vmax.bf16 %v4242, %v4283
      %v4356 = vmax.bf16 %v4243, %v4293
      %v4357 = vmax.bf16 %v4244, %v4303
      %v4358 = vmax.bf16 %v4245, %v4313
      %v4359 = vmax.bf16 %v4246, %v4323
      %v4360 = vmax.bf16 %v4247, %v4333
      %v4361 = vmax.bf16 %v4248, %v4343
      %v4362 = vld [vmem:[#allocation2 + $0x4] sm:$0xe]
      %v4363 = vld [vmem:[#allocation2 + $0x24] sm:$0xf]
      %v4364 = vld [vmem:[#allocation2 + $0x28] sm:$0x1]
      %v4365 = vld [vmem:[#allocation2 + $0x28] sm:$0x3]
      %v4367 = vshrl.u32 %v4362, 16
      %v4369 = vrot.slane %v4367, 4
      %v4370 = vshll.u32 %v4362, 16
      %v4372 = vrot.slane %v4370, 5
      %v4373 = vor.u32 %v4369, %v4372
      %v4374 = vrot.slane %v4373, 4
      %v4375 = vsel %vm2093, %v4374, %v4272
      %v4377 = vshll.u32 %v4363, 16
      %v4379 = vrot.slane %v4377, 5
      %v4380 = vsel %vm2093, %v4338, %v4379
      %v4381 = vshrl.u32 %v4363, 16
      %v4383 = vrot.slane %v4381, 4
      %v4384 = vor.u32 %v4383, %v4379
      %v4385 = vrot.slane %v4384, 4
      %v4387 = vshll.u32 %v4365, 16
      %v4389 = vrot.slane %v4387, 5
      %v4390 = vsel %vm2093, %v4385, %v4389
      %v4391 = vshrl.u32 %v4365, 16
      %v4393 = vrot.slane %v4391, 4
      %v4394 = vor.u32 %v4393, %v4389
      %v4395 = vrot.slane %v4394, 4
      %v4400 = vmax.bf16 %v4362, %v4375
      %v4401 = vmax.bf16 %v4248, %v4380
      %v4402 = vmax.bf16 %v4363, %v4390
      %v4403 = vmax.bf16 %v4364, %v4395
      %v4414 = vrot.slane %v4400, 5
      %v4415 = vrot.slane %v4414, 4
      %v4416 = vrot.slane %v4355, 5
      %v4417 = vsel %vm2598, %v4415, %v4416
      %v4418 = vrot.slane %v4416, 4
      %v4419 = vrot.slane %v4356, 5
      %v4420 = vsel %vm2598, %v4418, %v4419
      %v4421 = vrot.slane %v4419, 4
      %v4422 = vrot.slane %v4357, 5
      %v4423 = vsel %vm2598, %v4421, %v4422
      %v4424 = vrot.slane %v4422, 4
      %v4425 = vrot.slane %v4358, 5
      %v4426 = vsel %vm2598, %v4424, %v4425
      %v4427 = vrot.slane %v4425, 4
      %v4428 = vrot.slane %v4359, 5
      %v4429 = vsel %vm2598, %v4427, %v4428
      %v4430 = vrot.slane %v4428, 4
      %v4431 = vrot.slane %v4360, 5
      %v4432 = vsel %vm2598, %v4430, %v4431
      %v4433 = vrot.slane %v4431, 4
      %v4434 = vrot.slane %v4401, 5
      %v4435 = vsel %vm2598, %v4433, %v4434
      %v4436 = vrot.slane %v4434, 4
      %v4437 = vrot.slane %v4402, 5
      %v4438 = vsel %vm2598, %v4436, %v4437
      %v4439 = vrot.slane %v4437, 4
      %v4440 = vrot.slane %v4403, 5
      %v4441 = vsel %vm2598, %v4439, %v4440
      %v4451 = vmax.bf16 %v4353, %v4417
      %v4452 = vmax.bf16 %v4354, %v4420
      %v4453 = vmax.bf16 %v4355, %v4423
      %v4454 = vmax.bf16 %v4356, %v4426
      %v4455 = vmax.bf16 %v4357, %v4429
      %v4456 = vmax.bf16 %v4358, %v4432
      %v4457 = vmax.bf16 %v4359, %v4435
      %v4458 = vmax.bf16 %v4360, %v4438
      %v4459 = vmax.bf16 %v4361, %v4441
      %v4465 = vunpack.c.l.b16 %v4235
      %v4466 = vunpack.c.l.b16 %v4236
      %v4467 = vunpack.c.l.b16 %v4237
      %v4468 = vunpack.c.l.b16 %v4238
      %v4469 = vunpack.c.l.b16 %v4239
      %v4470 = vpack.c.b16 %v4466, %v4465
      %v4471 = vpack.c.b16 %v4468, %v4467
      %v4472 = vpack.c.b16 %v4469, %v4469
      %v4482 = vunpack.c.l.b16 %v4451
      %v4483 = vunpack.c.l.b16 %v4452
      %v4484 = vunpack.c.l.b16 %v4453
      %v4485 = vunpack.c.l.b16 %v4454
      %v4486 = vunpack.c.l.b16 %v4455
      %v4487 = vunpack.c.l.b16 %v4456
      %v4488 = vunpack.c.l.b16 %v4457
      %v4489 = vunpack.c.l.b16 %v4458
      %v4490 = vunpack.c.l.b16 %v4459
      %v4491 = vpack.c.b16 %v4483, %v4482
      %v4492 = vpack.c.b16 %v4485, %v4484
      %v4493 = vpack.c.b16 %v4487, %v4486
      %v4494 = vpack.c.b16 %v4489, %v4488
      %v4495 = vpack.c.b16 %v4490, %v4490
      %vm4500 = vcmask 588800
      %v4502 = vsel %vm4500, %v4470, 0
      %v4505 = vsel %vm4500, %v4471, 0
      %v4508 = vsel %vm4500, %v4472, 0
      %vm4510 = vcmask 1043456
      %v4512 = vsel %vm4510, %v4495, 0
      %4514 = vmatprep.subr.bf16.mxu0 0
      %4515 = vmatpush1.bf16.msra.mxu0 0
      %4516 = vmatprep.subr.bf16.mxu0 0
      %4517 = vmatpush1.bf16.msra.mxu0 0
      %4518 = vmatprep.subr.bf16.mxu0 0
      %4519 = vmatpush1.bf16.msra.mxu0 0
      %4520 = vmatprep.subr.bf16.mxu0 0
      %4521 = vmatpush1.bf16.msra.mxu0 %v4512
      %4522 = vmatprep.subr.bf16.mxu0 0
      %4523 = vmatpush1.bf16.msra.mxu0 %v4494
      %4524 = vmatprep.subr.bf16.mxu0 0
      %4525 = vmatpush1.bf16.msra.mxu0 %v4493
      %4526 = vmatprep.subr.bf16.mxu0 0
      %4527 = vmatpush1.bf16.msra.mxu0 %v4492
      %4528 = vmatprep.subr.bf16.mxu0 0
      %4529 = vmatpush1.bf16.msra.mxu0 %v4491
      %4530 = vmatprep.subr.bf16.mxu0 0
      %4531 = vmatpush2.bf16.msra.mxu0 0
      %4532 = vmatprep.subr.bf16.mxu0 0
      %4533 = vmatpush2.bf16.msra.mxu0 0
      %4534 = vmatprep.subr.bf16.mxu0 0
      %4535 = vmatpush2.bf16.msra.mxu0 0
      %4536 = vmatprep.subr.bf16.mxu0 0
      %4537 = vmatpush2.bf16.msra.mxu0 0
      %4538 = vmatprep.subr.bf16.mxu0 0
      %4539 = vmatpush2.bf16.msra.mxu0 0
      %4540 = vmatprep.subr.bf16.mxu0 0
      %4541 = vmatpush2.bf16.msra.mxu0 0
      %4542 = vmatprep.subr.bf16.mxu0 0
      %4543 = vmatpush2.bf16.msra.mxu0 0
      %4544 = vmatprep.subr.bf16.mxu0 0
      %4545 = vmatpush2.bf16.msra.mxu0 0
      %4546 = vmatprep.mubr.bf16.mxu0 0
      %4547 = vmatmul.mubr.bf16.gmra.mxu0 %v4502
      %v4548 = vpop.f32.mrf.mxu0
      %v4549 = vadd.f32 0.0, %v4548
      %v4550 = vpop.f32.mrf.mxu0
      %v4551 = vpop.f32.mrf.mxu0
      %v4552 = vadd.f32 0.0, %v4551
      %v4553 = vpop.f32.mrf.mxu0
      %4554 = vmatprep.mubr.bf16.mxu0 0
      %4555 = vmatmul.mubr.bf16.gmra.mxu0 %v4505
      %v4556 = vpop.f32.mrf.mxu0
      %v4557 = vadd.f32 0.0, %v4556
      %v4558 = vpop.f32.mrf.mxu0
      %v4559 = vpop.f32.mrf.mxu0
      %v4560 = vadd.f32 0.0, %v4559
      %v4561 = vpop.f32.mrf.mxu0
      %4562 = vmatprep.mubr.bf16.mxu0 0
      %4563 = vmatmul.mubr.bf16.gmra.mxu0 %v4508
      %v4564 = vpop.f32.mrf.mxu0
      %v4565 = vadd.f32 0.0, %v4564
      %v4566 = vpop.f32.mrf.mxu0
      %v4567 = vpop.f32.mrf.mxu0
      %v4568 = vpop.f32.mrf.mxu0
      %4569 = vdwg.mxu0
      %v4570 = vpack.c.bf16 %v4552, %v4549
      %v4571 = vpack.c.bf16 %v4560, %v4557
      %v4572 = vpack.c.bf16 %v4565, %v4565
      %v4576 = vunpack.c.l.b16 %v4570
      %v4577 = vunpack.c.h.b16 %v4570
      %v4578 = vunpack.c.l.b16 %v4571
      %v4579 = vunpack.c.h.b16 %v4571
      %v4580 = vunpack.c.l.b16 %v4572
      %v4581 = vpack.c.b16 %v4576, %v4576
      %v4582 = vpack.c.b16 %v4577, %v4577
      %v4583 = vpack.c.b16 %v4578, %v4578
      %v4584 = vpack.c.b16 %v4579, %v4579
      %v4585 = vpack.c.b16 %v4580, %v4580
      %4591 = vst [vmem:[#allocation4] sm:$0xf] %v4581
      %4592 = vst [vmem:[#allocation4 + $0x4] sm:$0xf] %v4582
      %4593 = vst [vmem:[#allocation4 + $0x8] sm:$0xf] %v4583
      %4594 = vst [vmem:[#allocation4 + $0xc] sm:$0xf] %v4584
      %4595 = vst [vmem:[#allocation4 + $0x10] sm:$0x3] %v4585
      %v4596 = vld [vmem:[#allocation4] sm:$0xf]
      %v4597 = vld [vmem:[#allocation4 + $0x4] sm:$0xf]
      %v4598 = vld [vmem:[#allocation4 + $0x8] sm:$0xf]
      %v4599 = vld [vmem:[#allocation4 + $0xc] sm:$0xf]
      %v4600 = vld [vmem:[#allocation4 + $0x10] sm:$0x3]
      %v4601 = vld [vmem:[%s5] sm:$0xf]
      %v4602 = vld [vmem:[%s5 + $0x4] sm:$0xf]
      %v4603 = vld [vmem:[%s5 + $0x8] sm:$0xf]
      %v4604 = vld [vmem:[%s5 + $0xc] sm:$0xf]
      %v4605 = vld [vmem:[%s5 + $0x10] sm:$0xf]
      %v4606 = vld [vmem:[%s5 + $0x14] sm:$0xf]
      %v4607 = vld [vmem:[%s5 + $0x18] sm:$0xf]
      %v4608 = vld [vmem:[%s5 + $0x1c] sm:$0xf]
      %v4609 = vld [vmem:[%s5 + $0x20] sm:$0xf]
      %v4610 = vld [vmem:[%s5 + $0x24] sm:$0xf]
      %v4611 = vld [vmem:[%s5 + $0x28] sm:$0xf]
      %v4612 = vld [vmem:[%s5 + $0x2c] sm:$0xf]
      %v4613 = vld [vmem:[%s5 + $0x30] sm:$0xf]
      %v4614 = vld [vmem:[%s5 + $0x34] sm:$0xf]
      %v4615 = vld [vmem:[%s5 + $0x38] sm:$0xf]
      %v4616 = vld [vmem:[%s5 + $0x3c] sm:$0xf]
      %v4617 = vld [vmem:[#allocation4 + $0x10] sm:$0x7]
      %s4618 = scalar_lea.vmem %s5, 64
      %v4619 = vld [vmem:[%s4618] sm:$0xf]
      %v4620 = vld [vmem:[%s4618 + $0x4] sm:$0xf]
      %v4621 = vld [vmem:[%s4618 + $0x8] sm:$0xf]
      %v4622 = vld [vmem:[%s4618 + $0xc] sm:$0xf]
      %v4623 = vld [vmem:[%s4618 + $0x10] sm:$0xf]
      %v4624 = vld [vmem:[%s4618 + $0x14] sm:$0xf]
      %v4625 = vld [vmem:[%s4618 + $0x18] sm:$0xf]
      %v4626 = vld [vmem:[%s4618 + $0x1c] sm:$0xf]
      %v4627 = vld [vmem:[%s4618 + $0x20] sm:$0xf]
      %v4628 = vld [vmem:[%s4618 + $0x24] sm:$0xf]
      %v4629 = vld [vmem:[%s4618 + $0x28] sm:$0xf]
      %v4630 = vld [vmem:[%s4618 + $0x2c] sm:$0xf]
      %v4631 = vld [vmem:[%s4618 + $0x30] sm:$0xf]
      %v4632 = vld [vmem:[%s4618 + $0x34] sm:$0xf]
      %v4633 = vld [vmem:[%s4618 + $0x38] sm:$0xf]
      %v4634 = vld [vmem:[%s4618 + $0x3c] sm:$0xf]
      %v4640 = vunpack.c.l.b16 %v4596
      %v4641 = vunpack.c.l.b16 %v4597
      %v4642 = vunpack.c.l.b16 %v4598
      %v4643 = vunpack.c.l.b16 %v4599
      %v4644 = vunpack.c.l.b16 %v4617
      %v4645 = vpack.c.b16 %v4641, %v4640
      %v4646 = vpack.c.b16 %v4643, %v4642
      %v4647 = vpack.c.b16 %v4644, %v4644
      %v4649 = vshrl.u32 %v4645, 16
      %v4651 = vshll.u32 %v4645, 16
      %v4653 = vrot.slane %v4651, 1
      %v4654 = vor.u32 %v4649, %v4653
      %v4656 = vshll.u32 %v4646, 16
      %v4658 = vrot.slane %v4656, 1
      %v4659 = vsel %vm3316, %v4654, %v4658
      %v4660 = vshrl.u32 %v4646, 16
      %v4662 = vor.u32 %v4660, %v4658
      %v4664 = vshll.u32 %v4647, 16
      %v4666 = vrot.slane %v4664, 1
      %v4667 = vsel %vm3316, %v4662, %v4666
      %v4668 = vshrl.u32 %v4647, 16
      %v4670 = vor.u32 %v4668, %v4666
      %v4690 = vunpack.c.l.b16 %v4619
      %v4691 = vunpack.c.l.b16 %v4620
      %v4692 = vunpack.c.l.b16 %v4621
      %v4693 = vunpack.c.l.b16 %v4622
      %v4694 = vunpack.c.l.b16 %v4623
      %v4695 = vunpack.c.l.b16 %v4624
      %v4696 = vunpack.c.l.b16 %v4625
      %v4697 = vunpack.c.l.b16 %v4626
      %v4698 = vunpack.c.l.b16 %v4627
      %v4699 = vunpack.c.l.b16 %v4628
      %v4700 = vunpack.c.l.b16 %v4629
      %v4701 = vunpack.c.l.b16 %v4630
      %v4702 = vunpack.c.l.b16 %v4631
      %v4703 = vunpack.c.l.b16 %v4632
      %v4704 = vunpack.c.l.b16 %v4633
      %v4705 = vunpack.c.l.b16 %v4634
      %v4706 = vpack.c.b16 %v4691, %v4690
      %v4707 = vpack.c.b16 %v4693, %v4692
      %v4708 = vpack.c.b16 %v4695, %v4694
      %v4709 = vpack.c.b16 %v4697, %v4696
      %v4710 = vpack.c.b16 %v4699, %v4698
      %v4711 = vpack.c.b16 %v4701, %v4700
      %v4712 = vpack.c.b16 %v4703, %v4702
      %v4713 = vpack.c.b16 %v4705, %v4704
      %4722 = vmatprep.subr.bf16.mxu0 0
      %4723 = vmatpush1.bf16.msra.mxu0 %v4713
      %4724 = vmatprep.subr.bf16.mxu0 0
      %4725 = vmatpush1.bf16.msra.mxu0 %v4712
      %4726 = vmatprep.subr.bf16.mxu0 0
      %4727 = vmatpush1.bf16.msra.mxu0 %v4711
      %4728 = vmatprep.subr.bf16.mxu0 0
      %4729 = vmatpush1.bf16.msra.mxu0 %v4710
      %4730 = vmatprep.subr.bf16.mxu0 0
      %4731 = vmatpush1.bf16.msra.mxu0 %v4709
      %4732 = vmatprep.subr.bf16.mxu0 0
      %4733 = vmatpush1.bf16.msra.mxu0 %v4708
      %4734 = vmatprep.subr.bf16.mxu0 0
      %4735 = vmatpush1.bf16.msra.mxu0 %v4707
      %4736 = vmatprep.subr.bf16.mxu0 0
      %4737 = vmatpush1.bf16.msra.mxu0 %v4706
      %4738 = vmatprep.subr.bf16.mxu0 0
      %4739 = vmatpush2.bf16.msra.mxu0 0
      %4740 = vmatprep.subr.bf16.mxu0 0
      %4741 = vmatpush2.bf16.msra.mxu0 0
      %4742 = vmatprep.subr.bf16.mxu0 0
      %4743 = vmatpush2.bf16.msra.mxu0 0
      %4744 = vmatprep.subr.bf16.mxu0 0
      %4745 = vmatpush2.bf16.msra.mxu0 0
      %4746 = vmatprep.subr.bf16.mxu0 0
      %4747 = vmatpush2.bf16.msra.mxu0 0
      %4748 = vmatprep.subr.bf16.mxu0 0
      %4749 = vmatpush2.bf16.msra.mxu0 0
      %4750 = vmatprep.subr.bf16.mxu0 0
      %4751 = vmatpush2.bf16.msra.mxu0 0
      %4752 = vmatprep.subr.bf16.mxu0 0
      %4753 = vmatpush2.bf16.msra.mxu0 0
      %4754 = vmatprep.mubr.bf16.mxu0 0
      %4755 = vmatmul.mubr.bf16.gmra.mxu0 %v4659
      %v4756 = vpop.f32.mrf.mxu0
      %v4757 = vadd.f32 0.0, %v4756
      %v4758 = vpop.f32.mrf.mxu0
      %v4759 = vpop.f32.mrf.mxu0
      %v4760 = vadd.f32 0.0, %v4759
      %v4761 = vpop.f32.mrf.mxu0
      %4762 = vmatprep.mubr.bf16.mxu0 0
      %4763 = vmatmul.mubr.bf16.gmra.mxu0 %v4667
      %v4764 = vpop.f32.mrf.mxu0
      %v4765 = vadd.f32 0.0, %v4764
      %v4766 = vpop.f32.mrf.mxu0
      %v4767 = vpop.f32.mrf.mxu0
      %v4768 = vadd.f32 0.0, %v4767
      %v4769 = vpop.f32.mrf.mxu0
      %4770 = vmatprep.mubr.bf16.mxu0 0
      %4771 = vmatmul.mubr.bf16.gmra.mxu0 %v4670
      %v4772 = vpop.f32.mrf.mxu0
      %v4773 = vadd.f32 0.0, %v4772
      %v4774 = vpop.f32.mrf.mxu0
      %v4775 = vpop.f32.mrf.mxu0
      %v4776 = vpop.f32.mrf.mxu0
      %4777 = vdwg.mxu0
      %v4779 = vunpack.c.l.b16 %v4600
      %v4780 = vpack.c.b16 %v4779, %v4779
      %v4800 = vunpack.c.l.b16 %v4601
      %v4801 = vunpack.c.l.b16 %v4602
      %v4802 = vunpack.c.l.b16 %v4603
      %v4803 = vunpack.c.l.b16 %v4604
      %v4804 = vunpack.c.l.b16 %v4605
      %v4805 = vunpack.c.l.b16 %v4606
      %v4806 = vunpack.c.l.b16 %v4607
      %v4807 = vunpack.c.l.b16 %v4608
      %v4808 = vunpack.c.l.b16 %v4609
      %v4809 = vunpack.c.l.b16 %v4610
      %v4810 = vunpack.c.l.b16 %v4611
      %v4811 = vunpack.c.l.b16 %v4612
      %v4812 = vunpack.c.l.b16 %v4613
      %v4813 = vunpack.c.l.b16 %v4614
      %v4814 = vunpack.c.l.b16 %v4615
      %v4815 = vunpack.c.l.b16 %v4616
      %v4816 = vpack.c.b16 %v4801, %v4800
      %v4817 = vpack.c.b16 %v4803, %v4802
      %v4818 = vpack.c.b16 %v4805, %v4804
      %v4819 = vpack.c.b16 %v4807, %v4806
      %v4820 = vpack.c.b16 %v4809, %v4808
      %v4821 = vpack.c.b16 %v4811, %v4810
      %v4822 = vpack.c.b16 %v4813, %v4812
      %v4823 = vpack.c.b16 %v4815, %v4814
      %4832 = vmatprep.subr.bf16.mxu0 0
      %4833 = vmatpush1.bf16.msra.mxu0 %v4823
      %4834 = vmatprep.subr.bf16.mxu0 0
      %4835 = vmatpush1.bf16.msra.mxu0 %v4822
      %4836 = vmatprep.subr.bf16.mxu0 0
      %4837 = vmatpush1.bf16.msra.mxu0 %v4821
      %4838 = vmatprep.subr.bf16.mxu0 0
      %4839 = vmatpush1.bf16.msra.mxu0 %v4820
      %4840 = vmatprep.subr.bf16.mxu0 0
      %4841 = vmatpush1.bf16.msra.mxu0 %v4819
      %4842 = vmatprep.subr.bf16.mxu0 0
      %4843 = vmatpush1.bf16.msra.mxu0 %v4818
      %4844 = vmatprep.subr.bf16.mxu0 0
      %4845 = vmatpush1.bf16.msra.mxu0 %v4817
      %4846 = vmatprep.subr.bf16.mxu0 0
      %4847 = vmatpush1.bf16.msra.mxu0 %v4816
      %4848 = vmatprep.subr.bf16.mxu0 0
      %4849 = vmatpush2.bf16.msra.mxu0 0
      %4850 = vmatprep.subr.bf16.mxu0 0
      %4851 = vmatpush2.bf16.msra.mxu0 0
      %4852 = vmatprep.subr.bf16.mxu0 0
      %4853 = vmatpush2.bf16.msra.mxu0 0
      %4854 = vmatprep.subr.bf16.mxu0 0
      %4855 = vmatpush2.bf16.msra.mxu0 0
      %4856 = vmatprep.subr.bf16.mxu0 0
      %4857 = vmatpush2.bf16.msra.mxu0 0
      %4858 = vmatprep.subr.bf16.mxu0 0
      %4859 = vmatpush2.bf16.msra.mxu0 0
      %4860 = vmatprep.subr.bf16.mxu0 0
      %4861 = vmatpush2.bf16.msra.mxu0 0
      %4862 = vmatprep.subr.bf16.mxu0 0
      %4863 = vmatpush2.bf16.msra.mxu0 0
      %4864 = vmatprep.mubr.bf16.mxu0 0
      %4865 = vmatmul.mubr.bf16.gmra.mxu0 %v4645
      %v4866 = vpop.f32.mrf.mxu0
      %v4867 = vadd.f32 %v4757, %v4866
      %v4868 = vpop.f32.mrf.mxu0
      %v4869 = vpop.f32.mrf.mxu0
      %v4870 = vadd.f32 %v4760, %v4869
      %v4871 = vpop.f32.mrf.mxu0
      %4872 = vmatprep.mubr.bf16.mxu0 0
      %4873 = vmatmul.mubr.bf16.gmra.mxu0 %v4646
      %v4874 = vpop.f32.mrf.mxu0
      %v4875 = vadd.f32 %v4765, %v4874
      %v4876 = vpop.f32.mrf.mxu0
      %v4877 = vpop.f32.mrf.mxu0
      %v4878 = vadd.f32 %v4768, %v4877
      %v4879 = vpop.f32.mrf.mxu0
      %4880 = vmatprep.mubr.bf16.mxu0 0
      %4881 = vmatmul.mubr.bf16.gmra.mxu0 %v4780
      %v4882 = vpop.f32.mrf.mxu0
      %v4883 = vadd.f32 %v4773, %v4882
      %v4884 = vpop.f32.mrf.mxu0
      %v4885 = vpop.f32.mrf.mxu0
      %v4886 = vpop.f32.mrf.mxu0
      %4887 = vdwg.mxu0
      %v4888 = vld [vmem:[#allocation4] sm:$0x8]
      %v4889 = vld [vmem:[#allocation4 + $0x4] sm:$0xf]
      %v4890 = vld [vmem:[#allocation4 + $0x8] sm:$0xf]
      %v4891 = vld [vmem:[#allocation4 + $0xc] sm:$0xf]
      %v4892 = vld [vmem:[#allocation4 + $0x10] sm:$0xf]
      %v4893 = vld [vmem:[#allocation4 + $0x14] sm:$0x1]
      %s4894 = scalar_lea.vmem %s5, 128
      %v4895 = vld [vmem:[%s4894] sm:$0xf]
      %v4896 = vld [vmem:[%s4894 + $0x4] sm:$0xf]
      %v4897 = vld [vmem:[%s4894 + $0x8] sm:$0xf]
      %v4898 = vld [vmem:[%s4894 + $0xc] sm:$0xf]
      %v4899 = vld [vmem:[%s4894 + $0x10] sm:$0xf]
      %v4900 = vld [vmem:[%s4894 + $0x14] sm:$0xf]
      %v4901 = vld [vmem:[%s4894 + $0x18] sm:$0xf]
      %v4902 = vld [vmem:[%s4894 + $0x1c] sm:$0xf]
      %v4903 = vld [vmem:[%s4894 + $0x20] sm:$0xf]
      %v4904 = vld [vmem:[%s4894 + $0x24] sm:$0xf]
      %v4905 = vld [vmem:[%s4894 + $0x28] sm:$0xf]
      %v4906 = vld [vmem:[%s4894 + $0x2c] sm:$0xf]
      %v4907 = vld [vmem:[%s4894 + $0x30] sm:$0xf]
      %v4908 = vld [vmem:[%s4894 + $0x34] sm:$0xf]
      %v4909 = vld [vmem:[%s4894 + $0x38] sm:$0xf]
      %v4910 = vld [vmem:[%s4894 + $0x3c] sm:$0xf]
      %v4917 = vunpack.c.l.b16 %v4888
      %v4918 = vunpack.c.l.b16 %v4889
      %v4919 = vunpack.c.l.b16 %v4890
      %v4920 = vunpack.c.l.b16 %v4891
      %v4921 = vunpack.c.l.b16 %v4892
      %v4922 = vunpack.c.l.b16 %v4893
      %v4923 = vpack.c.b16 %v4918, %v4917
      %v4924 = vpack.c.b16 %v4920, %v4919
      %v4925 = vpack.c.b16 %v4922, %v4921
      %vm4926 = vcmask 1044480
      %v4927 = vrot.slane %v4923, 3
      %v4928 = vrot.slane %v4924, 3
      %v4929 = vsel %vm4926, %v4927, %v4928
      %v4930 = vrot.slane %v4925, 3
      %v4931 = vsel %vm4926, %v4928, %v4930
      %v4951 = vunpack.c.l.b16 %v4895
      %v4952 = vunpack.c.l.b16 %v4896
      %v4953 = vunpack.c.l.b16 %v4897
      %v4954 = vunpack.c.l.b16 %v4898
      %v4955 = vunpack.c.l.b16 %v4899
      %v4956 = vunpack.c.l.b16 %v4900
      %v4957 = vunpack.c.l.b16 %v4901
      %v4958 = vunpack.c.l.b16 %v4902
      %v4959 = vunpack.c.l.b16 %v4903
      %v4960 = vunpack.c.l.b16 %v4904
      %v4961 = vunpack.c.l.b16 %v4905
      %v4962 = vunpack.c.l.b16 %v4906
      %v4963 = vunpack.c.l.b16 %v4907
      %v4964 = vunpack.c.l.b16 %v4908
      %v4965 = vunpack.c.l.b16 %v4909
      %v4966 = vunpack.c.l.b16 %v4910
      %v4967 = vpack.c.b16 %v4952, %v4951
      %v4968 = vpack.c.b16 %v4954, %v4953
      %v4969 = vpack.c.b16 %v4956, %v4955
      %v4970 = vpack.c.b16 %v4958, %v4957
      %v4971 = vpack.c.b16 %v4960, %v4959
      %v4972 = vpack.c.b16 %v4962, %v4961
      %v4973 = vpack.c.b16 %v4964, %v4963
      %v4974 = vpack.c.b16 %v4966, %v4965
      %4983 = vmatprep.subr.bf16.mxu0 0
      %4984 = vmatpush1.bf16.msra.mxu0 %v4974
      %4985 = vmatprep.subr.bf16.mxu0 0
      %4986 = vmatpush1.bf16.msra.mxu0 %v4973
      %4987 = vmatprep.subr.bf16.mxu0 0
      %4988 = vmatpush1.bf16.msra.mxu0 %v4972
      %4989 = vmatprep.subr.bf16.mxu0 0
      %4990 = vmatpush1.bf16.msra.mxu0 %v4971
      %4991 = vmatprep.subr.bf16.mxu0 0
      %4992 = vmatpush1.bf16.msra.mxu0 %v4970
      %4993 = vmatprep.subr.bf16.mxu0 0
      %4994 = vmatpush1.bf16.msra.mxu0 %v4969
      %4995 = vmatprep.subr.bf16.mxu0 0
      %4996 = vmatpush1.bf16.msra.mxu0 %v4968
      %4997 = vmatprep.subr.bf16.mxu0 0
      %4998 = vmatpush1.bf16.msra.mxu0 %v4967
      %4999 = vmatprep.subr.bf16.mxu0 0
      %5000 = vmatpush2.bf16.msra.mxu0 0
      %5001 = vmatprep.subr.bf16.mxu0 0
      %5002 = vmatpush2.bf16.msra.mxu0 0
      %5003 = vmatprep.subr.bf16.mxu0 0
      %5004 = vmatpush2.bf16.msra.mxu0 0
      %5005 = vmatprep.subr.bf16.mxu0 0
      %5006 = vmatpush2.bf16.msra.mxu0 0
      %5007 = vmatprep.subr.bf16.mxu0 0
      %5008 = vmatpush2.bf16.msra.mxu0 0
      %5009 = vmatprep.subr.bf16.mxu0 0
      %5010 = vmatpush2.bf16.msra.mxu0 0
      %5011 = vmatprep.subr.bf16.mxu0 0
      %5012 = vmatpush2.bf16.msra.mxu0 0
      %5013 = vmatprep.subr.bf16.mxu0 0
      %5014 = vmatpush2.bf16.msra.mxu0 0
      %5015 = vmatprep.mubr.bf16.mxu0 0
      %5016 = vmatmul.mubr.bf16.gmra.mxu0 %v4929
      %v5017 = vpop.f32.mrf.mxu0
      %v5018 = vadd.f32 0.0, %v5017
      %v5019 = vpop.f32.mrf.mxu0
      %v5020 = vpop.f32.mrf.mxu0
      %v5021 = vadd.f32 0.0, %v5020
      %v5022 = vpop.f32.mrf.mxu0
      %5023 = vmatprep.mubr.bf16.mxu0 0
      %5024 = vmatmul.mubr.bf16.gmra.mxu0 %v4931
      %v5025 = vpop.f32.mrf.mxu0
      %v5026 = vadd.f32 0.0, %v5025
      %v5027 = vpop.f32.mrf.mxu0
      %v5028 = vpop.f32.mrf.mxu0
      %v5029 = vadd.f32 0.0, %v5028
      %v5030 = vpop.f32.mrf.mxu0
      %5031 = vmatprep.mubr.bf16.mxu0 0
      %5032 = vmatmul.mubr.bf16.gmra.mxu0 %v4930
      %v5033 = vpop.f32.mrf.mxu0
      %v5034 = vadd.f32 0.0, %v5033
      %v5035 = vpop.f32.mrf.mxu0
      %v5036 = vpop.f32.mrf.mxu0
      %v5037 = vpop.f32.mrf.mxu0
      %5038 = vdwg.mxu0
      %v5039 = vadd.f32 %v4867, %v5018
      %v5040 = vadd.f32 %v4870, %v5021
      %v5041 = vadd.f32 %v4875, %v5026
      %v5042 = vadd.f32 %v4878, %v5029
      %v5043 = vadd.f32 %v4883, %v5034
      %v5044 = vld [vmem:[#allocation4 + $0x14] sm:$0x3]
      %s5045 = scalar_lea.vmem %s5, 192
      %v5046 = vld [vmem:[%s5045] sm:$0xf]
      %v5047 = vld [vmem:[%s5045 + $0x4] sm:$0xf]
      %v5048 = vld [vmem:[%s5045 + $0x8] sm:$0xf]
      %v5049 = vld [vmem:[%s5045 + $0xc] sm:$0xf]
      %v5050 = vld [vmem:[%s5045 + $0x10] sm:$0xf]
      %v5051 = vld [vmem:[%s5045 + $0x14] sm:$0xf]
      %v5052 = vld [vmem:[%s5045 + $0x18] sm:$0xf]
      %v5053 = vld [vmem:[%s5045 + $0x1c] sm:$0xf]
      %v5054 = vld [vmem:[%s5045 + $0x20] sm:$0xf]
      %v5055 = vld [vmem:[%s5045 + $0x24] sm:$0xf]
      %v5056 = vld [vmem:[%s5045 + $0x28] sm:$0xf]
      %v5057 = vld [vmem:[%s5045 + $0x2c] sm:$0xf]
      %v5058 = vld [vmem:[%s5045 + $0x30] sm:$0xf]
      %v5059 = vld [vmem:[%s5045 + $0x34] sm:$0xf]
      %v5060 = vld [vmem:[%s5045 + $0x38] sm:$0xf]
      %v5061 = vld [vmem:[%s5045 + $0x3c] sm:$0xf]
      %v5063 = vunpack.c.l.b16 %v5044
      %v5064 = vpack.c.b16 %v5063, %v4921
      %vm5065 = vsmask.f32 4352
      %v5067 = vshrl.u32 %v4923, 16
      %v5069 = vrot.slane %v5067, 3
      %v5070 = vshll.u32 %v4923, 16
      %v5072 = vrot.slane %v5070, 4
      %v5073 = vor.u32 %v5069, %v5072
      %v5075 = vshrl.u32 %v4924, 16
      %v5077 = vrot.slane %v5075, 3
      %v5078 = vshll.u32 %v4924, 16
      %v5080 = vrot.slane %v5078, 4
      %v5081 = vor.u32 %v5077, %v5080
      %v5082 = vsel %vm5065, %v5073, %v5081
      %v5084 = vshrl.u32 %v5064, 16
      %v5086 = vrot.slane %v5084, 3
      %v5087 = vshll.u32 %v5064, 16
      %v5089 = vrot.slane %v5087, 4
      %v5090 = vor.u32 %v5086, %v5089
      %v5091 = vsel %vm5065, %v5081, %v5090
      %v5111 = vunpack.c.l.b16 %v5046
      %v5112 = vunpack.c.l.b16 %v5047
      %v5113 = vunpack.c.l.b16 %v5048
      %v5114 = vunpack.c.l.b16 %v5049
      %v5115 = vunpack.c.l.b16 %v5050
      %v5116 = vunpack.c.l.b16 %v5051
      %v5117 = vunpack.c.l.b16 %v5052
      %v5118 = vunpack.c.l.b16 %v5053
      %v5119 = vunpack.c.l.b16 %v5054
      %v5120 = vunpack.c.l.b16 %v5055
      %v5121 = vunpack.c.l.b16 %v5056
      %v5122 = vunpack.c.l.b16 %v5057
      %v5123 = vunpack.c.l.b16 %v5058
      %v5124 = vunpack.c.l.b16 %v5059
      %v5125 = vunpack.c.l.b16 %v5060
      %v5126 = vunpack.c.l.b16 %v5061
      %v5127 = vpack.c.b16 %v5112, %v5111
      %v5128 = vpack.c.b16 %v5114, %v5113
      %v5129 = vpack.c.b16 %v5116, %v5115
      %v5130 = vpack.c.b16 %v5118, %v5117
      %v5131 = vpack.c.b16 %v5120, %v5119
      %v5132 = vpack.c.b16 %v5122, %v5121
      %v5133 = vpack.c.b16 %v5124, %v5123
      %v5134 = vpack.c.b16 %v5126, %v5125
      %5143 = vmatprep.subr.bf16.mxu0 0
      %5144 = vmatpush1.bf16.msra.mxu0 %v5134
      %5145 = vmatprep.subr.bf16.mxu0 0
      %5146 = vmatpush1.bf16.msra.mxu0 %v5133
      %5147 = vmatprep.subr.bf16.mxu0 0
      %5148 = vmatpush1.bf16.msra.mxu0 %v5132
      %5149 = vmatprep.subr.bf16.mxu0 0
      %5150 = vmatpush1.bf16.msra.mxu0 %v5131
      %5151 = vmatprep.subr.bf16.mxu0 0
      %5152 = vmatpush1.bf16.msra.mxu0 %v5130
      %5153 = vmatprep.subr.bf16.mxu0 0
      %5154 = vmatpush1.bf16.msra.mxu0 %v5129
      %5155 = vmatprep.subr.bf16.mxu0 0
      %5156 = vmatpush1.bf16.msra.mxu0 %v5128
      %5157 = vmatprep.subr.bf16.mxu0 0
      %5158 = vmatpush1.bf16.msra.mxu0 %v5127
      %5159 = vmatprep.subr.bf16.mxu0 0
      %5160 = vmatpush2.bf16.msra.mxu0 0
      %5161 = vmatprep.subr.bf16.mxu0 0
      %5162 = vmatpush2.bf16.msra.mxu0 0
      %5163 = vmatprep.subr.bf16.mxu0 0
      %5164 = vmatpush2.bf16.msra.mxu0 0
      %5165 = vmatprep.subr.bf16.mxu0 0
      %5166 = vmatpush2.bf16.msra.mxu0 0
      %5167 = vmatprep.subr.bf16.mxu0 0
      %5168 = vmatpush2.bf16.msra.mxu0 0
      %5169 = vmatprep.subr.bf16.mxu0 0
      %5170 = vmatpush2.bf16.msra.mxu0 0
      %5171 = vmatprep.subr.bf16.mxu0 0
      %5172 = vmatpush2.bf16.msra.mxu0 0
      %5173 = vmatprep.subr.bf16.mxu0 0
      %5174 = vmatpush2.bf16.msra.mxu0 0
      %5175 = vmatprep.mubr.bf16.mxu0 0
      %5176 = vmatmul.mubr.bf16.gmra.mxu0 %v5082
      %v5177 = vpop.f32.mrf.mxu0
      %v5178 = vadd.f32 0.0, %v5177
      %v5179 = vpop.f32.mrf.mxu0
      %v5180 = vpop.f32.mrf.mxu0
      %v5181 = vadd.f32 0.0, %v5180
      %v5182 = vpop.f32.mrf.mxu0
      %5183 = vmatprep.mubr.bf16.mxu0 0
      %5184 = vmatmul.mubr.bf16.gmra.mxu0 %v5091
      %v5185 = vpop.f32.mrf.mxu0
      %v5186 = vadd.f32 0.0, %v5185
      %v5187 = vpop.f32.mrf.mxu0
      %v5188 = vpop.f32.mrf.mxu0
      %v5189 = vadd.f32 0.0, %v5188
      %v5190 = vpop.f32.mrf.mxu0
      %5191 = vmatprep.mubr.bf16.mxu0 0
      %5192 = vmatmul.mubr.bf16.gmra.mxu0 %v5090
      %v5193 = vpop.f32.mrf.mxu0
      %v5194 = vadd.f32 0.0, %v5193
      %v5195 = vpop.f32.mrf.mxu0
      %v5196 = vpop.f32.mrf.mxu0
      %v5197 = vpop.f32.mrf.mxu0
      %5198 = vdwg.mxu0
      %v5199 = vadd.f32 %v5039, %v5178
      %v5200 = vadd.f32 %v5040, %v5181
      %v5201 = vadd.f32 %v5041, %v5186
      %v5202 = vadd.f32 %v5042, %v5189
      %v5203 = vadd.f32 %v5043, %v5194
      %v5204 = vld [vmem:[%s6] sm:$0x1]
      %v5206 = vlaneseq
      %v5207 = vshrl.u32 %v5206, 7
      %v5208 = vsub.s32 0, %v5207
      %v5209 = vrot.slane %v5204, %v5208
      %v5211 = vadd.f32 %v5199, %v5209
      %v5212 = vadd.f32 %v5200, %v5209
      %v5213 = vadd.f32 %v5201, %v5209
      %v5214 = vadd.f32 %v5202, %v5209
      %v5215 = vadd.f32 %v5203, %v5209
      %v5216 = vmax.f32 %v5211, 0.0
      %v5217 = vmax.f32 %v5212, 0.0
      %v5218 = vmax.f32 %v5213, 0.0
      %v5219 = vmax.f32 %v5214, 0.0
      %v5220 = vmax.f32 %v5215, 0.0
      %v5221 = vpack.c.bf16 %v5217, %v5216
      %v5222 = vpack.c.bf16 %v5219, %v5218
      %v5223 = vpack.c.bf16 %v5220, %v5220
      %v5227 = vunpack.c.l.b16 %v5221
      %v5228 = vunpack.c.h.b16 %v5221
      %v5229 = vunpack.c.l.b16 %v5222
      %v5230 = vunpack.c.h.b16 %v5222
      %v5231 = vunpack.c.l.b16 %v5223
      %v5232 = vpack.c.b16 %v5227, %v5227
      %v5233 = vpack.c.b16 %v5228, %v5228
      %v5234 = vpack.c.b16 %v5229, %v5229
      %v5235 = vpack.c.b16 %v5230, %v5230
      %v5236 = vpack.c.b16 %v5231, %v5231
      %5242 = vst [vmem:[#allocation2] sm:$0xf] %v5232
      %5243 = vst [vmem:[#allocation2 + $0x4] sm:$0xf] %v5233
      %5244 = vst [vmem:[#allocation2 + $0x8] sm:$0xf] %v5234
      %5245 = vst [vmem:[#allocation2 + $0xc] sm:$0xf] %v5235
      %5246 = vst [vmem:[#allocation2 + $0x10] sm:$0x3] %v5236
      %5247 = vst [vmem:[#allocation5] sm:$0xff] 0
      %5248 = vst [vmem:[#allocation5 + $0x8] sm:$0xff] 0
      %v5249 = vld [vmem:[#allocation2] sm:$0x1]
      %v5251 = vshrl.u32 %v5249, 16
      %v5253 = vrot.slane %v5251, 4
      %v5254 = vrot.slane %v5253, 4
      %v5256 = vmax.bf16 %v5249, %v5254
      %v5257 = vld [vmem:[#allocation2] sm:$0x8]
      %v5259 = vshrl.u32 %v5257, 16
      %v5261 = vrot.slane %v5259, 4
      %v5262 = vrot.slane %v5261, 4
      %v5264 = vmax.bf16 %v5257, %v5262
      %v5266 = vrot.slane %v5264, 7
      %v5267 = vrot.slane %v5266, 4
      %v5269 = vmax.bf16 %v5256, %v5267
      %vm5270 = vcmask 1040384
      %vm5271 = vsmask.f32 256
      %vm5272 = vmand %vm5270, %vm5271
      %v5273 = vld [vmem:[#allocation5] sm:$0x1]
      %v5274 = vsel %vm5272, %v5269, %v5273
      %5275 = vst [vmem:[#allocation5] sm:$0x1] %v5274
      %v5276 = vld [vmem:[#allocation2] sm:$0x2]
      %v5278 = vshrl.u32 %v5276, 16
      %v5280 = vrot.slane %v5278, 4
      %v5281 = vrot.slane %v5280, 4
      %v5283 = vmax.bf16 %v5276, %v5281
      %v5284 = vld [vmem:[#allocation2 + $0x4] sm:$0x1]
      %v5286 = vshrl.u32 %v5284, 16
      %v5288 = vrot.slane %v5286, 4
      %v5289 = vrot.slane %v5288, 4
      %v5291 = vmax.bf16 %v5284, %v5289
      %v5293 = vrot.slane %v5291, 7
      %v5295 = vmax.bf16 %v5283, %v5293
      %v5297 = vrot.slane %v5295, 5
      %v5298 = vrot.slane %v5297, 4
      %v5300 = vld [vmem:[#allocation5 + $0x4] sm:$0x1]
      %v5301 = vsel %vm5272, %v5298, %v5300
      %5302 = vst [vmem:[#allocation5 + $0x4] sm:$0x1] %v5301
      %v5303 = vld [vmem:[#allocation2 + $0x4] sm:$0x4]
      %v5305 = vshrl.u32 %v5303, 16
      %v5307 = vrot.slane %v5305, 4
      %v5308 = vrot.slane %v5307, 4
      %v5310 = vmax.bf16 %v5303, %v5308
      %v5311 = vld [vmem:[#allocation2 + $0x8] sm:$0x2]
      %v5313 = vshrl.u32 %v5311, 16
      %v5315 = vrot.slane %v5313, 4
      %v5316 = vrot.slane %v5315, 4
      %v5318 = vmax.bf16 %v5311, %v5316
      %v5320 = vrot.slane %v5318, 7
      %v5322 = vmax.bf16 %v5310, %v5320
      %v5324 = vrot.slane %v5322, 6
      %v5325 = vrot.slane %v5324, 4
      %v5327 = vld [vmem:[#allocation5 + $0x8] sm:$0x1]
      %v5328 = vsel %vm5272, %v5325, %v5327
      %5329 = vst [vmem:[#allocation5 + $0x8] sm:$0x1] %v5328
      %v5330 = vld [vmem:[#allocation2 + $0x4] sm:$0x8]
      %v5332 = vshrl.u32 %v5330, 16
      %v5334 = vrot.slane %v5332, 4
      %v5335 = vrot.slane %v5334, 4
      %v5337 = vmax.bf16 %v5330, %v5335
      %v5338 = vld [vmem:[#allocation2 + $0x8] sm:$0x4]
      %v5340 = vshrl.u32 %v5338, 16
      %v5342 = vrot.slane %v5340, 4
      %v5343 = vrot.slane %v5342, 4
      %v5345 = vmax.bf16 %v5338, %v5343
      %v5347 = vrot.slane %v5345, 7
      %v5349 = vmax.bf16 %v5337, %v5347
      %v5351 = vrot.slane %v5349, 7
      %v5352 = vrot.slane %v5351, 4
      %v5354 = vld [vmem:[#allocation5 + $0xc] sm:$0x1]
      %v5355 = vsel %vm5272, %v5352, %v5354
      %5356 = vst [vmem:[#allocation5 + $0xc] sm:$0x1] %v5355
      %v5357 = vld [vmem:[#allocation5] sm:$0xff]
      %v5358 = vld [vmem:[#allocation5 + $0x8] sm:$0xff]
      %v5359 = vld [vmem:[%s9] sm:$0xf]
      %v5360 = vld [vmem:[%s9 + $0x4] sm:$0xf]
      %v5361 = vld [vmem:[%s9 + $0x8] sm:$0xf]
      %v5362 = vld [vmem:[%s9 + $0xc] sm:$0xf]
      %v5363 = vld [vmem:[%s9 + $0x10] sm:$0xf]
      %v5364 = vld [vmem:[%s9 + $0x14] sm:$0xf]
      %v5365 = vld [vmem:[%s9 + $0x18] sm:$0xf]
      %v5366 = vld [vmem:[%s9 + $0x1c] sm:$0xf]
      %v5367 = vld [vmem:[%s9 + $0x20] sm:$0xf]
      %v5368 = vld [vmem:[%s9 + $0x24] sm:$0xf]
      %v5369 = vld [vmem:[%s9 + $0x28] sm:$0xf]
      %v5370 = vld [vmem:[%s9 + $0x2c] sm:$0xf]
      %v5371 = vld [vmem:[%s9 + $0x30] sm:$0xf]
      %v5372 = vld [vmem:[%s9 + $0x34] sm:$0xf]
      %v5373 = vld [vmem:[%s9 + $0x38] sm:$0xf]
      %v5374 = vld [vmem:[%s9 + $0x3c] sm:$0xf]
      %v5375 = vld [vmem:[%s9 + $0x40] sm:$0xf]
      %v5376 = vld [vmem:[%s9 + $0x44] sm:$0xf]
      %v5377 = vld [vmem:[%s9 + $0x48] sm:$0xf]
      %v5378 = vld [vmem:[%s9 + $0x4c] sm:$0xf]
      %v5379 = vld [vmem:[%s9 + $0x50] sm:$0xf]
      %v5380 = vld [vmem:[%s9 + $0x54] sm:$0xf]
      %v5381 = vld [vmem:[%s9 + $0x58] sm:$0xf]
      %v5382 = vld [vmem:[%s9 + $0x5c] sm:$0xf]
      %v5383 = vld [vmem:[%s9 + $0x60] sm:$0xf]
      %v5384 = vld [vmem:[%s9 + $0x64] sm:$0xf]
      %v5385 = vld [vmem:[%s9 + $0x68] sm:$0xf]
      %v5386 = vld [vmem:[%s9 + $0x6c] sm:$0xf]
      %v5387 = vld [vmem:[%s9 + $0x70] sm:$0xf]
      %v5388 = vld [vmem:[%s9 + $0x74] sm:$0xf]
      %v5389 = vld [vmem:[%s9 + $0x78] sm:$0xf]
      %v5390 = vld [vmem:[%s9 + $0x7c] sm:$0xf]
      %v5391 = vld [vmem:[%s9 + $0x80] sm:$0xf]
      %v5392 = vld [vmem:[%s9 + $0x84] sm:$0xf]
      %v5393 = vld [vmem:[%s9 + $0x88] sm:$0xf]
      %v5394 = vld [vmem:[%s9 + $0x8c] sm:$0xf]
      %v5395 = vld [vmem:[%s9 + $0x90] sm:$0xf]
      %v5396 = vld [vmem:[%s9 + $0x94] sm:$0xf]
      %v5397 = vld [vmem:[%s9 + $0x98] sm:$0xf]
      %v5398 = vld [vmem:[%s9 + $0x9c] sm:$0xf]
      %v5399 = vld [vmem:[%s9 + $0xa0] sm:$0xf]
      %v5400 = vld [vmem:[%s9 + $0xa4] sm:$0xf]
      %v5401 = vld [vmem:[%s9 + $0xa8] sm:$0xf]
      %v5402 = vld [vmem:[%s9 + $0xac] sm:$0xf]
      %v5403 = vld [vmem:[%s9 + $0xb0] sm:$0xf]
      %v5404 = vld [vmem:[%s9 + $0xb4] sm:$0xf]
      %v5405 = vld [vmem:[%s9 + $0xb8] sm:$0xf]
      %v5406 = vld [vmem:[%s9 + $0xbc] sm:$0xf]
      %v5407 = vld [vmem:[%s9 + $0xc0] sm:$0xf]
      %v5408 = vld [vmem:[%s9 + $0xc4] sm:$0xf]
      %v5409 = vld [vmem:[%s9 + $0xc8] sm:$0xf]
      %v5410 = vld [vmem:[%s9 + $0xcc] sm:$0xf]
      %v5411 = vld [vmem:[%s9 + $0xd0] sm:$0xf]
      %v5412 = vld [vmem:[%s9 + $0xd4] sm:$0xf]
      %v5413 = vld [vmem:[%s9 + $0xd8] sm:$0xf]
      %v5414 = vld [vmem:[%s9 + $0xdc] sm:$0xf]
      %v5415 = vld [vmem:[%s9 + $0xe0] sm:$0xf]
      %v5416 = vld [vmem:[%s9 + $0xe4] sm:$0xf]
      %v5417 = vld [vmem:[%s9 + $0xe8] sm:$0xf]
      %v5418 = vld [vmem:[%s9 + $0xec] sm:$0xf]
      %v5419 = vld [vmem:[%s9 + $0xf0] sm:$0xf]
      %v5420 = vld [vmem:[%s9 + $0xf4] sm:$0xf]
      %v5421 = vld [vmem:[%s9 + $0xf8] sm:$0xf]
      %v5422 = vld [vmem:[%s9 + $0xfc] sm:$0xf]
      %v5423 = vld [vmem:[%s10] sm:$0x1]
      %v5425 = vlaneseq
      %v5426 = vshrl.u32 %v5425, 7
      %v5427 = vsub.s32 0, %v5426
      %v5428 = vrot.slane %v5423, %v5427
      %v5432 = vunpack.c.l.b16 %v5357
      %v5433 = vunpack.c.h.b16 %v5357
      %v5434 = vunpack.c.l.b16 %v5358
      %v5435 = vunpack.c.h.b16 %v5358
      %v5436 = vpack.c.b16 %v5432, %v5432
      %v5437 = vpack.c.b16 %v5433, %v5433
      %v5438 = vpack.c.b16 %v5434, %v5434
      %v5439 = vpack.c.b16 %v5435, %v5435
      %v5508 = vunpack.c.l.b16 %v5359
      %v5509 = vunpack.c.l.b16 %v5360
      %v5510 = vunpack.c.l.b16 %v5361
      %v5511 = vunpack.c.l.b16 %v5362
      %v5512 = vunpack.c.l.b16 %v5363
      %v5513 = vunpack.c.l.b16 %v5364
      %v5514 = vunpack.c.l.b16 %v5365
      %v5515 = vunpack.c.l.b16 %v5366
      %v5516 = vunpack.c.l.b16 %v5367
      %v5517 = vunpack.c.l.b16 %v5368
      %v5518 = vunpack.c.l.b16 %v5369
      %v5519 = vunpack.c.l.b16 %v5370
      %v5520 = vunpack.c.l.b16 %v5371
      %v5521 = vunpack.c.l.b16 %v5372
      %v5522 = vunpack.c.l.b16 %v5373
      %v5523 = vunpack.c.l.b16 %v5374
      %v5524 = vunpack.c.l.b16 %v5375
      %v5525 = vunpack.c.l.b16 %v5376
      %v5526 = vunpack.c.l.b16 %v5377
      %v5527 = vunpack.c.l.b16 %v5378
      %v5528 = vunpack.c.l.b16 %v5379
      %v5529 = vunpack.c.l.b16 %v5380
      %v5530 = vunpack.c.l.b16 %v5381
      %v5531 = vunpack.c.l.b16 %v5382
      %v5532 = vunpack.c.l.b16 %v5383
      %v5533 = vunpack.c.l.b16 %v5384
      %v5534 = vunpack.c.l.b16 %v5385
      %v5535 = vunpack.c.l.b16 %v5386
      %v5536 = vunpack.c.l.b16 %v5387
      %v5537 = vunpack.c.l.b16 %v5388
      %v5538 = vunpack.c.l.b16 %v5389
      %v5539 = vunpack.c.l.b16 %v5390
      %v5540 = vunpack.c.l.b16 %v5391
      %v5541 = vunpack.c.l.b16 %v5392
      %v5542 = vunpack.c.l.b16 %v5393
      %v5543 = vunpack.c.l.b16 %v5394
      %v5544 = vunpack.c.l.b16 %v5395
      %v5545 = vunpack.c.l.b16 %v5396
      %v5546 = vunpack.c.l.b16 %v5397
      %v5547 = vunpack.c.l.b16 %v5398
      %v5548 = vunpack.c.l.b16 %v5399
      %v5549 = vunpack.c.l.b16 %v5400
      %v5550 = vunpack.c.l.b16 %v5401
      %v5551 = vunpack.c.l.b16 %v5402
      %v5552 = vunpack.c.l.b16 %v5403
      %v5553 = vunpack.c.l.b16 %v5404
      %v5554 = vunpack.c.l.b16 %v5405
      %v5555 = vunpack.c.l.b16 %v5406
      %v5556 = vunpack.c.l.b16 %v5407
      %v5557 = vunpack.c.l.b16 %v5408
      %v5558 = vunpack.c.l.b16 %v5409
      %v5559 = vunpack.c.l.b16 %v5410
      %v5560 = vunpack.c.l.b16 %v5411
      %v5561 = vunpack.c.l.b16 %v5412
      %v5562 = vunpack.c.l.b16 %v5413
      %v5563 = vunpack.c.l.b16 %v5414
      %v5564 = vunpack.c.l.b16 %v5415
      %v5565 = vunpack.c.l.b16 %v5416
      %v5566 = vunpack.c.l.b16 %v5417
      %v5567 = vunpack.c.l.b16 %v5418
      %v5568 = vunpack.c.l.b16 %v5419
      %v5569 = vunpack.c.l.b16 %v5420
      %v5570 = vunpack.c.l.b16 %v5421
      %v5571 = vunpack.c.l.b16 %v5422
      %v5572 = vpack.c.b16 %v5509, %v5508
      %v5573 = vpack.c.b16 %v5511, %v5510
      %v5574 = vpack.c.b16 %v5513, %v5512
      %v5575 = vpack.c.b16 %v5515, %v5514
      %v5576 = vpack.c.b16 %v5517, %v5516
      %v5577 = vpack.c.b16 %v5519, %v5518
      %v5578 = vpack.c.b16 %v5521, %v5520
      %v5579 = vpack.c.b16 %v5523, %v5522
      %v5580 = vpack.c.b16 %v5525, %v5524
      %v5581 = vpack.c.b16 %v5527, %v5526
      %v5582 = vpack.c.b16 %v5529, %v5528
      %v5583 = vpack.c.b16 %v5531, %v5530
      %v5584 = vpack.c.b16 %v5533, %v5532
      %v5585 = vpack.c.b16 %v5535, %v5534
      %v5586 = vpack.c.b16 %v5537, %v5536
      %v5587 = vpack.c.b16 %v5539, %v5538
      %v5588 = vpack.c.b16 %v5541, %v5540
      %v5589 = vpack.c.b16 %v5543, %v5542
      %v5590 = vpack.c.b16 %v5545, %v5544
      %v5591 = vpack.c.b16 %v5547, %v5546
      %v5592 = vpack.c.b16 %v5549, %v5548
      %v5593 = vpack.c.b16 %v5551, %v5550
      %v5594 = vpack.c.b16 %v5553, %v5552
      %v5595 = vpack.c.b16 %v5555, %v5554
      %v5596 = vpack.c.b16 %v5557, %v5556
      %v5597 = vpack.c.b16 %v5559, %v5558
      %v5598 = vpack.c.b16 %v5561, %v5560
      %v5599 = vpack.c.b16 %v5563, %v5562
      %v5600 = vpack.c.b16 %v5565, %v5564
      %v5601 = vpack.c.b16 %v5567, %v5566
      %v5602 = vpack.c.b16 %v5569, %v5568
      %v5603 = vpack.c.b16 %v5571, %v5570
      %5636 = vmatprep.subr.bf16.mxu0 0
      %5637 = vmatpush1.bf16.msra.mxu0 %v5579
      %5638 = vmatprep.subr.bf16.mxu0 0
      %5639 = vmatpush1.bf16.msra.mxu0 %v5578
      %5640 = vmatprep.subr.bf16.mxu0 0
      %5641 = vmatpush1.bf16.msra.mxu0 %v5577
      %5642 = vmatprep.subr.bf16.mxu0 0
      %5643 = vmatpush1.bf16.msra.mxu0 %v5576
      %5644 = vmatprep.subr.bf16.mxu0 0
      %5645 = vmatpush1.bf16.msra.mxu0 %v5575
      %5646 = vmatprep.subr.bf16.mxu0 0
      %5647 = vmatpush1.bf16.msra.mxu0 %v5574
      %5648 = vmatprep.subr.bf16.mxu0 0
      %5649 = vmatpush1.bf16.msra.mxu0 %v5573
      %5650 = vmatprep.subr.bf16.mxu0 0
      %5651 = vmatpush1.bf16.msra.mxu0 %v5572
      %5652 = vmatprep.subr.bf16.mxu0 0
      %5653 = vmatpush2.bf16.msra.mxu0 %v5587
      %5654 = vmatprep.subr.bf16.mxu0 0
      %5655 = vmatpush2.bf16.msra.mxu0 %v5586
      %5656 = vmatprep.subr.bf16.mxu0 0
      %5657 = vmatpush2.bf16.msra.mxu0 %v5585
      %5658 = vmatprep.subr.bf16.mxu0 0
      %5659 = vmatpush2.bf16.msra.mxu0 %v5584
      %5660 = vmatprep.subr.bf16.mxu0 0
      %5661 = vmatpush2.bf16.msra.mxu0 %v5583
      %5662 = vmatprep.subr.bf16.mxu0 0
      %5663 = vmatpush2.bf16.msra.mxu0 %v5582
      %5664 = vmatprep.subr.bf16.mxu0 0
      %5665 = vmatpush2.bf16.msra.mxu0 %v5581
      %5666 = vmatprep.subr.bf16.mxu0 0
      %5667 = vmatpush2.bf16.msra.mxu0 %v5580
      %5668 = vmatprep.mubr.bf16.mxu0 %v5437
      %5669 = vmatmul.mubr.bf16.gmra.mxu0 %v5436
      %v5670 = vpop.f32.mrf.mxu0
      %v5671 = vadd.f32 %v5428, %v5670
      %v5672 = vpop.f32.mrf.mxu0
      %v5673 = vpop.f32.mrf.mxu0
      %v5674 = vpop.f32.mrf.mxu0
      %5675 = vdwg.mxu0
      %5676 = vmatprep.subr.bf16.mxu0 0
      %5677 = vmatpush1.bf16.msra.mxu0 %v5595
      %5678 = vmatprep.subr.bf16.mxu0 0
      %5679 = vmatpush1.bf16.msra.mxu0 %v5594
      %5680 = vmatprep.subr.bf16.mxu0 0
      %5681 = vmatpush1.bf16.msra.mxu0 %v5593
      %5682 = vmatprep.subr.bf16.mxu0 0
      %5683 = vmatpush1.bf16.msra.mxu0 %v5592
      %5684 = vmatprep.subr.bf16.mxu0 0
      %5685 = vmatpush1.bf16.msra.mxu0 %v5591
      %5686 = vmatprep.subr.bf16.mxu0 0
      %5687 = vmatpush1.bf16.msra.mxu0 %v5590
      %5688 = vmatprep.subr.bf16.mxu0 0
      %5689 = vmatpush1.bf16.msra.mxu0 %v5589
      %5690 = vmatprep.subr.bf16.mxu0 0
      %5691 = vmatpush1.bf16.msra.mxu0 %v5588
      %5692 = vmatprep.subr.bf16.mxu0 0
      %5693 = vmatpush2.bf16.msra.mxu0 %v5603
      %5694 = vmatprep.subr.bf16.mxu0 0
      %5695 = vmatpush2.bf16.msra.mxu0 %v5602
      %5696 = vmatprep.subr.bf16.mxu0 0
      %5697 = vmatpush2.bf16.msra.mxu0 %v5601
      %5698 = vmatprep.subr.bf16.mxu0 0
      %5699 = vmatpush2.bf16.msra.mxu0 %v5600
      %5700 = vmatprep.subr.bf16.mxu0 0
      %5701 = vmatpush2.bf16.msra.mxu0 %v5599
      %5702 = vmatprep.subr.bf16.mxu0 0
      %5703 = vmatpush2.bf16.msra.mxu0 %v5598
      %5704 = vmatprep.subr.bf16.mxu0 0
      %5705 = vmatpush2.bf16.msra.mxu0 %v5597
      %5706 = vmatprep.subr.bf16.mxu0 0
      %5707 = vmatpush2.bf16.msra.mxu0 %v5596
      %5708 = vmatprep.mubr.bf16.mxu0 %v5439
      %5709 = vmatmul.mubr.bf16.gmra.mxu0 %v5438
      %v5710 = vpop.f32.mrf.mxu0
      %v5711 = vadd.f32 %v5671, %v5710
      %v5712 = vpop.f32.mrf.mxu0
      %v5713 = vpop.f32.mrf.mxu0
      %v5714 = vpop.f32.mrf.mxu0
      %5715 = vdwg.mxu0
      %v5716 = vmax.f32 %v5711, 0.0
      %v5717 = vpack.c.bf16 %v5716, %v5716
      %v5718 = vld [vmem:[%s11] sm:$0xf]
      %v5719 = vld [vmem:[%s11 + $0x4] sm:$0xf]
      %v5720 = vld [vmem:[%s11 + $0x8] sm:$0xf]
      %v5721 = vld [vmem:[%s11 + $0xc] sm:$0xf]
      %v5722 = vld [vmem:[%s11 + $0x10] sm:$0xf]
      %v5723 = vld [vmem:[%s11 + $0x14] sm:$0xf]
      %v5724 = vld [vmem:[%s11 + $0x18] sm:$0xf]
      %v5725 = vld [vmem:[%s11 + $0x1c] sm:$0xf]
      %v5726 = vld [vmem:[%s11 + $0x20] sm:$0xf]
      %v5727 = vld [vmem:[%s11 + $0x24] sm:$0xf]
      %v5728 = vld [vmem:[%s11 + $0x28] sm:$0xf]
      %v5729 = vld [vmem:[%s11 + $0x2c] sm:$0xf]
      %v5730 = vld [vmem:[%s11 + $0x30] sm:$0xf]
      %v5731 = vld [vmem:[%s11 + $0x34] sm:$0xf]
      %v5732 = vld [vmem:[%s11 + $0x38] sm:$0xf]
      %v5733 = vld [vmem:[%s11 + $0x3c] sm:$0xf]
      %v5734 = vld [vmem:[%s12] sm:$0x1]
      %v5736 = vlaneseq
      %v5737 = vshrl.u32 %v5736, 7
      %v5738 = vsub.s32 0, %v5737
      %v5739 = vrot.slane %v5734, %v5738
      %v5757 = vunpack.c.l.b16 %v5718
      %v5758 = vunpack.c.l.b16 %v5719
      %v5759 = vunpack.c.l.b16 %v5720
      %v5760 = vunpack.c.l.b16 %v5721
      %v5761 = vunpack.c.l.b16 %v5722
      %v5762 = vunpack.c.l.b16 %v5723
      %v5763 = vunpack.c.l.b16 %v5724
      %v5764 = vunpack.c.l.b16 %v5725
      %v5765 = vunpack.c.l.b16 %v5726
      %v5766 = vunpack.c.l.b16 %v5727
      %v5767 = vunpack.c.l.b16 %v5728
      %v5768 = vunpack.c.l.b16 %v5729
      %v5769 = vunpack.c.l.b16 %v5730
      %v5770 = vunpack.c.l.b16 %v5731
      %v5771 = vunpack.c.l.b16 %v5732
      %v5772 = vunpack.c.l.b16 %v5733
      %v5773 = vpack.c.b16 %v5758, %v5757
      %v5774 = vpack.c.b16 %v5760, %v5759
      %v5775 = vpack.c.b16 %v5762, %v5761
      %v5776 = vpack.c.b16 %v5764, %v5763
      %v5777 = vpack.c.b16 %v5766, %v5765
      %v5778 = vpack.c.b16 %v5768, %v5767
      %v5779 = vpack.c.b16 %v5770, %v5769
      %v5780 = vpack.c.b16 %v5772, %v5771
      %5789 = vmatprep.subr.bf16.mxu0 0
      %5790 = vmatpush1.bf16.msra.mxu0 %v5780
      %5791 = vmatprep.subr.bf16.mxu0 0
      %5792 = vmatpush1.bf16.msra.mxu0 %v5779
      %5793 = vmatprep.subr.bf16.mxu0 0
      %5794 = vmatpush1.bf16.msra.mxu0 %v5778
      %5795 = vmatprep.subr.bf16.mxu0 0
      %5796 = vmatpush1.bf16.msra.mxu0 %v5777
      %5797 = vmatprep.subr.bf16.mxu0 0
      %5798 = vmatpush1.bf16.msra.mxu0 %v5776
      %5799 = vmatprep.subr.bf16.mxu0 0
      %5800 = vmatpush1.bf16.msra.mxu0 %v5775
      %5801 = vmatprep.subr.bf16.mxu0 0
      %5802 = vmatpush1.bf16.msra.mxu0 %v5774
      %5803 = vmatprep.subr.bf16.mxu0 0
      %5804 = vmatpush1.bf16.msra.mxu0 %v5773
      %5805 = vmatprep.subr.bf16.mxu0 0
      %5806 = vmatpush2.bf16.msra.mxu0 0
      %5807 = vmatprep.subr.bf16.mxu0 0
      %5808 = vmatpush2.bf16.msra.mxu0 0
      %5809 = vmatprep.subr.bf16.mxu0 0
      %5810 = vmatpush2.bf16.msra.mxu0 0
      %5811 = vmatprep.subr.bf16.mxu0 0
      %5812 = vmatpush2.bf16.msra.mxu0 0
      %5813 = vmatprep.subr.bf16.mxu0 0
      %5814 = vmatpush2.bf16.msra.mxu0 0
      %5815 = vmatprep.subr.bf16.mxu0 0
      %5816 = vmatpush2.bf16.msra.mxu0 0
      %5817 = vmatprep.subr.bf16.mxu0 0
      %5818 = vmatpush2.bf16.msra.mxu0 0
      %5819 = vmatprep.subr.bf16.mxu0 0
      %5820 = vmatpush2.bf16.msra.mxu0 0
      %5821 = vmatprep.mubr.bf16.mxu0 0
      %5822 = vmatmul.mubr.bf16.gmra.mxu0 %v5717
      %v5823 = vpop.f32.mrf.mxu0
      %v5824 = vadd.f32 %v5739, %v5823
      %v5825 = vpop.f32.mrf.mxu0
      %v5826 = vpop.f32.mrf.mxu0
      %v5827 = vpop.f32.mrf.mxu0
      %5828 = vdwg.mxu0
      %5829 = vst [vmem:[%s440] sm:$0xff] %v5824
      %p5830 = scmp.lt.s32.totalorder %s24, 1
      %s5831 = scalar_select %p5830, %s24, 1
      %s5832 = smul.addr %s5831, 8
      %s5833 = scalar_lea.vmem %s13, %s5832
      // Predicated region
      $region73: #{cnn32_forward_pallas.1} parent=71 // pred_check
        %p5834 = pneg %p320
      $region74: #{cnn32_forward_pallas.1} parent=71 // pred_check_branch
        %5836 = sbr.rel (%p5834) target = $region76
      $region75: #{cnn32_forward_pallas.1} parent=71 // pred_region
        _
      $region76: #{cnn32_forward_pallas.1} parent=71 // pred_fallthru
        _
    $region72: #{cnn32_forward_pallas.1} parent=5 // pred_fallthru
      _
    %p5837 = scmp.le.s32.totalorder 2, %s19
    // Predicated region
    $region77: #{cnn32_forward_pallas.1} parent=5 // pred_check
      %p5838 = pneg %p5837
    $region78: #{cnn32_forward_pallas.1} parent=5 // pred_check_branch
      %5840 = sbr.rel (%p5838) target = $region80
    $region79: #{cnn32_forward_pallas.1} parent=5 // pred_region
      %s5841 = ssub.s32 %s19, 2
      // Predicated region
      $region81: #{cnn32_forward_pallas.1} parent=79 // pred_check
        %p5842 = pneg %p326
      $region82: #{cnn32_forward_pallas.1} parent=79 // pred_check_branch
        %5844 = sbr.rel (%p5842) target = $region84
      $region83: #{cnn32_forward_pallas.1} parent=79 // pred_region
        %p5845 = scmp.lt.s32.totalorder %s25, 1
        %s5846 = scalar_select %p5845, %s25, 1
        %s5847 = smul.addr %s5846, 8
        %s5848 = scalar_lea.vmem %s13, %s5847
      $region84: #{cnn32_forward_pallas.1} parent=79 // pred_fallthru
        _
    $region80: #{cnn32_forward_pallas.1} parent=5 // pred_fallthru
      _
  $region6: #{cnn32_forward_pallas.1} parent=0 // loop_footer
    %s23 = sadd.s32 1, %s19
  $region7: #{cnn32_forward_pallas.1} parent=0 // loop_footer_branch
    %18 = sbr.rel target = $region3
  $region8: #{cnn32_forward_pallas.1} parent=0 // loop_exit
    _

</llo_original>
